<compile_context>
chip_gen: v6e
topology: v6e:2x2x1
jax: 0.10.0
libtpu: 0.0.40
codegen_flags: <defaults>
</compile_context>

<pallas_src>
import math
from math import ceil
from typing import NamedTuple

import jax
import jax.numpy as jnp
from jax.experimental import pallas as pl
from jax.experimental.pallas import tpu as pltpu

LN2 = math.log(2.0)


class OutputLayerParams(NamedTuple):
    w_buf: jax.Array    # [n_mats, F, F] packed layer weights (torch [out,in]), zero-padded
    b_buf: jax.Array    # [F, n_mats]    packed biases (layer k in column k), -ln2 folded in
    lin_wT: jax.Array   # [last_dim, n_output] final linear, pre-transposed, f32


def pack_output_layer_params(res_params, ro_params, lin_w, *, matmul_dtype=None):
    """Pack all layer parameters ONCE (init time, outside the forward / jit path).

    res_params : list of (W1 [F,F], b1 [F], W2 [F,F], b2 [F])   (torch [out,in])
    ro_params  : list of (W [out,in], b [out])                  (dim decay)
    lin_w      : [n_output, last_dim] final linear weight (bias=False;
                 zero_last_linear=True -> all zeros)
    matmul_dtype : None (f32 MXU operands) or jnp.bfloat16 (pre-cast weight slab).
    """
    if res_params:
        F = int(res_params[0][0].shape[1])
    elif ro_params:
        F = int(ro_params[0][0].shape[1])
    else:
        F = int(lin_w.shape[1])
    n_res = len(res_params)
    ro_dims = tuple(int(w.shape[0]) for (w, _) in ro_params)

    ws, bs = [], []

    def add(w, b):
        w = jnp.asarray(w, jnp.float32)
        b = jnp.asarray(b, jnp.float32)
        # Every dense here consumes ssp(z) = softplus(z) - ln2.  Fold the -ln2 into
        # the bias:  W @ (sp(z) - ln2) + b == W @ sp(z) + (b - ln2 * W.sum(axis=1)).
        b = b - LN2 * jnp.sum(w, axis=1)
        do, di = w.shape
        ws.append(jnp.pad(w, ((0, F - do), (0, F - di))))
        bs.append(jnp.pad(b, (0, F - do)))

    for (w1, b1, w2, b2) in res_params:
        add(w1, b1)
        add(w2, b2)
    for (w, b) in ro_params:
        add(w, b)
    if not ws:  # degenerate config: keep buffers non-empty
        ws.append(jnp.zeros((F, F), jnp.float32))
        bs.append(jnp.zeros((F,), jnp.float32))

    w_buf = jnp.stack(ws, axis=0)                       # [n_mats, F, F]
    if matmul_dtype is not None:
        w_buf = w_buf.astype(matmul_dtype)              # pre-cast once (halves DMA bytes)
    b_buf = jnp.stack(bs, axis=1)                       # [F, n_mats], biases stay f32
    lin_wT = jnp.asarray(lin_w, jnp.float32).T          # [last_dim, n_output]

    meta = (F, n_res, ro_dims)                          # static (hashable) config
    return OutputLayerParams(w_buf, b_buf, lin_wT), meta


def _make_kernel(F, n_res, ro_dims, matmul_dtype, act_dtype):
    """Kernel over one lane tile.  x_ref: [tn, F] native; compute runs lane-dense
    with atoms on the 128-lane axis ([F, tn]); outputs stored back in native layout."""

    def sp(x):
        # softplus WITHOUT the -ln2 shift (the shift is folded into the biases).
        if act_dtype is not None:          # bf16 EUP path (v6e/v7x); f32 elsewhere
            x = x.astype(act_dtype)
        y = jnp.maximum(x, 0) + jnp.log1p(jnp.exp(-jnp.abs(x)))
        return y.astype(jnp.float32)

    def kernel(x_ref, w_ref, b_ref, lwT_ref, out_ref, embed_ref):
        b_all = b_ref[...]                                   # [F, n_mats], f32
        # in-kernel transpose (XLU) -> lane-dense [F, tn]; no wrapper HBM transpose
        h = jnp.transpose(x_ref[...].astype(jnp.float32))

        def dense(k, out_d, in_d, v):
            w = w_ref[k, :out_d, :in_d]                      # static slice, free
            if matmul_dtype is not None:
                v = v.astype(matmul_dtype)
            acc = jnp.dot(w, v, preferred_element_type=jnp.float32)
            return acc + b_all[:out_d, k:k + 1]

        k = 0
        for _ in range(n_res):          # h = h + W2·ssp(W1·ssp(h) + b1) + b2
            a = sp(h)
            t = sp(dense(k, F, F, a)); k += 1
            h = h + dense(k, F, F, t); k += 1

        out = h
        d_in = F
        for d_out in ro_dims:           # out = W·ssp(out) + b   (dim decay)
            out = dense(k, d_out, d_in, sp(out)); k += 1
            d_in = d_out

        embed = sp(out) - LN2           # final shifted softplus keeps the -ln2
        embed_nat = jnp.transpose(embed)                     # back to [tn, last_dim]
        embed_ref[...] = embed_nat.astype(embed_ref.dtype)
        # fused final linear (zero_last_linear just makes lin_wT a zero matrix)
        out_ref[...] = jnp.dot(embed_nat, lwT_ref[...],
                               preferred_element_type=jnp.float32).astype(out_ref.dtype)

    return kernel


def _num_tensorcores():
    """Best-effort TensorCore count per chip (grid-splitting hint)."""
    try:
        kind = jax.devices()[0].device_kind.lower()
    except Exception:
        return 1
    if "lite" in kind or "v5e" in kind or "v6e" in kind:
        return 1                        # v5e / v6e: single TensorCore
    if "v4" in kind or "v5p" in kind or "7" in kind:
        return 2                        # v4 / v7x: 2 TCs (megacore sharding)
    return 1


def _round_up(x, m):
    return ((x + m - 1) // m) * m


def output_layer_forward(x, params, *, meta, tn=None, num_tiles=None, act_dtype=None):
    """OutputLayer forward.

    x      : [N, F] atom features
    params : OutputLayerParams from pack_output_layer_params (packing is hoisted
             to init time — the forward path issues no per-call packing ops)
    meta   : static (F, n_res, ro_dims) returned by the packer
    Returns (out [N, n_output], regularization, embed_b4_ss [N, last_dim]).
    """
    F, n_res, ro_dims = meta
    N, F_in = x.shape
    assert F_in == F
    last_dim = ro_dims[-1] if ro_dims else F
    n_mats = params.w_buf.shape[0]
    n_output = params.lin_wT.shape[1]
    matmul_dtype = None if params.w_buf.dtype == jnp.float32 else params.w_buf.dtype

    # ---- lane-tile sizing: one tile per TensorCore, capped so padding stays small ----
    if tn is None:
        cores = num_tiles if num_tiles is not None else _num_tensorcores()
        tn = _round_up(pl.cdiv(N, max(int(cores), 1)), 128)
    tn = min(int(tn), _round_up(N, 128))        # never pad beyond one 128-lane group
    n_grid = pl.cdiv(N, tn)
    N_pad = n_grid * tn

    x_in = x if N_pad == N else jnp.pad(x, ((0, N_pad - N), (0, 0)))

    kernel = _make_kernel(F, n_res, ro_dims, matmul_dtype, act_dtype)

    # advisory cost estimate so XLA schedules sensibly around this small call
    flops_col = n_res * 2 * 2 * F * F
    trans_col = n_res * 2 * F
    d = F
    for do in ro_dims:
        flops_col += 2 * d * do
        trans_col += d
        d = do
    trans_col += d
    flops_col += 2 * d * n_output
    bytes_acc = (4 * (N_pad * F + N_pad * (last_dim + n_output)
                      + params.b_buf.size + params.lin_wT.size)
                 + params.w_buf.size * params.w_buf.dtype.itemsize)
    cost = pl.CostEstimate(flops=int(N_pad * flops_col),
                           transcendentals=int(N_pad * 2 * trans_col),
                           bytes_accessed=int(bytes_acc))

    out, embed = pl.pallas_call(
        kernel,
        out_shape=(jax.ShapeDtypeStruct((N_pad, n_output), x.dtype),
                   jax.ShapeDtypeStruct((N_pad, last_dim), x.dtype)),
        grid_spec=pltpu.PrefetchScalarGridSpec(
            num_scalar_prefetch=0,
            grid=(n_grid,),
            in_specs=[
                pl.BlockSpec((tn, F), lambda i: (i, 0)),              # activations
                pl.BlockSpec((n_mats, F, F), lambda i: (0, 0, 0)),    # weight slab (const)
                pl.BlockSpec((F, n_mats), lambda i: (0, 0)),          # bias slab (const)
                pl.BlockSpec((last_dim, n_output), lambda i: (0, 0)), # final linear (const)
            ],
            out_specs=[
                pl.BlockSpec((tn, n_output), lambda i: (i, 0)),
                pl.BlockSpec((tn, last_dim), lambda i: (i, 0)),
            ],
        ),
        # "parallel" lets 2-TC chips (v7x/v4) shard the two lane-tiles across cores.
        compiler_params=pltpu.CompilerParams(dimension_semantics=("parallel",)),
        cost_estimate=cost,
    )(x_in, params.w_buf, params.b_buf, params.lin_wT)

    if N_pad != N:
        out, embed = out[:N], embed[:N]
    regularization = 0.0   # concrete dropout disabled in this config
    return out, regularization, embed


# ---------------------------------------------------------------------------
# Pure-JAX reference (mirrors the PyTorch module) and a small self-test.
# ---------------------------------------------------------------------------

def _reference_forward(x, res_params, ro_params, lin_w):
    def ssp(v):
        return jnp.maximum(v, 0.0) + jnp.log1p(jnp.exp(-jnp.abs(v))) - LN2

    h = x
    for (w1, b1, w2, b2) in res_params:
        a = ssp(h)
        t = ssp(a @ w1.T + b1)
        h = h + (t @ w2.T + b2)
    out = h
    for (w, b) in ro_params:
        out = ssp(out) @ w.T + b
    embed = ssp(out)
    return embed @ lin_w.T, 0.0, embed


def _linear_init(key, fan_in, fan_out, bias=True):
    # torch.nn.Linear default init: U(±1/sqrt(fan_in)), weight [out, in]
    bound = 1.0 / math.sqrt(fan_in)
    kw, kb = jax.random.split(key)
    w = jax.random.uniform(kw, (fan_out, fan_in), jnp.float32, -bound, bound)
    b = jax.random.uniform(kb, (fan_out,), jnp.float32, -bound, bound) if bias else None
    return w, b


if __name__ == "__main__":
    # small shapes consistent with the module; N=500 exercises the ragged tail
    N, F = 500, 32
    n_output, n_res_output, n_read_out = 2, 2, 1

    key = jax.random.PRNGKey(0)
    key, kx = jax.random.split(key)
    x = jax.random.normal(kx, (N, F), jnp.float32)

    # residual layers: two FxF linears each (torch orientation [out, in])
    res_params = []
    for _ in range(n_res_output):
        key, k1, k2 = jax.random.split(key, 3)
        w1, b1 = _linear_init(k1, F, F)
        w2, b2 = _linear_init(k2, F, F)
        res_params.append((w1, b1, w2, b2))

    # read-out layers with dim decay: F -> ceil(F/2) -> ...
    ro_params = []
    last_dim = F
    for _ in range(n_read_out):
        this_dim = ceil(last_dim / 2)
        key, k = jax.random.split(key)
        w, b = _linear_init(k, last_dim, this_dim)
        ro_params.append((w, b))
        last_dim = this_dim

    # final linear: zero_last_linear=True, bias=False -> zeroed weight, no bias
    lin_w = jnp.zeros((n_output, last_dim), jnp.float32)

    fwd = jax.jit(output_layer_forward,
                  static_argnames=("meta", "tn", "num_tiles", "act_dtype"))

    # ---- f32 path: exact up to fp reassociation of the folded -ln2 bias ----
    params, meta = pack_output_layer_params(res_params, ro_params, lin_w)
    out, reg, embed = fwd(x, params, meta=meta)
    out, embed = jax.block_until_ready((out, embed))

    ref_out, _, ref_embed = _reference_forward(x, res_params, ro_params, lin_w)
    assert out.shape == (N, n_output) and embed.shape == (N, last_dim)
    assert jnp.allclose(out, ref_out, atol=1e-4, rtol=1e-4)
    assert jnp.allclose(embed, ref_embed, atol=1e-4, rtol=1e-4)
    assert reg == 0.0

    # ---- bf16 fast path (v6e/v7x): bf16 MXU operands + bf16 EUP ssp math ----
    params_bf, meta_bf = pack_output_layer_params(
        res_params, ro_params, lin_w, matmul_dtype=jnp.bfloat16)
    out_bf, _, embed_bf = fwd(x, params_bf, meta=meta_bf, act_dtype=jnp.bfloat16)
    embed_bf = jax.block_until_ready(embed_bf)
    assert jnp.allclose(embed_bf, ref_embed, atol=1e-1, rtol=1e-1)

    print("KERNEL_OK")
</pallas_src>

<mosaic_0001>
module attributes {stable_mosaic.version = 11 : i64} {
  func.func @kernel(%arg0: i32, %arg1: memref<512x32xf32, #tpu.memory_space<vmem>>, %arg2: memref<5x32x32xf32, #tpu.memory_space<vmem>>, %arg3: memref<32x5xf32, #tpu.memory_space<vmem>>, %arg4: memref<16x2xf32, #tpu.memory_space<vmem>>, %arg5: memref<512x2xf32, #tpu.memory_space<vmem>>, %arg6: memref<512x16xf32, #tpu.memory_space<vmem>>) attributes {dimension_semantics = [#tpu.dimension_semantics<parallel>], iteration_bounds = array<i64: 1>, scalar_prefetch = 0 : i64, scratch_operands = 0 : i64, tpu.core_type = #tpu.core_type<tc>, window_params = [{transform_indices = @transform_0, window_bounds = array<i64: 512, 32>}, {pipeline_mode = #tpu.pipeline_mode<synchronous>, transform_indices = @transform_1, window_bounds = array<i64: 5, 32, 32>}, {pipeline_mode = #tpu.pipeline_mode<synchronous>, transform_indices = @transform_2, window_bounds = array<i64: 32, 5>}, {pipeline_mode = #tpu.pipeline_mode<synchronous>, transform_indices = @transform_3, window_bounds = array<i64: 16, 2>}, {transform_indices = @transform_4, window_bounds = array<i64: 512, 2>}, {transform_indices = @transform_5, window_bounds = array<i64: 512, 16>}]} {
    %c0 = arith.constant 0 : index
    %c0_0 = arith.constant 0 : index
    %0 = vector.load %arg3[%c0, %c0_0] : memref<32x5xf32, #tpu.memory_space<vmem>>, vector<32x5xf32>
    %c0_1 = arith.constant 0 : index
    %c0_2 = arith.constant 0 : index
    %1 = vector.load %arg1[%c0_1, %c0_2] : memref<512x32xf32, #tpu.memory_space<vmem>>, vector<512x32xf32>
    %2 = tpu.transpose %1, [1, 0] : vector<512x32xf32> -> vector<32x512xf32>
    %cst = arith.constant 0.000000e+00 : f32
    %3 = vector.broadcast %cst : f32 to vector<32x512xf32>
    %4 = arith.maximumf %2, %3 : vector<32x512xf32>
    %5 = math.absf %2 : vector<32x512xf32>
    %cst_3 = arith.constant 0.000000e+00 : f32
    %6 = vector.broadcast %cst_3 : f32 to vector<32x512xf32>
    %7 = arith.subf %6, %5 : vector<32x512xf32>
    %8 = math.exp %7 : vector<32x512xf32>
    %9 = math.log1p %8 : vector<32x512xf32>
    %10 = arith.addf %4, %9 : vector<32x512xf32>
    %c0_4 = arith.constant 0 : index
    %c0_5 = arith.constant 0 : index
    %c0_6 = arith.constant 0 : index
    %11 = vector.load %arg2[%c0_4, %c0_5, %c0_6] : memref<5x32x32xf32, #tpu.memory_space<vmem>>, vector<1x32x32xf32>
    %12 = vector.shape_cast %11 : vector<1x32x32xf32> to vector<32x32xf32>
    %cst_7 = arith.constant dense<0.000000e+00> : vector<32x512xf32>
    %13 = tpu.matmul %12, %10, %cst_7 {dimension_numbers = #tpu.dot_dimension_numbers<[1], [0], [0], [1], [0, 0, 1, 1], [], []>} : vector<32x32xf32>, vector<32x512xf32>, vector<32x512xf32> -> vector<32x512xf32>
    %14 = vector.extract_strided_slice %0 {offsets = [0, 0], sizes = [32, 1], strides = [1, 1]} : vector<32x5xf32> to vector<32x1xf32>
    %15 = vector.broadcast %14 : vector<32x1xf32> to vector<32x512xf32>
    %16 = arith.addf %13, %15 : vector<32x512xf32>
    %cst_8 = arith.constant 0.000000e+00 : f32
    %17 = vector.broadcast %cst_8 : f32 to vector<32x512xf32>
    %18 = arith.maximumf %16, %17 : vector<32x512xf32>
    %19 = math.absf %16 : vector<32x512xf32>
    %cst_9 = arith.constant 0.000000e+00 : f32
    %20 = vector.broadcast %cst_9 : f32 to vector<32x512xf32>
    %21 = arith.subf %20, %19 : vector<32x512xf32>
    %22 = math.exp %21 : vector<32x512xf32>
    %23 = math.log1p %22 : vector<32x512xf32>
    %24 = arith.addf %18, %23 : vector<32x512xf32>
    %c1 = arith.constant 1 : index
    %c0_10 = arith.constant 0 : index
    %c0_11 = arith.constant 0 : index
    %25 = vector.load %arg2[%c1, %c0_10, %c0_11] : memref<5x32x32xf32, #tpu.memory_space<vmem>>, vector<1x32x32xf32>
    %26 = vector.shape_cast %25 : vector<1x32x32xf32> to vector<32x32xf32>
    %cst_12 = arith.constant dense<0.000000e+00> : vector<32x512xf32>
    %27 = tpu.matmul %26, %24, %cst_12 {dimension_numbers = #tpu.dot_dimension_numbers<[1], [0], [0], [1], [0, 0, 1, 1], [], []>} : vector<32x32xf32>, vector<32x512xf32>, vector<32x512xf32> -> vector<32x512xf32>
    %28 = vector.extract_strided_slice %0 {offsets = [0, 1], sizes = [32, 1], strides = [1, 1]} : vector<32x5xf32> to vector<32x1xf32>
    %29 = vector.broadcast %28 : vector<32x1xf32> to vector<32x512xf32>
    %30 = arith.addf %27, %29 : vector<32x512xf32>
    %31 = arith.addf %2, %30 : vector<32x512xf32>
    %cst_13 = arith.constant 0.000000e+00 : f32
    %32 = vector.broadcast %cst_13 : f32 to vector<32x512xf32>
    %33 = arith.maximumf %31, %32 : vector<32x512xf32>
    %34 = math.absf %31 : vector<32x512xf32>
    %cst_14 = arith.constant 0.000000e+00 : f32
    %35 = vector.broadcast %cst_14 : f32 to vector<32x512xf32>
    %36 = arith.subf %35, %34 : vector<32x512xf32>
    %37 = math.exp %36 : vector<32x512xf32>
    %38 = math.log1p %37 : vector<32x512xf32>
    %39 = arith.addf %33, %38 : vector<32x512xf32>
    %c2 = arith.constant 2 : index
    %c0_15 = arith.constant 0 : index
    %c0_16 = arith.constant 0 : index
    %40 = vector.load %arg2[%c2, %c0_15, %c0_16] : memref<5x32x32xf32, #tpu.memory_space<vmem>>, vector<1x32x32xf32>
    %41 = vector.shape_cast %40 : vector<1x32x32xf32> to vector<32x32xf32>
    %cst_17 = arith.constant dense<0.000000e+00> : vector<32x512xf32>
    %42 = tpu.matmul %41, %39, %cst_17 {dimension_numbers = #tpu.dot_dimension_numbers<[1], [0], [0], [1], [0, 0, 1, 1], [], []>} : vector<32x32xf32>, vector<32x512xf32>, vector<32x512xf32> -> vector<32x512xf32>
    %43 = vector.extract_strided_slice %0 {offsets = [0, 2], sizes = [32, 1], strides = [1, 1]} : vector<32x5xf32> to vector<32x1xf32>
    %44 = vector.broadcast %43 : vector<32x1xf32> to vector<32x512xf32>
    %45 = arith.addf %42, %44 : vector<32x512xf32>
    %cst_18 = arith.constant 0.000000e+00 : f32
    %46 = vector.broadcast %cst_18 : f32 to vector<32x512xf32>
    %47 = arith.maximumf %45, %46 : vector<32x512xf32>
    %48 = math.absf %45 : vector<32x512xf32>
    %cst_19 = arith.constant 0.000000e+00 : f32
    %49 = vector.broadcast %cst_19 : f32 to vector<32x512xf32>
    %50 = arith.subf %49, %48 : vector<32x512xf32>
    %51 = math.exp %50 : vector<32x512xf32>
    %52 = math.log1p %51 : vector<32x512xf32>
    %53 = arith.addf %47, %52 : vector<32x512xf32>
    %c3 = arith.constant 3 : index
    %c0_20 = arith.constant 0 : index
    %c0_21 = arith.constant 0 : index
    %54 = vector.load %arg2[%c3, %c0_20, %c0_21] : memref<5x32x32xf32, #tpu.memory_space<vmem>>, vector<1x32x32xf32>
    %55 = vector.shape_cast %54 : vector<1x32x32xf32> to vector<32x32xf32>
    %cst_22 = arith.constant dense<0.000000e+00> : vector<32x512xf32>
    %56 = tpu.matmul %55, %53, %cst_22 {dimension_numbers = #tpu.dot_dimension_numbers<[1], [0], [0], [1], [0, 0, 1, 1], [], []>} : vector<32x32xf32>, vector<32x512xf32>, vector<32x512xf32> -> vector<32x512xf32>
    %57 = vector.extract_strided_slice %0 {offsets = [0, 3], sizes = [32, 1], strides = [1, 1]} : vector<32x5xf32> to vector<32x1xf32>
    %58 = vector.broadcast %57 : vector<32x1xf32> to vector<32x512xf32>
    %59 = arith.addf %56, %58 : vector<32x512xf32>
    %60 = arith.addf %31, %59 : vector<32x512xf32>
    %cst_23 = arith.constant 0.000000e+00 : f32
    %61 = vector.broadcast %cst_23 : f32 to vector<32x512xf32>
    %62 = arith.maximumf %60, %61 : vector<32x512xf32>
    %63 = math.absf %60 : vector<32x512xf32>
    %cst_24 = arith.constant 0.000000e+00 : f32
    %64 = vector.broadcast %cst_24 : f32 to vector<32x512xf32>
    %65 = arith.subf %64, %63 : vector<32x512xf32>
    %66 = math.exp %65 : vector<32x512xf32>
    %67 = math.log1p %66 : vector<32x512xf32>
    %68 = arith.addf %62, %67 : vector<32x512xf32>
    %c4 = arith.constant 4 : index
    %c0_25 = arith.constant 0 : index
    %c0_26 = arith.constant 0 : index
    %69 = vector.load %arg2[%c4, %c0_25, %c0_26] : memref<5x32x32xf32, #tpu.memory_space<vmem>>, vector<1x16x32xf32>
    %70 = vector.shape_cast %69 : vector<1x16x32xf32> to vector<16x32xf32>
    %cst_27 = arith.constant dense<0.000000e+00> : vector<16x512xf32>
    %71 = tpu.matmul %70, %68, %cst_27 {dimension_numbers = #tpu.dot_dimension_numbers<[1], [0], [0], [1], [0, 0, 1, 1], [], []>} : vector<16x32xf32>, vector<32x512xf32>, vector<16x512xf32> -> vector<16x512xf32>
    %72 = vector.extract_strided_slice %0 {offsets = [0, 4], sizes = [16, 1], strides = [1, 1]} : vector<32x5xf32> to vector<16x1xf32>
    %73 = vector.broadcast %72 : vector<16x1xf32> to vector<16x512xf32>
    %74 = arith.addf %71, %73 : vector<16x512xf32>
    %cst_28 = arith.constant 0.000000e+00 : f32
    %75 = vector.broadcast %cst_28 : f32 to vector<16x512xf32>
    %76 = arith.maximumf %74, %75 : vector<16x512xf32>
    %77 = math.absf %74 : vector<16x512xf32>
    %cst_29 = arith.constant 0.000000e+00 : f32
    %78 = vector.broadcast %cst_29 : f32 to vector<16x512xf32>
    %79 = arith.subf %78, %77 : vector<16x512xf32>
    %80 = math.exp %79 : vector<16x512xf32>
    %81 = math.log1p %80 : vector<16x512xf32>
    %82 = arith.addf %76, %81 : vector<16x512xf32>
    %cst_30 = arith.constant 0.693147182 : f32
    %83 = vector.broadcast %cst_30 : f32 to vector<16x512xf32>
    %84 = arith.subf %82, %83 : vector<16x512xf32>
    %85 = tpu.transpose %84, [1, 0] : vector<16x512xf32> -> vector<512x16xf32>
    %c0_31 = arith.constant 0 : index
    %c0_32 = arith.constant 0 : index
    %86 = vector.load %arg6[%c0_31, %c0_32] : memref<512x16xf32, #tpu.memory_space<vmem>>, vector<512x16xf32>
    tpu.vector_store %arg6[%c0_31, %c0_32], %85 {strides = array<i32>} : memref<512x16xf32, #tpu.memory_space<vmem>>, vector<512x16xf32>,
    %c0_33 = arith.constant 0 : index
    %c0_34 = arith.constant 0 : index
    %87 = vector.load %arg4[%c0_33, %c0_34] : memref<16x2xf32, #tpu.memory_space<vmem>>, vector<16x2xf32>
    %cst_35 = arith.constant dense<0.000000e+00> : vector<512x2xf32>
    %88 = tpu.matmul %85, %87, %cst_35 {dimension_numbers = #tpu.dot_dimension_numbers<[1], [0], [0], [1], [0, 0, 1, 1], [], []>} : vector<512x16xf32>, vector<16x2xf32>, vector<512x2xf32> -> vector<512x2xf32>
    %c0_36 = arith.constant 0 : index
    %c0_37 = arith.constant 0 : index
    %89 = vector.load %arg5[%c0_36, %c0_37] : memref<512x2xf32, #tpu.memory_space<vmem>>, vector<512x2xf32>
    tpu.vector_store %arg5[%c0_36, %c0_37], %88 {strides = array<i32>} : memref<512x2xf32, #tpu.memory_space<vmem>>, vector<512x2xf32>,
    return
  }
  func.func @transform_0(%arg0: i32) -> (i32, i32) {
    %c0_i32 = arith.constant 0 : i32
    %c0_i32_0 = arith.constant 0 : i32
    return %arg0, %c0_i32 : i32, i32
  }
  func.func @transform_1(%arg0: i32) -> (i32, i32, i32) {
    %c0_i32 = arith.constant 0 : i32
    %c0_i32_0 = arith.constant 0 : i32
    %c0_i32_1 = arith.constant 0 : i32
    %c0_i32_2 = arith.constant 0 : i32
    return %c0_i32, %c0_i32_0, %c0_i32_1 : i32, i32, i32
  }
  func.func @transform_2(%arg0: i32) -> (i32, i32) {
    %c0_i32 = arith.constant 0 : i32
    %c0_i32_0 = arith.constant 0 : i32
    %c0_i32_1 = arith.constant 0 : i32
    return %c0_i32, %c0_i32_0 : i32, i32
  }
  func.func @transform_3(%arg0: i32) -> (i32, i32) {
    %c0_i32 = arith.constant 0 : i32
    %c0_i32_0 = arith.constant 0 : i32
    %c0_i32_1 = arith.constant 0 : i32
    return %c0_i32, %c0_i32_0 : i32, i32
  }
  func.func @transform_4(%arg0: i32) -> (i32, i32) {
    %c0_i32 = arith.constant 0 : i32
    %c0_i32_0 = arith.constant 0 : i32
    return %arg0, %c0_i32 : i32, i32
  }
  func.func @transform_5(%arg0: i32) -> (i32, i32) {
    %c0_i32 = arith.constant 0 : i32
    %c0_i32_0 = arith.constant 0 : i32
    return %arg0, %c0_i32 : i32, i32
  }
}

</mosaic_0001>

<llo_original>
// kernel: output_layer_forward.1
$region0: #{output_layer_forward.1}
  #allocation0 [shape = 'u32[]', space=smem, size = 0x4, offset = 0x4, fixed_abs, tag = 'smem constant byte address 0x4 - core index']
  #allocation1 [shape = 'u32[144,128]{1,0:T(1,128)}', space=vmem, size = 0x12000, scoped, tag = 'internal scratch']
  %s0 = inlined_call_operand.vmem [shape: f32[512,32], index: 0, kind: input, shape index: {}]
  %s1 = inlined_call_operand.vmem [shape: f32[5,32,32], index: 1, kind: input, shape index: {}]
  %s2 = inlined_call_operand.vmem [shape: f32[32,5], index: 2, kind: input, shape index: {}]
  %s3 = inlined_call_operand.vmem [shape: f32[16,2], index: 3, kind: input, shape index: {}]
  %s4 = inlined_call_operand.vmem [shape: f32[512,2], index: 4, kind: output, shape index: {0}]
  %s5 = inlined_call_operand.vmem [shape: f32[512,16], index: 5, kind: output, shape index: {1}]
  %6 = xla_tuple %s4, %s5
  %s7 = sld [smem:[#allocation0]]
  $region34: #{output_layer_forward.1} parent=0
    _
  %s9 = ssub.s32 1, %s7
  %s10 = scalar_select 0, %s9, %s7
  // Predicated region
  $region2: #{output_layer_forward.1} parent=0 // pred_check
    _
  $region3: #{output_layer_forward.1} parent=0 // pred_check_branch
    %12 = sbr.rel (0) target = $region5
  $region4: #{output_layer_forward.1} parent=0 // pred_region
    _
  $region5: #{output_layer_forward.1} parent=0 // pred_fallthru
    _
  // Predicated region
  $region6: #{output_layer_forward.1} parent=0 // pred_check
    _
  $region7: #{output_layer_forward.1} parent=0 // pred_check_branch
    %14 = sbr.rel (0) target = $region9
  $region8: #{output_layer_forward.1} parent=0 // pred_region
    _
  $region9: #{output_layer_forward.1} parent=0 // pred_fallthru
    _
  // Predicated region
  $region10: #{output_layer_forward.1} parent=0 // pred_check
    _
  $region11: #{output_layer_forward.1} parent=0 // pred_check_branch
    %16 = sbr.rel (0) target = $region13
  $region12: #{output_layer_forward.1} parent=0 // pred_region
    _
  $region13: #{output_layer_forward.1} parent=0 // pred_fallthru
    _
  // Predicated region
  $region14: #{output_layer_forward.1} parent=0 // pred_check
    _
  $region15: #{output_layer_forward.1} parent=0 // pred_check_branch
    %18 = sbr.rel (0) target = $region17
  $region16: #{output_layer_forward.1} parent=0 // pred_region
    _
  $region17: #{output_layer_forward.1} parent=0 // pred_fallthru
    _
  %v19 = vld [vmem:[%s2] sm:$0xff]
  %v20 = vld [vmem:[%s2 + $0x8] sm:$0xff]
  %v21 = vld [vmem:[%s2 + $0x10] sm:$0xff]
  %v22 = vld [vmem:[%s2 + $0x18] sm:$0xff]
  %v23 = vld [vmem:[%s0] sm:$0xff]
  %v24 = vld [vmem:[%s0 + $0x8] sm:$0xff]
  %v25 = vld [vmem:[%s0 + $0x10] sm:$0xff]
  %v26 = vld [vmem:[%s0 + $0x18] sm:$0xff]
  %v27 = vld [vmem:[%s0 + $0x20] sm:$0xff]
  %v28 = vld [vmem:[%s0 + $0x28] sm:$0xff]
  %v29 = vld [vmem:[%s0 + $0x30] sm:$0xff]
  %v30 = vld [vmem:[%s0 + $0x38] sm:$0xff]
  %v31 = vld [vmem:[%s0 + $0x40] sm:$0xff]
  %v32 = vld [vmem:[%s0 + $0x48] sm:$0xff]
  %v33 = vld [vmem:[%s0 + $0x50] sm:$0xff]
  %v34 = vld [vmem:[%s0 + $0x58] sm:$0xff]
  %v35 = vld [vmem:[%s0 + $0x60] sm:$0xff]
  %v36 = vld [vmem:[%s0 + $0x68] sm:$0xff]
  %v37 = vld [vmem:[%s0 + $0x70] sm:$0xff]
  %v38 = vld [vmem:[%s0 + $0x78] sm:$0xff]
  %v39 = vld [vmem:[%s0 + $0x80] sm:$0xff]
  %v40 = vld [vmem:[%s0 + $0x88] sm:$0xff]
  %v41 = vld [vmem:[%s0 + $0x90] sm:$0xff]
  %v42 = vld [vmem:[%s0 + $0x98] sm:$0xff]
  %v43 = vld [vmem:[%s0 + $0xa0] sm:$0xff]
  %v44 = vld [vmem:[%s0 + $0xa8] sm:$0xff]
  %v45 = vld [vmem:[%s0 + $0xb0] sm:$0xff]
  %v46 = vld [vmem:[%s0 + $0xb8] sm:$0xff]
  %v47 = vld [vmem:[%s0 + $0xc0] sm:$0xff]
  %v48 = vld [vmem:[%s0 + $0xc8] sm:$0xff]
  %v49 = vld [vmem:[%s0 + $0xd0] sm:$0xff]
  %v50 = vld [vmem:[%s0 + $0xd8] sm:$0xff]
  %v51 = vld [vmem:[%s0 + $0xe0] sm:$0xff]
  %v52 = vld [vmem:[%s0 + $0xe8] sm:$0xff]
  %v53 = vld [vmem:[%s0 + $0xf0] sm:$0xff]
  %v54 = vld [vmem:[%s0 + $0xf8] sm:$0xff]
  %v55 = vld [vmem:[%s0 + $0x100] sm:$0xff]
  %v56 = vld [vmem:[%s0 + $0x108] sm:$0xff]
  %v57 = vld [vmem:[%s0 + $0x110] sm:$0xff]
  %v58 = vld [vmem:[%s0 + $0x118] sm:$0xff]
  %v59 = vld [vmem:[%s0 + $0x120] sm:$0xff]
  %v60 = vld [vmem:[%s0 + $0x128] sm:$0xff]
  %v61 = vld [vmem:[%s0 + $0x130] sm:$0xff]
  %v62 = vld [vmem:[%s0 + $0x138] sm:$0xff]
  %v63 = vld [vmem:[%s0 + $0x140] sm:$0xff]
  %v64 = vld [vmem:[%s0 + $0x148] sm:$0xff]
  %v65 = vld [vmem:[%s0 + $0x150] sm:$0xff]
  %v66 = vld [vmem:[%s0 + $0x158] sm:$0xff]
  %v67 = vld [vmem:[%s0 + $0x160] sm:$0xff]
  %v68 = vld [vmem:[%s0 + $0x168] sm:$0xff]
  %v69 = vld [vmem:[%s0 + $0x170] sm:$0xff]
  %v70 = vld [vmem:[%s0 + $0x178] sm:$0xff]
  %v71 = vld [vmem:[%s0 + $0x180] sm:$0xff]
  %v72 = vld [vmem:[%s0 + $0x188] sm:$0xff]
  %v73 = vld [vmem:[%s0 + $0x190] sm:$0xff]
  %v74 = vld [vmem:[%s0 + $0x198] sm:$0xff]
  %v75 = vld [vmem:[%s0 + $0x1a0] sm:$0xff]
  %v76 = vld [vmem:[%s0 + $0x1a8] sm:$0xff]
  %v77 = vld [vmem:[%s0 + $0x1b0] sm:$0xff]
  %v78 = vld [vmem:[%s0 + $0x1b8] sm:$0xff]
  %v79 = vld [vmem:[%s0 + $0x1c0] sm:$0xff]
  %v80 = vld [vmem:[%s0 + $0x1c8] sm:$0xff]
  %v81 = vld [vmem:[%s0 + $0x1d0] sm:$0xff]
  %v82 = vld [vmem:[%s0 + $0x1d8] sm:$0xff]
  %v83 = vld [vmem:[%s0 + $0x1e0] sm:$0xff]
  %v84 = vld [vmem:[%s0 + $0x1e8] sm:$0xff]
  %v85 = vld [vmem:[%s0 + $0x1f0] sm:$0xff]
  %v86 = vld [vmem:[%s0 + $0x1f8] sm:$0xff]
  %87 = vxpose.xlu0.b32.start [1/16] %v23, 128
  %88 = vxpose.xlu0.b32.cont [2/16] %v24, 128
  %89 = vxpose.xlu0.b32.cont [3/16] %v25, 128
  %90 = vxpose.xlu0.b32.cont [4/16] %v26, 128
  %91 = vxpose.xlu0.b32.cont [5/16] %v27, 128
  %92 = vxpose.xlu0.b32.cont [6/16] %v28, 128
  %93 = vxpose.xlu0.b32.cont [7/16] %v29, 128
  %94 = vxpose.xlu0.b32.cont [8/16] %v30, 128
  %95 = vxpose.xlu0.b32.cont [9/16] %v31, 128
  %96 = vxpose.xlu0.b32.cont [10/16] %v32, 128
  %97 = vxpose.xlu0.b32.cont [11/16] %v33, 128
  %98 = vxpose.xlu0.b32.cont [12/16] %v34, 128
  %99 = vxpose.xlu0.b32.cont [13/16] %v35, 128
  %100 = vxpose.xlu0.b32.cont [14/16] %v36, 128
  %101 = vxpose.xlu0.b32.cont [15/16] %v37, 128
  %102 = vxpose.xlu0.b32.end [16/16] %v38, 128
  %v103 = vpop.trf.xlu0
  %v104 = vpop.trf.xlu0
  %v105 = vpop.trf.xlu0
  %v106 = vpop.trf.xlu0
  %v107 = vpop.trf.xlu0
  %v108 = vpop.trf.xlu0
  %v109 = vpop.trf.xlu0
  %v110 = vpop.trf.xlu0
  %v111 = vpop.trf.xlu0
  %v112 = vpop.trf.xlu0
  %v113 = vpop.trf.xlu0
  %v114 = vpop.trf.xlu0
  %v115 = vpop.trf.xlu0
  %v116 = vpop.trf.xlu0
  %v117 = vpop.trf.xlu0
  %v118 = vpop.trf.xlu0
  %119 = vxpose.xlu0.b32.start [1/16] %v39, 128
  %120 = vxpose.xlu0.b32.cont [2/16] %v40, 128
  %121 = vxpose.xlu0.b32.cont [3/16] %v41, 128
  %122 = vxpose.xlu0.b32.cont [4/16] %v42, 128
  %123 = vxpose.xlu0.b32.cont [5/16] %v43, 128
  %124 = vxpose.xlu0.b32.cont [6/16] %v44, 128
  %125 = vxpose.xlu0.b32.cont [7/16] %v45, 128
  %126 = vxpose.xlu0.b32.cont [8/16] %v46, 128
  %127 = vxpose.xlu0.b32.cont [9/16] %v47, 128
  %128 = vxpose.xlu0.b32.cont [10/16] %v48, 128
  %129 = vxpose.xlu0.b32.cont [11/16] %v49, 128
  %130 = vxpose.xlu0.b32.cont [12/16] %v50, 128
  %131 = vxpose.xlu0.b32.cont [13/16] %v51, 128
  %132 = vxpose.xlu0.b32.cont [14/16] %v52, 128
  %133 = vxpose.xlu0.b32.cont [15/16] %v53, 128
  %134 = vxpose.xlu0.b32.end [16/16] %v54, 128
  %v135 = vpop.trf.xlu0
  %v136 = vpop.trf.xlu0
  %v137 = vpop.trf.xlu0
  %v138 = vpop.trf.xlu0
  %v139 = vpop.trf.xlu0
  %v140 = vpop.trf.xlu0
  %v141 = vpop.trf.xlu0
  %v142 = vpop.trf.xlu0
  %v143 = vpop.trf.xlu0
  %v144 = vpop.trf.xlu0
  %v145 = vpop.trf.xlu0
  %v146 = vpop.trf.xlu0
  %v147 = vpop.trf.xlu0
  %v148 = vpop.trf.xlu0
  %v149 = vpop.trf.xlu0
  %v150 = vpop.trf.xlu0
  %151 = vxpose.xlu0.b32.start [1/16] %v55, 128
  %152 = vxpose.xlu0.b32.cont [2/16] %v56, 128
  %153 = vxpose.xlu0.b32.cont [3/16] %v57, 128
  %154 = vxpose.xlu0.b32.cont [4/16] %v58, 128
  %155 = vxpose.xlu0.b32.cont [5/16] %v59, 128
  %156 = vxpose.xlu0.b32.cont [6/16] %v60, 128
  %157 = vxpose.xlu0.b32.cont [7/16] %v61, 128
  %158 = vxpose.xlu0.b32.cont [8/16] %v62, 128
  %159 = vxpose.xlu0.b32.cont [9/16] %v63, 128
  %160 = vxpose.xlu0.b32.cont [10/16] %v64, 128
  %161 = vxpose.xlu0.b32.cont [11/16] %v65, 128
  %162 = vxpose.xlu0.b32.cont [12/16] %v66, 128
  %163 = vxpose.xlu0.b32.cont [13/16] %v67, 128
  %164 = vxpose.xlu0.b32.cont [14/16] %v68, 128
  %165 = vxpose.xlu0.b32.cont [15/16] %v69, 128
  %166 = vxpose.xlu0.b32.end [16/16] %v70, 128
  %v167 = vpop.trf.xlu0
  %v168 = vpop.trf.xlu0
  %v169 = vpop.trf.xlu0
  %v170 = vpop.trf.xlu0
  %v171 = vpop.trf.xlu0
  %v172 = vpop.trf.xlu0
  %v173 = vpop.trf.xlu0
  %v174 = vpop.trf.xlu0
  %v175 = vpop.trf.xlu0
  %v176 = vpop.trf.xlu0
  %v177 = vpop.trf.xlu0
  %v178 = vpop.trf.xlu0
  %v179 = vpop.trf.xlu0
  %v180 = vpop.trf.xlu0
  %v181 = vpop.trf.xlu0
  %v182 = vpop.trf.xlu0
  %183 = vxpose.xlu0.b32.start [1/16] %v71, 128
  %184 = vxpose.xlu0.b32.cont [2/16] %v72, 128
  %185 = vxpose.xlu0.b32.cont [3/16] %v73, 128
  %186 = vxpose.xlu0.b32.cont [4/16] %v74, 128
  %187 = vxpose.xlu0.b32.cont [5/16] %v75, 128
  %188 = vxpose.xlu0.b32.cont [6/16] %v76, 128
  %189 = vxpose.xlu0.b32.cont [7/16] %v77, 128
  %190 = vxpose.xlu0.b32.cont [8/16] %v78, 128
  %191 = vxpose.xlu0.b32.cont [9/16] %v79, 128
  %192 = vxpose.xlu0.b32.cont [10/16] %v80, 128
  %193 = vxpose.xlu0.b32.cont [11/16] %v81, 128
  %194 = vxpose.xlu0.b32.cont [12/16] %v82, 128
  %195 = vxpose.xlu0.b32.cont [13/16] %v83, 128
  %196 = vxpose.xlu0.b32.cont [14/16] %v84, 128
  %197 = vxpose.xlu0.b32.cont [15/16] %v85, 128
  %198 = vxpose.xlu0.b32.end [16/16] %v86, 128
  %v199 = vpop.trf.xlu0
  %v200 = vpop.trf.xlu0
  %v201 = vpop.trf.xlu0
  %v202 = vpop.trf.xlu0
  %v203 = vpop.trf.xlu0
  %v204 = vpop.trf.xlu0
  %v205 = vpop.trf.xlu0
  %v206 = vpop.trf.xlu0
  %v207 = vpop.trf.xlu0
  %v208 = vpop.trf.xlu0
  %v209 = vpop.trf.xlu0
  %v210 = vpop.trf.xlu0
  %v211 = vpop.trf.xlu0
  %v212 = vpop.trf.xlu0
  %v213 = vpop.trf.xlu0
  %v214 = vpop.trf.xlu0
  %v215 = vmax.f32 %v103, 0.0
  %v216 = vmax.f32 %v135, 0.0
  %v217 = vmax.f32 %v167, 0.0
  %v218 = vmax.f32 %v199, 0.0
  %v219 = vmax.f32 %v104, 0.0
  %v220 = vmax.f32 %v136, 0.0
  %v221 = vmax.f32 %v168, 0.0
  %v222 = vmax.f32 %v200, 0.0
  %v223 = vmax.f32 %v105, 0.0
  %v224 = vmax.f32 %v137, 0.0
  %v225 = vmax.f32 %v169, 0.0
  %v226 = vmax.f32 %v201, 0.0
  %v227 = vmax.f32 %v106, 0.0
  %v228 = vmax.f32 %v138, 0.0
  %v229 = vmax.f32 %v170, 0.0
  %v230 = vmax.f32 %v202, 0.0
  %v231 = vand.u32 2147483647, %v103
  %v232 = vand.u32 2147483647, %v135
  %v233 = vand.u32 2147483647, %v167
  %v234 = vand.u32 2147483647, %v199
  %v235 = vand.u32 2147483647, %v104
  %v236 = vand.u32 2147483647, %v136
  %v237 = vand.u32 2147483647, %v168
  %v238 = vand.u32 2147483647, %v200
  %v239 = vand.u32 2147483647, %v105
  %v240 = vand.u32 2147483647, %v137
  %v241 = vand.u32 2147483647, %v169
  %v242 = vand.u32 2147483647, %v201
  %v243 = vand.u32 2147483647, %v106
  %v244 = vand.u32 2147483647, %v138
  %v245 = vand.u32 2147483647, %v170
  %v246 = vand.u32 2147483647, %v202
  %v247 = vsub.f32 0.0, %v231
  %v248 = vsub.f32 0.0, %v232
  %v249 = vsub.f32 0.0, %v233
  %v250 = vsub.f32 0.0, %v234
  %v251 = vsub.f32 0.0, %v235
  %v252 = vsub.f32 0.0, %v236
  %v253 = vsub.f32 0.0, %v237
  %v254 = vsub.f32 0.0, %v238
  %v255 = vsub.f32 0.0, %v239
  %v256 = vsub.f32 0.0, %v240
  %v257 = vsub.f32 0.0, %v241
  %v258 = vsub.f32 0.0, %v242
  %v259 = vsub.f32 0.0, %v243
  %v260 = vsub.f32 0.0, %v244
  %v261 = vsub.f32 0.0, %v245
  %v262 = vsub.f32 0.0, %v246
  %v263 = vmul.f32 %v247, 1.442695
  %v264 = vpow.pop %v263
  %v265 = vmul.f32 %v248, 1.442695
  %v266 = vpow.pop %v265
  %v267 = vmul.f32 %v249, 1.442695
  %v268 = vpow.pop %v267
  %v269 = vmul.f32 %v250, 1.442695
  %v270 = vpow.pop %v269
  %v271 = vmul.f32 %v251, 1.442695
  %v272 = vpow.pop %v271
  %v273 = vmul.f32 %v252, 1.442695
  %v274 = vpow.pop %v273
  %v275 = vmul.f32 %v253, 1.442695
  %v276 = vpow.pop %v275
  %v277 = vmul.f32 %v254, 1.442695
  %v278 = vpow.pop %v277
  %v279 = vmul.f32 %v255, 1.442695
  %v280 = vpow.pop %v279
  %v281 = vmul.f32 %v256, 1.442695
  %v282 = vpow.pop %v281
  %v283 = vmul.f32 %v257, 1.442695
  %v284 = vpow.pop %v283
  %v285 = vmul.f32 %v258, 1.442695
  %v286 = vpow.pop %v285
  %v287 = vmul.f32 %v259, 1.442695
  %v288 = vpow.pop %v287
  %v289 = vmul.f32 %v260, 1.442695
  %v290 = vpow.pop %v289
  %v291 = vmul.f32 %v261, 1.442695
  %v292 = vpow.pop %v291
  %v293 = vmul.f32 %v262, 1.442695
  %v294 = vpow.pop %v293
  %v295 = vadd.f32 %v264, 1.0
  %v296 = vlog2.pop %v295
  %v297 = vmul.f32 %v296, 0.6931472
  %v298 = vmul.f32 -0.5, %v264
  %v299 = vadd.f32 %v298, 1.0
  %v300 = vmul.f32 %v299, %v264
  %v301 = vand.u32 2147483647, %v264
  %vm302 = vcmp.lt.f32.partialorder %v301, 0.0004427343
  %v303 = vsel %vm302, %v300, %v297
  %v304 = vadd.f32 %v266, 1.0
  %v305 = vlog2.pop %v304
  %v306 = vmul.f32 %v305, 0.6931472
  %v307 = vmul.f32 -0.5, %v266
  %v308 = vadd.f32 %v307, 1.0
  %v309 = vmul.f32 %v308, %v266
  %v310 = vand.u32 2147483647, %v266
  %vm311 = vcmp.lt.f32.partialorder %v310, 0.0004427343
  %v312 = vsel %vm311, %v309, %v306
  %v313 = vadd.f32 %v268, 1.0
  %v314 = vlog2.pop %v313
  %v315 = vmul.f32 %v314, 0.6931472
  %v316 = vmul.f32 -0.5, %v268
  %v317 = vadd.f32 %v316, 1.0
  %v318 = vmul.f32 %v317, %v268
  %v319 = vand.u32 2147483647, %v268
  %vm320 = vcmp.lt.f32.partialorder %v319, 0.0004427343
  %v321 = vsel %vm320, %v318, %v315
  %v322 = vadd.f32 %v270, 1.0
  %v323 = vlog2.pop %v322
  %v324 = vmul.f32 %v323, 0.6931472
  %v325 = vmul.f32 -0.5, %v270
  %v326 = vadd.f32 %v325, 1.0
  %v327 = vmul.f32 %v326, %v270
  %v328 = vand.u32 2147483647, %v270
  %vm329 = vcmp.lt.f32.partialorder %v328, 0.0004427343
  %v330 = vsel %vm329, %v327, %v324
  %v331 = vadd.f32 %v272, 1.0
  %v332 = vlog2.pop %v331
  %v333 = vmul.f32 %v332, 0.6931472
  %v334 = vmul.f32 -0.5, %v272
  %v335 = vadd.f32 %v334, 1.0
  %v336 = vmul.f32 %v335, %v272
  %v337 = vand.u32 2147483647, %v272
  %vm338 = vcmp.lt.f32.partialorder %v337, 0.0004427343
  %v339 = vsel %vm338, %v336, %v333
  %v340 = vadd.f32 %v274, 1.0
  %v341 = vlog2.pop %v340
  %v342 = vmul.f32 %v341, 0.6931472
  %v343 = vmul.f32 -0.5, %v274
  %v344 = vadd.f32 %v343, 1.0
  %v345 = vmul.f32 %v344, %v274
  %v346 = vand.u32 2147483647, %v274
  %vm347 = vcmp.lt.f32.partialorder %v346, 0.0004427343
  %v348 = vsel %vm347, %v345, %v342
  %v349 = vadd.f32 %v276, 1.0
  %v350 = vlog2.pop %v349
  %v351 = vmul.f32 %v350, 0.6931472
  %v352 = vmul.f32 -0.5, %v276
  %v353 = vadd.f32 %v352, 1.0
  %v354 = vmul.f32 %v353, %v276
  %v355 = vand.u32 2147483647, %v276
  %vm356 = vcmp.lt.f32.partialorder %v355, 0.0004427343
  %v357 = vsel %vm356, %v354, %v351
  %v358 = vadd.f32 %v278, 1.0
  %v359 = vlog2.pop %v358
  %v360 = vmul.f32 %v359, 0.6931472
  %v361 = vmul.f32 -0.5, %v278
  %v362 = vadd.f32 %v361, 1.0
  %v363 = vmul.f32 %v362, %v278
  %v364 = vand.u32 2147483647, %v278
  %vm365 = vcmp.lt.f32.partialorder %v364, 0.0004427343
  %v366 = vsel %vm365, %v363, %v360
  %v367 = vadd.f32 %v280, 1.0
  %v368 = vlog2.pop %v367
  %v369 = vmul.f32 %v368, 0.6931472
  %v370 = vmul.f32 -0.5, %v280
  %v371 = vadd.f32 %v370, 1.0
  %v372 = vmul.f32 %v371, %v280
  %v373 = vand.u32 2147483647, %v280
  %vm374 = vcmp.lt.f32.partialorder %v373, 0.0004427343
  %v375 = vsel %vm374, %v372, %v369
  %v376 = vadd.f32 %v282, 1.0
  %v377 = vlog2.pop %v376
  %v378 = vmul.f32 %v377, 0.6931472
  %v379 = vmul.f32 -0.5, %v282
  %v380 = vadd.f32 %v379, 1.0
  %v381 = vmul.f32 %v380, %v282
  %v382 = vand.u32 2147483647, %v282
  %vm383 = vcmp.lt.f32.partialorder %v382, 0.0004427343
  %v384 = vsel %vm383, %v381, %v378
  %v385 = vadd.f32 %v284, 1.0
  %v386 = vlog2.pop %v385
  %v387 = vmul.f32 %v386, 0.6931472
  %v388 = vmul.f32 -0.5, %v284
  %v389 = vadd.f32 %v388, 1.0
  %v390 = vmul.f32 %v389, %v284
  %v391 = vand.u32 2147483647, %v284
  %vm392 = vcmp.lt.f32.partialorder %v391, 0.0004427343
  %v393 = vsel %vm392, %v390, %v387
  %v394 = vadd.f32 %v286, 1.0
  %v395 = vlog2.pop %v394
  %v396 = vmul.f32 %v395, 0.6931472
  %v397 = vmul.f32 -0.5, %v286
  %v398 = vadd.f32 %v397, 1.0
  %v399 = vmul.f32 %v398, %v286
  %v400 = vand.u32 2147483647, %v286
  %vm401 = vcmp.lt.f32.partialorder %v400, 0.0004427343
  %v402 = vsel %vm401, %v399, %v396
  %v403 = vadd.f32 %v288, 1.0
  %v404 = vlog2.pop %v403
  %v405 = vmul.f32 %v404, 0.6931472
  %v406 = vmul.f32 -0.5, %v288
  %v407 = vadd.f32 %v406, 1.0
  %v408 = vmul.f32 %v407, %v288
  %v409 = vand.u32 2147483647, %v288
  %vm410 = vcmp.lt.f32.partialorder %v409, 0.0004427343
  %v411 = vsel %vm410, %v408, %v405
  %v412 = vadd.f32 %v290, 1.0
  %v413 = vlog2.pop %v412
  %v414 = vmul.f32 %v413, 0.6931472
  %v415 = vmul.f32 -0.5, %v290
  %v416 = vadd.f32 %v415, 1.0
  %v417 = vmul.f32 %v416, %v290
  %v418 = vand.u32 2147483647, %v290
  %vm419 = vcmp.lt.f32.partialorder %v418, 0.0004427343
  %v420 = vsel %vm419, %v417, %v414
  %v421 = vadd.f32 %v292, 1.0
  %v422 = vlog2.pop %v421
  %v423 = vmul.f32 %v422, 0.6931472
  %v424 = vmul.f32 -0.5, %v292
  %v425 = vadd.f32 %v424, 1.0
  %v426 = vmul.f32 %v425, %v292
  %v427 = vand.u32 2147483647, %v292
  %vm428 = vcmp.lt.f32.partialorder %v427, 0.0004427343
  %v429 = vsel %vm428, %v426, %v423
  %v430 = vadd.f32 %v294, 1.0
  %v431 = vlog2.pop %v430
  %v432 = vmul.f32 %v431, 0.6931472
  %v433 = vmul.f32 -0.5, %v294
  %v434 = vadd.f32 %v433, 1.0
  %v435 = vmul.f32 %v434, %v294
  %v436 = vand.u32 2147483647, %v294
  %vm437 = vcmp.lt.f32.partialorder %v436, 0.0004427343
  %v438 = vsel %vm437, %v435, %v432
  %v439 = vadd.f32 %v215, %v303
  %v440 = vadd.f32 %v216, %v312
  %v441 = vadd.f32 %v217, %v321
  %v442 = vadd.f32 %v218, %v330
  %v443 = vadd.f32 %v219, %v339
  %v444 = vadd.f32 %v220, %v348
  %v445 = vadd.f32 %v221, %v357
  %v446 = vadd.f32 %v222, %v366
  %v447 = vadd.f32 %v223, %v375
  %v448 = vadd.f32 %v224, %v384
  %v449 = vadd.f32 %v225, %v393
  %v450 = vadd.f32 %v226, %v402
  %v451 = vadd.f32 %v227, %v411
  %v452 = vadd.f32 %v228, %v420
  %v453 = vadd.f32 %v229, %v429
  %v454 = vadd.f32 %v230, %v438
  %v455 = vld [vmem:[%s1] sm:$0xff]
  %v456 = vld [vmem:[%s1 + $0x8] sm:$0xff]
  %v457 = vld [vmem:[%s1 + $0x10] sm:$0xff]
  %v458 = vld [vmem:[%s1 + $0x18] sm:$0xff]
  %460 = vset.pattern.permute.xlu0 0
  %461 = vperm.xlu0 %460, %v19
  %v462 = vpop.permute.xlu0 %461
  %465 = vset.pattern.permute.xlu0 0
  %466 = vperm.xlu0 %465, %v20
  %v467 = vpop.permute.xlu0 %466
  %470 = vset.pattern.permute.xlu0 0
  %471 = vperm.xlu0 %470, %v21
  %v472 = vpop.permute.xlu0 %471
  %475 = vset.pattern.permute.xlu0 0
  %476 = vperm.xlu0 %475, %v22
  %v477 = vpop.permute.xlu0 %476
  %vm479 = vcmask 261120
  %v481 = vsel %vm479, %v455, 0
  %v484 = vsel %vm479, %v456, 0
  %v487 = vsel %vm479, %v457, 0
  %v490 = vsel %vm479, %v458, 0
  %492 = vmatprep.subr.mxu0 0.0
  %493 = vmatpush1.msra.mxu0 0.0
  %494 = vmatprep.subr.mxu0 0.0
  %495 = vmatpush1.msra.mxu0 0.0
  %496 = vmatprep.subr.mxu0 0.0
  %497 = vmatpush1.msra.mxu0 0.0
  %498 = vmatprep.subr.mxu0 0.0
  %499 = vmatpush1.msra.mxu0 0.0
  %500 = vmatprep.subr.mxu0 0.0
  %501 = vmatpush1.msra.mxu0 0.0
  %502 = vmatprep.subr.mxu0 0.0
  %503 = vmatpush1.msra.mxu0 0.0
  %504 = vmatprep.subr.mxu0 0.0
  %505 = vmatpush1.msra.mxu0 0.0
  %506 = vmatprep.subr.mxu0 0.0
  %507 = vmatpush1.msra.mxu0 0.0
  %508 = vmatprep.subr.mxu0 0.0
  %509 = vmatpush1.msra.mxu0 0.0
  %510 = vmatprep.subr.mxu0 0.0
  %511 = vmatpush1.msra.mxu0 0.0
  %512 = vmatprep.subr.mxu0 0.0
  %513 = vmatpush1.msra.mxu0 0.0
  %514 = vmatprep.subr.mxu0 0.0
  %515 = vmatpush1.msra.mxu0 0.0
  %516 = vmatprep.subr.mxu0 %v452
  %517 = vmatpush1.msra.mxu0 %v451
  %518 = vmatprep.subr.mxu0 %v448
  %519 = vmatpush1.msra.mxu0 %v447
  %520 = vmatprep.subr.mxu0 %v444
  %521 = vmatpush1.msra.mxu0 %v443
  %522 = vmatprep.subr.mxu0 %v440
  %523 = vmatpush1.msra.mxu0 %v439
  %524 = vmatprep.subr.mxu0 0.0
  %525 = vmatpush2.msra.mxu0 0.0
  %526 = vmatprep.subr.mxu0 0.0
  %527 = vmatpush2.msra.mxu0 0.0
  %528 = vmatprep.subr.mxu0 0.0
  %529 = vmatpush2.msra.mxu0 0.0
  %530 = vmatprep.subr.mxu0 0.0
  %531 = vmatpush2.msra.mxu0 0.0
  %532 = vmatprep.subr.mxu0 0.0
  %533 = vmatpush2.msra.mxu0 0.0
  %534 = vmatprep.subr.mxu0 0.0
  %535 = vmatpush2.msra.mxu0 0.0
  %536 = vmatprep.subr.mxu0 0.0
  %537 = vmatpush2.msra.mxu0 0.0
  %538 = vmatprep.subr.mxu0 0.0
  %539 = vmatpush2.msra.mxu0 0.0
  %540 = vmatprep.subr.mxu0 0.0
  %541 = vmatpush2.msra.mxu0 0.0
  %542 = vmatprep.subr.mxu0 0.0
  %543 = vmatpush2.msra.mxu0 0.0
  %544 = vmatprep.subr.mxu0 0.0
  %545 = vmatpush2.msra.mxu0 0.0
  %546 = vmatprep.subr.mxu0 0.0
  %547 = vmatpush2.msra.mxu0 0.0
  %548 = vmatprep.subr.mxu0 0.0
  %549 = vmatpush2.msra.mxu0 0.0
  %550 = vmatprep.subr.mxu0 0.0
  %551 = vmatpush2.msra.mxu0 0.0
  %552 = vmatprep.subr.mxu0 0.0
  %553 = vmatpush2.msra.mxu0 0.0
  %554 = vmatprep.subr.mxu0 0.0
  %555 = vmatpush2.msra.mxu0 0.0
  %556 = vmatprep.mubr.f32.mxu0 0.0
  %557 = vmatmul.mubr.f32.gmra.mxu0 %v481
  %v558 = vpop.f32.mrf.mxu0
  %v559 = vadd.f32 %v462, %v558
  %v560 = vpop.f32.mrf.mxu0
  %v561 = vadd.f32 %v462, %v560
  %562 = vmatprep.mubr.f32.mxu0 0.0
  %563 = vmatmul.mubr.f32.gmra.mxu0 %v484
  %v564 = vpop.f32.mrf.mxu0
  %v565 = vadd.f32 %v467, %v564
  %v566 = vpop.f32.mrf.mxu0
  %v567 = vadd.f32 %v467, %v566
  %568 = vmatprep.mubr.f32.mxu0 0.0
  %569 = vmatmul.mubr.f32.gmra.mxu0 %v487
  %v570 = vpop.f32.mrf.mxu0
  %v571 = vadd.f32 %v472, %v570
  %v572 = vpop.f32.mrf.mxu0
  %v573 = vadd.f32 %v472, %v572
  %574 = vmatprep.mubr.f32.mxu0 0.0
  %575 = vmatmul.mubr.f32.gmra.mxu0 %v490
  %v576 = vpop.f32.mrf.mxu0
  %v577 = vadd.f32 %v477, %v576
  %v578 = vpop.f32.mrf.mxu0
  %v579 = vadd.f32 %v477, %v578
  %580 = vdwg.mxu0
  %581 = vmatprep.subr.mxu0 0.0
  %582 = vmatpush1.msra.mxu0 0.0
  %583 = vmatprep.subr.mxu0 0.0
  %584 = vmatpush1.msra.mxu0 0.0
  %585 = vmatprep.subr.mxu0 0.0
  %586 = vmatpush1.msra.mxu0 0.0
  %587 = vmatprep.subr.mxu0 0.0
  %588 = vmatpush1.msra.mxu0 0.0
  %589 = vmatprep.subr.mxu0 0.0
  %590 = vmatpush1.msra.mxu0 0.0
  %591 = vmatprep.subr.mxu0 0.0
  %592 = vmatpush1.msra.mxu0 0.0
  %593 = vmatprep.subr.mxu0 0.0
  %594 = vmatpush1.msra.mxu0 0.0
  %595 = vmatprep.subr.mxu0 0.0
  %596 = vmatpush1.msra.mxu0 0.0
  %597 = vmatprep.subr.mxu0 0.0
  %598 = vmatpush1.msra.mxu0 0.0
  %599 = vmatprep.subr.mxu0 0.0
  %600 = vmatpush1.msra.mxu0 0.0
  %601 = vmatprep.subr.mxu0 0.0
  %602 = vmatpush1.msra.mxu0 0.0
  %603 = vmatprep.subr.mxu0 0.0
  %604 = vmatpush1.msra.mxu0 0.0
  %605 = vmatprep.subr.mxu0 %v454
  %606 = vmatpush1.msra.mxu0 %v453
  %607 = vmatprep.subr.mxu0 %v450
  %608 = vmatpush1.msra.mxu0 %v449
  %609 = vmatprep.subr.mxu0 %v446
  %610 = vmatpush1.msra.mxu0 %v445
  %611 = vmatprep.subr.mxu0 %v442
  %612 = vmatpush1.msra.mxu0 %v441
  %613 = vmatprep.subr.mxu0 0.0
  %614 = vmatpush2.msra.mxu0 0.0
  %615 = vmatprep.subr.mxu0 0.0
  %616 = vmatpush2.msra.mxu0 0.0
  %617 = vmatprep.subr.mxu0 0.0
  %618 = vmatpush2.msra.mxu0 0.0
  %619 = vmatprep.subr.mxu0 0.0
  %620 = vmatpush2.msra.mxu0 0.0
  %621 = vmatprep.subr.mxu0 0.0
  %622 = vmatpush2.msra.mxu0 0.0
  %623 = vmatprep.subr.mxu0 0.0
  %624 = vmatpush2.msra.mxu0 0.0
  %625 = vmatprep.subr.mxu0 0.0
  %626 = vmatpush2.msra.mxu0 0.0
  %627 = vmatprep.subr.mxu0 0.0
  %628 = vmatpush2.msra.mxu0 0.0
  %629 = vmatprep.subr.mxu0 0.0
  %630 = vmatpush2.msra.mxu0 0.0
  %631 = vmatprep.subr.mxu0 0.0
  %632 = vmatpush2.msra.mxu0 0.0
  %633 = vmatprep.subr.mxu0 0.0
  %634 = vmatpush2.msra.mxu0 0.0
  %635 = vmatprep.subr.mxu0 0.0
  %636 = vmatpush2.msra.mxu0 0.0
  %637 = vmatprep.subr.mxu0 0.0
  %638 = vmatpush2.msra.mxu0 0.0
  %639 = vmatprep.subr.mxu0 0.0
  %640 = vmatpush2.msra.mxu0 0.0
  %641 = vmatprep.subr.mxu0 0.0
  %642 = vmatpush2.msra.mxu0 0.0
  %643 = vmatprep.subr.mxu0 0.0
  %644 = vmatpush2.msra.mxu0 0.0
  %645 = vmatprep.mubr.f32.mxu0 0.0
  %646 = vmatmul.mubr.f32.gmra.mxu0 %v481
  %v647 = vpop.f32.mrf.mxu0
  %v648 = vadd.f32 %v462, %v647
  %v649 = vpop.f32.mrf.mxu0
  %v650 = vadd.f32 %v462, %v649
  %651 = vmatprep.mubr.f32.mxu0 0.0
  %652 = vmatmul.mubr.f32.gmra.mxu0 %v484
  %v653 = vpop.f32.mrf.mxu0
  %v654 = vadd.f32 %v467, %v653
  %v655 = vpop.f32.mrf.mxu0
  %v656 = vadd.f32 %v467, %v655
  %657 = vmatprep.mubr.f32.mxu0 0.0
  %658 = vmatmul.mubr.f32.gmra.mxu0 %v487
  %v659 = vpop.f32.mrf.mxu0
  %v660 = vadd.f32 %v472, %v659
  %v661 = vpop.f32.mrf.mxu0
  %v662 = vadd.f32 %v472, %v661
  %663 = vmatprep.mubr.f32.mxu0 0.0
  %664 = vmatmul.mubr.f32.gmra.mxu0 %v490
  %v665 = vpop.f32.mrf.mxu0
  %v666 = vadd.f32 %v477, %v665
  %v667 = vpop.f32.mrf.mxu0
  %v668 = vadd.f32 %v477, %v667
  %669 = vdwg.mxu0
  %v670 = vmax.f32 %v559, 0.0
  %v671 = vmax.f32 %v561, 0.0
  %v672 = vmax.f32 %v648, 0.0
  %v673 = vmax.f32 %v650, 0.0
  %v674 = vmax.f32 %v565, 0.0
  %v675 = vmax.f32 %v567, 0.0
  %v676 = vmax.f32 %v654, 0.0
  %v677 = vmax.f32 %v656, 0.0
  %v678 = vmax.f32 %v571, 0.0
  %v679 = vmax.f32 %v573, 0.0
  %v680 = vmax.f32 %v660, 0.0
  %v681 = vmax.f32 %v662, 0.0
  %v682 = vmax.f32 %v577, 0.0
  %v683 = vmax.f32 %v579, 0.0
  %v684 = vmax.f32 %v666, 0.0
  %v685 = vmax.f32 %v668, 0.0
  %v686 = vand.u32 2147483647, %v559
  %v687 = vand.u32 2147483647, %v561
  %v688 = vand.u32 2147483647, %v648
  %v689 = vand.u32 2147483647, %v650
  %v690 = vand.u32 2147483647, %v565
  %v691 = vand.u32 2147483647, %v567
  %v692 = vand.u32 2147483647, %v654
  %v693 = vand.u32 2147483647, %v656
  %v694 = vand.u32 2147483647, %v571
  %v695 = vand.u32 2147483647, %v573
  %v696 = vand.u32 2147483647, %v660
  %v697 = vand.u32 2147483647, %v662
  %v698 = vand.u32 2147483647, %v577
  %v699 = vand.u32 2147483647, %v579
  %v700 = vand.u32 2147483647, %v666
  %v701 = vand.u32 2147483647, %v668
  %v702 = vsub.f32 0.0, %v686
  %v703 = vsub.f32 0.0, %v687
  %v704 = vsub.f32 0.0, %v688
  %v705 = vsub.f32 0.0, %v689
  %v706 = vsub.f32 0.0, %v690
  %v707 = vsub.f32 0.0, %v691
  %v708 = vsub.f32 0.0, %v692
  %v709 = vsub.f32 0.0, %v693
  %v710 = vsub.f32 0.0, %v694
  %v711 = vsub.f32 0.0, %v695
  %v712 = vsub.f32 0.0, %v696
  %v713 = vsub.f32 0.0, %v697
  %v714 = vsub.f32 0.0, %v698
  %v715 = vsub.f32 0.0, %v699
  %v716 = vsub.f32 0.0, %v700
  %v717 = vsub.f32 0.0, %v701
  %v718 = vmul.f32 %v702, 1.442695
  %v719 = vpow.pop %v718
  %v720 = vmul.f32 %v703, 1.442695
  %v721 = vpow.pop %v720
  %v722 = vmul.f32 %v704, 1.442695
  %v723 = vpow.pop %v722
  %v724 = vmul.f32 %v705, 1.442695
  %v725 = vpow.pop %v724
  %v726 = vmul.f32 %v706, 1.442695
  %v727 = vpow.pop %v726
  %v728 = vmul.f32 %v707, 1.442695
  %v729 = vpow.pop %v728
  %v730 = vmul.f32 %v708, 1.442695
  %v731 = vpow.pop %v730
  %v732 = vmul.f32 %v709, 1.442695
  %v733 = vpow.pop %v732
  %v734 = vmul.f32 %v710, 1.442695
  %v735 = vpow.pop %v734
  %v736 = vmul.f32 %v711, 1.442695
  %v737 = vpow.pop %v736
  %v738 = vmul.f32 %v712, 1.442695
  %v739 = vpow.pop %v738
  %v740 = vmul.f32 %v713, 1.442695
  %v741 = vpow.pop %v740
  %v742 = vmul.f32 %v714, 1.442695
  %v743 = vpow.pop %v742
  %v744 = vmul.f32 %v715, 1.442695
  %v745 = vpow.pop %v744
  %v746 = vmul.f32 %v716, 1.442695
  %v747 = vpow.pop %v746
  %v748 = vmul.f32 %v717, 1.442695
  %v749 = vpow.pop %v748
  %v750 = vadd.f32 %v719, 1.0
  %v751 = vlog2.pop %v750
  %v752 = vmul.f32 %v751, 0.6931472
  %v753 = vmul.f32 -0.5, %v719
  %v754 = vadd.f32 %v753, 1.0
  %v755 = vmul.f32 %v754, %v719
  %v756 = vand.u32 2147483647, %v719
  %vm757 = vcmp.lt.f32.partialorder %v756, 0.0004427343
  %v758 = vsel %vm757, %v755, %v752
  %v759 = vadd.f32 %v721, 1.0
  %v760 = vlog2.pop %v759
  %v761 = vmul.f32 %v760, 0.6931472
  %v762 = vmul.f32 -0.5, %v721
  %v763 = vadd.f32 %v762, 1.0
  %v764 = vmul.f32 %v763, %v721
  %v765 = vand.u32 2147483647, %v721
  %vm766 = vcmp.lt.f32.partialorder %v765, 0.0004427343
  %v767 = vsel %vm766, %v764, %v761
  %v768 = vadd.f32 %v723, 1.0
  %v769 = vlog2.pop %v768
  %v770 = vmul.f32 %v769, 0.6931472
  %v771 = vmul.f32 -0.5, %v723
  %v772 = vadd.f32 %v771, 1.0
  %v773 = vmul.f32 %v772, %v723
  %v774 = vand.u32 2147483647, %v723
  %vm775 = vcmp.lt.f32.partialorder %v774, 0.0004427343
  %v776 = vsel %vm775, %v773, %v770
  %v777 = vadd.f32 %v725, 1.0
  %v778 = vlog2.pop %v777
  %v779 = vmul.f32 %v778, 0.6931472
  %v780 = vmul.f32 -0.5, %v725
  %v781 = vadd.f32 %v780, 1.0
  %v782 = vmul.f32 %v781, %v725
  %v783 = vand.u32 2147483647, %v725
  %vm784 = vcmp.lt.f32.partialorder %v783, 0.0004427343
  %v785 = vsel %vm784, %v782, %v779
  %v786 = vadd.f32 %v727, 1.0
  %v787 = vlog2.pop %v786
  %v788 = vmul.f32 %v787, 0.6931472
  %v789 = vmul.f32 -0.5, %v727
  %v790 = vadd.f32 %v789, 1.0
  %v791 = vmul.f32 %v790, %v727
  %v792 = vand.u32 2147483647, %v727
  %vm793 = vcmp.lt.f32.partialorder %v792, 0.0004427343
  %v794 = vsel %vm793, %v791, %v788
  %v795 = vadd.f32 %v729, 1.0
  %v796 = vlog2.pop %v795
  %v797 = vmul.f32 %v796, 0.6931472
  %v798 = vmul.f32 -0.5, %v729
  %v799 = vadd.f32 %v798, 1.0
  %v800 = vmul.f32 %v799, %v729
  %v801 = vand.u32 2147483647, %v729
  %vm802 = vcmp.lt.f32.partialorder %v801, 0.0004427343
  %v803 = vsel %vm802, %v800, %v797
  %v804 = vadd.f32 %v731, 1.0
  %v805 = vlog2.pop %v804
  %v806 = vmul.f32 %v805, 0.6931472
  %v807 = vmul.f32 -0.5, %v731
  %v808 = vadd.f32 %v807, 1.0
  %v809 = vmul.f32 %v808, %v731
  %v810 = vand.u32 2147483647, %v731
  %vm811 = vcmp.lt.f32.partialorder %v810, 0.0004427343
  %v812 = vsel %vm811, %v809, %v806
  %v813 = vadd.f32 %v733, 1.0
  %v814 = vlog2.pop %v813
  %v815 = vmul.f32 %v814, 0.6931472
  %v816 = vmul.f32 -0.5, %v733
  %v817 = vadd.f32 %v816, 1.0
  %v818 = vmul.f32 %v817, %v733
  %v819 = vand.u32 2147483647, %v733
  %vm820 = vcmp.lt.f32.partialorder %v819, 0.0004427343
  %v821 = vsel %vm820, %v818, %v815
  %v822 = vadd.f32 %v735, 1.0
  %v823 = vlog2.pop %v822
  %v824 = vmul.f32 %v823, 0.6931472
  %v825 = vmul.f32 -0.5, %v735
  %v826 = vadd.f32 %v825, 1.0
  %v827 = vmul.f32 %v826, %v735
  %v828 = vand.u32 2147483647, %v735
  %vm829 = vcmp.lt.f32.partialorder %v828, 0.0004427343
  %v830 = vsel %vm829, %v827, %v824
  %v831 = vadd.f32 %v737, 1.0
  %v832 = vlog2.pop %v831
  %v833 = vmul.f32 %v832, 0.6931472
  %v834 = vmul.f32 -0.5, %v737
  %v835 = vadd.f32 %v834, 1.0
  %v836 = vmul.f32 %v835, %v737
  %v837 = vand.u32 2147483647, %v737
  %vm838 = vcmp.lt.f32.partialorder %v837, 0.0004427343
  %v839 = vsel %vm838, %v836, %v833
  %v840 = vadd.f32 %v739, 1.0
  %v841 = vlog2.pop %v840
  %v842 = vmul.f32 %v841, 0.6931472
  %v843 = vmul.f32 -0.5, %v739
  %v844 = vadd.f32 %v843, 1.0
  %v845 = vmul.f32 %v844, %v739
  %v846 = vand.u32 2147483647, %v739
  %vm847 = vcmp.lt.f32.partialorder %v846, 0.0004427343
  %v848 = vsel %vm847, %v845, %v842
  %v849 = vadd.f32 %v741, 1.0
  %v850 = vlog2.pop %v849
  %v851 = vmul.f32 %v850, 0.6931472
  %v852 = vmul.f32 -0.5, %v741
  %v853 = vadd.f32 %v852, 1.0
  %v854 = vmul.f32 %v853, %v741
  %v855 = vand.u32 2147483647, %v741
  %vm856 = vcmp.lt.f32.partialorder %v855, 0.0004427343
  %v857 = vsel %vm856, %v854, %v851
  %v858 = vadd.f32 %v743, 1.0
  %v859 = vlog2.pop %v858
  %v860 = vmul.f32 %v859, 0.6931472
  %v861 = vmul.f32 -0.5, %v743
  %v862 = vadd.f32 %v861, 1.0
  %v863 = vmul.f32 %v862, %v743
  %v864 = vand.u32 2147483647, %v743
  %vm865 = vcmp.lt.f32.partialorder %v864, 0.0004427343
  %v866 = vsel %vm865, %v863, %v860
  %v867 = vadd.f32 %v745, 1.0
  %v868 = vlog2.pop %v867
  %v869 = vmul.f32 %v868, 0.6931472
  %v870 = vmul.f32 -0.5, %v745
  %v871 = vadd.f32 %v870, 1.0
  %v872 = vmul.f32 %v871, %v745
  %v873 = vand.u32 2147483647, %v745
  %vm874 = vcmp.lt.f32.partialorder %v873, 0.0004427343
  %v875 = vsel %vm874, %v872, %v869
  %v876 = vadd.f32 %v747, 1.0
  %v877 = vlog2.pop %v876
  %v878 = vmul.f32 %v877, 0.6931472
  %v879 = vmul.f32 -0.5, %v747
  %v880 = vadd.f32 %v879, 1.0
  %v881 = vmul.f32 %v880, %v747
  %v882 = vand.u32 2147483647, %v747
  %vm883 = vcmp.lt.f32.partialorder %v882, 0.0004427343
  %v884 = vsel %vm883, %v881, %v878
  %v885 = vadd.f32 %v749, 1.0
  %v886 = vlog2.pop %v885
  %v887 = vmul.f32 %v886, 0.6931472
  %v888 = vmul.f32 -0.5, %v749
  %v889 = vadd.f32 %v888, 1.0
  %v890 = vmul.f32 %v889, %v749
  %v891 = vand.u32 2147483647, %v749
  %vm892 = vcmp.lt.f32.partialorder %v891, 0.0004427343
  %v893 = vsel %vm892, %v890, %v887
  %v894 = vadd.f32 %v670, %v758
  %v895 = vadd.f32 %v671, %v767
  %v896 = vadd.f32 %v672, %v776
  %v897 = vadd.f32 %v673, %v785
  %v898 = vadd.f32 %v674, %v794
  %v899 = vadd.f32 %v675, %v803
  %v900 = vadd.f32 %v676, %v812
  %v901 = vadd.f32 %v677, %v821
  %v902 = vadd.f32 %v678, %v830
  %v903 = vadd.f32 %v679, %v839
  %v904 = vadd.f32 %v680, %v848
  %v905 = vadd.f32 %v681, %v857
  %v906 = vadd.f32 %v682, %v866
  %v907 = vadd.f32 %v683, %v875
  %v908 = vadd.f32 %v684, %v884
  %v909 = vadd.f32 %v685, %v893
  %s910 = scalar_lea.vmem %s1, 32
  %v911 = vld [vmem:[%s910] sm:$0xff]
  %v912 = vld [vmem:[%s910 + $0x8] sm:$0xff]
  %v913 = vld [vmem:[%s910 + $0x10] sm:$0xff]
  %v914 = vld [vmem:[%s910 + $0x18] sm:$0xff]
  %915 = vset.pattern.permute.xlu0 1
  %916 = vperm.xlu0 %915, %v19
  %v917 = vpop.permute.xlu0 %916
  %919 = vset.pattern.permute.xlu0 1
  %920 = vperm.xlu0 %919, %v20
  %v921 = vpop.permute.xlu0 %920
  %923 = vset.pattern.permute.xlu0 1
  %924 = vperm.xlu0 %923, %v21
  %v925 = vpop.permute.xlu0 %924
  %927 = vset.pattern.permute.xlu0 1
  %928 = vperm.xlu0 %927, %v22
  %v929 = vpop.permute.xlu0 %928
  %v932 = vsel %vm479, %v911, 0
  %v935 = vsel %vm479, %v912, 0
  %v938 = vsel %vm479, %v913, 0
  %v941 = vsel %vm479, %v914, 0
  %943 = vmatprep.subr.mxu0 0.0
  %944 = vmatpush1.msra.mxu0 0.0
  %945 = vmatprep.subr.mxu0 0.0
  %946 = vmatpush1.msra.mxu0 0.0
  %947 = vmatprep.subr.mxu0 0.0
  %948 = vmatpush1.msra.mxu0 0.0
  %949 = vmatprep.subr.mxu0 0.0
  %950 = vmatpush1.msra.mxu0 0.0
  %951 = vmatprep.subr.mxu0 0.0
  %952 = vmatpush1.msra.mxu0 0.0
  %953 = vmatprep.subr.mxu0 0.0
  %954 = vmatpush1.msra.mxu0 0.0
  %955 = vmatprep.subr.mxu0 0.0
  %956 = vmatpush1.msra.mxu0 0.0
  %957 = vmatprep.subr.mxu0 0.0
  %958 = vmatpush1.msra.mxu0 0.0
  %959 = vmatprep.subr.mxu0 0.0
  %960 = vmatpush1.msra.mxu0 0.0
  %961 = vmatprep.subr.mxu0 0.0
  %962 = vmatpush1.msra.mxu0 0.0
  %963 = vmatprep.subr.mxu0 0.0
  %964 = vmatpush1.msra.mxu0 0.0
  %965 = vmatprep.subr.mxu0 0.0
  %966 = vmatpush1.msra.mxu0 0.0
  %967 = vmatprep.subr.mxu0 %v907
  %968 = vmatpush1.msra.mxu0 %v906
  %969 = vmatprep.subr.mxu0 %v903
  %970 = vmatpush1.msra.mxu0 %v902
  %971 = vmatprep.subr.mxu0 %v899
  %972 = vmatpush1.msra.mxu0 %v898
  %973 = vmatprep.subr.mxu0 %v895
  %974 = vmatpush1.msra.mxu0 %v894
  %975 = vmatprep.subr.mxu0 0.0
  %976 = vmatpush2.msra.mxu0 0.0
  %977 = vmatprep.subr.mxu0 0.0
  %978 = vmatpush2.msra.mxu0 0.0
  %979 = vmatprep.subr.mxu0 0.0
  %980 = vmatpush2.msra.mxu0 0.0
  %981 = vmatprep.subr.mxu0 0.0
  %982 = vmatpush2.msra.mxu0 0.0
  %983 = vmatprep.subr.mxu0 0.0
  %984 = vmatpush2.msra.mxu0 0.0
  %985 = vmatprep.subr.mxu0 0.0
  %986 = vmatpush2.msra.mxu0 0.0
  %987 = vmatprep.subr.mxu0 0.0
  %988 = vmatpush2.msra.mxu0 0.0
  %989 = vmatprep.subr.mxu0 0.0
  %990 = vmatpush2.msra.mxu0 0.0
  %991 = vmatprep.subr.mxu0 0.0
  %992 = vmatpush2.msra.mxu0 0.0
  %993 = vmatprep.subr.mxu0 0.0
  %994 = vmatpush2.msra.mxu0 0.0
  %995 = vmatprep.subr.mxu0 0.0
  %996 = vmatpush2.msra.mxu0 0.0
  %997 = vmatprep.subr.mxu0 0.0
  %998 = vmatpush2.msra.mxu0 0.0
  %999 = vmatprep.subr.mxu0 0.0
  %1000 = vmatpush2.msra.mxu0 0.0
  %1001 = vmatprep.subr.mxu0 0.0
  %1002 = vmatpush2.msra.mxu0 0.0
  %1003 = vmatprep.subr.mxu0 0.0
  %1004 = vmatpush2.msra.mxu0 0.0
  %1005 = vmatprep.subr.mxu0 0.0
  %1006 = vmatpush2.msra.mxu0 0.0
  %1007 = vmatprep.mubr.f32.mxu0 0.0
  %1008 = vmatmul.mubr.f32.gmra.mxu0 %v932
  %v1009 = vpop.f32.mrf.mxu0
  %v1010 = vadd.f32 %v917, %v1009
  %v1011 = vpop.f32.mrf.mxu0
  %v1012 = vadd.f32 %v917, %v1011
  %1013 = vmatprep.mubr.f32.mxu0 0.0
  %1014 = vmatmul.mubr.f32.gmra.mxu0 %v935
  %v1015 = vpop.f32.mrf.mxu0
  %v1016 = vadd.f32 %v921, %v1015
  %v1017 = vpop.f32.mrf.mxu0
  %v1018 = vadd.f32 %v921, %v1017
  %1019 = vmatprep.mubr.f32.mxu0 0.0
  %1020 = vmatmul.mubr.f32.gmra.mxu0 %v938
  %v1021 = vpop.f32.mrf.mxu0
  %v1022 = vadd.f32 %v925, %v1021
  %v1023 = vpop.f32.mrf.mxu0
  %v1024 = vadd.f32 %v925, %v1023
  %1025 = vmatprep.mubr.f32.mxu0 0.0
  %1026 = vmatmul.mubr.f32.gmra.mxu0 %v941
  %v1027 = vpop.f32.mrf.mxu0
  %v1028 = vadd.f32 %v929, %v1027
  %v1029 = vpop.f32.mrf.mxu0
  %v1030 = vadd.f32 %v929, %v1029
  %1031 = vdwg.mxu0
  %1032 = vmatprep.subr.mxu0 0.0
  %1033 = vmatpush1.msra.mxu0 0.0
  %1034 = vmatprep.subr.mxu0 0.0
  %1035 = vmatpush1.msra.mxu0 0.0
  %1036 = vmatprep.subr.mxu0 0.0
  %1037 = vmatpush1.msra.mxu0 0.0
  %1038 = vmatprep.subr.mxu0 0.0
  %1039 = vmatpush1.msra.mxu0 0.0
  %1040 = vmatprep.subr.mxu0 0.0
  %1041 = vmatpush1.msra.mxu0 0.0
  %1042 = vmatprep.subr.mxu0 0.0
  %1043 = vmatpush1.msra.mxu0 0.0
  %1044 = vmatprep.subr.mxu0 0.0
  %1045 = vmatpush1.msra.mxu0 0.0
  %1046 = vmatprep.subr.mxu0 0.0
  %1047 = vmatpush1.msra.mxu0 0.0
  %1048 = vmatprep.subr.mxu0 0.0
  %1049 = vmatpush1.msra.mxu0 0.0
  %1050 = vmatprep.subr.mxu0 0.0
  %1051 = vmatpush1.msra.mxu0 0.0
  %1052 = vmatprep.subr.mxu0 0.0
  %1053 = vmatpush1.msra.mxu0 0.0
  %1054 = vmatprep.subr.mxu0 0.0
  %1055 = vmatpush1.msra.mxu0 0.0
  %1056 = vmatprep.subr.mxu0 %v909
  %1057 = vmatpush1.msra.mxu0 %v908
  %1058 = vmatprep.subr.mxu0 %v905
  %1059 = vmatpush1.msra.mxu0 %v904
  %1060 = vmatprep.subr.mxu0 %v901
  %1061 = vmatpush1.msra.mxu0 %v900
  %1062 = vmatprep.subr.mxu0 %v897
  %1063 = vmatpush1.msra.mxu0 %v896
  %1064 = vmatprep.subr.mxu0 0.0
  %1065 = vmatpush2.msra.mxu0 0.0
  %1066 = vmatprep.subr.mxu0 0.0
  %1067 = vmatpush2.msra.mxu0 0.0
  %1068 = vmatprep.subr.mxu0 0.0
  %1069 = vmatpush2.msra.mxu0 0.0
  %1070 = vmatprep.subr.mxu0 0.0
  %1071 = vmatpush2.msra.mxu0 0.0
  %1072 = vmatprep.subr.mxu0 0.0
  %1073 = vmatpush2.msra.mxu0 0.0
  %1074 = vmatprep.subr.mxu0 0.0
  %1075 = vmatpush2.msra.mxu0 0.0
  %1076 = vmatprep.subr.mxu0 0.0
  %1077 = vmatpush2.msra.mxu0 0.0
  %1078 = vmatprep.subr.mxu0 0.0
  %1079 = vmatpush2.msra.mxu0 0.0
  %1080 = vmatprep.subr.mxu0 0.0
  %1081 = vmatpush2.msra.mxu0 0.0
  %1082 = vmatprep.subr.mxu0 0.0
  %1083 = vmatpush2.msra.mxu0 0.0
  %1084 = vmatprep.subr.mxu0 0.0
  %1085 = vmatpush2.msra.mxu0 0.0
  %1086 = vmatprep.subr.mxu0 0.0
  %1087 = vmatpush2.msra.mxu0 0.0
  %1088 = vmatprep.subr.mxu0 0.0
  %1089 = vmatpush2.msra.mxu0 0.0
  %1090 = vmatprep.subr.mxu0 0.0
  %1091 = vmatpush2.msra.mxu0 0.0
  %1092 = vmatprep.subr.mxu0 0.0
  %1093 = vmatpush2.msra.mxu0 0.0
  %1094 = vmatprep.subr.mxu0 0.0
  %1095 = vmatpush2.msra.mxu0 0.0
  %1096 = vmatprep.mubr.f32.mxu0 0.0
  %1097 = vmatmul.mubr.f32.gmra.mxu0 %v932
  %v1098 = vpop.f32.mrf.mxu0
  %v1099 = vadd.f32 %v917, %v1098
  %v1100 = vpop.f32.mrf.mxu0
  %v1101 = vadd.f32 %v917, %v1100
  %1102 = vmatprep.mubr.f32.mxu0 0.0
  %1103 = vmatmul.mubr.f32.gmra.mxu0 %v935
  %v1104 = vpop.f32.mrf.mxu0
  %v1105 = vadd.f32 %v921, %v1104
  %v1106 = vpop.f32.mrf.mxu0
  %v1107 = vadd.f32 %v921, %v1106
  %1108 = vmatprep.mubr.f32.mxu0 0.0
  %1109 = vmatmul.mubr.f32.gmra.mxu0 %v938
  %v1110 = vpop.f32.mrf.mxu0
  %v1111 = vadd.f32 %v925, %v1110
  %v1112 = vpop.f32.mrf.mxu0
  %v1113 = vadd.f32 %v925, %v1112
  %1114 = vmatprep.mubr.f32.mxu0 0.0
  %1115 = vmatmul.mubr.f32.gmra.mxu0 %v941
  %v1116 = vpop.f32.mrf.mxu0
  %v1117 = vadd.f32 %v929, %v1116
  %v1118 = vpop.f32.mrf.mxu0
  %v1119 = vadd.f32 %v929, %v1118
  %1120 = vdwg.mxu0
  %v1121 = vadd.f32 %v103, %v1010
  %v1122 = vadd.f32 %v135, %v1012
  %v1123 = vadd.f32 %v167, %v1099
  %v1124 = vadd.f32 %v199, %v1101
  %v1125 = vadd.f32 %v104, %v1016
  %v1126 = vadd.f32 %v136, %v1018
  %v1127 = vadd.f32 %v168, %v1105
  %v1128 = vadd.f32 %v200, %v1107
  %v1129 = vadd.f32 %v105, %v1022
  %v1130 = vadd.f32 %v137, %v1024
  %v1131 = vadd.f32 %v169, %v1111
  %v1132 = vadd.f32 %v201, %v1113
  %v1133 = vadd.f32 %v106, %v1028
  %v1134 = vadd.f32 %v138, %v1030
  %v1135 = vadd.f32 %v170, %v1117
  %v1136 = vadd.f32 %v202, %v1119
  %v1137 = vmax.f32 %v1121, 0.0
  %v1138 = vmax.f32 %v1122, 0.0
  %v1139 = vmax.f32 %v1123, 0.0
  %v1140 = vmax.f32 %v1124, 0.0
  %v1141 = vmax.f32 %v1125, 0.0
  %v1142 = vmax.f32 %v1126, 0.0
  %v1143 = vmax.f32 %v1127, 0.0
  %v1144 = vmax.f32 %v1128, 0.0
  %v1145 = vmax.f32 %v1129, 0.0
  %v1146 = vmax.f32 %v1130, 0.0
  %v1147 = vmax.f32 %v1131, 0.0
  %v1148 = vmax.f32 %v1132, 0.0
  %v1149 = vmax.f32 %v1133, 0.0
  %v1150 = vmax.f32 %v1134, 0.0
  %v1151 = vmax.f32 %v1135, 0.0
  %v1152 = vmax.f32 %v1136, 0.0
  %v1153 = vand.u32 2147483647, %v1121
  %v1154 = vand.u32 2147483647, %v1122
  %v1155 = vand.u32 2147483647, %v1123
  %v1156 = vand.u32 2147483647, %v1124
  %v1157 = vand.u32 2147483647, %v1125
  %v1158 = vand.u32 2147483647, %v1126
  %v1159 = vand.u32 2147483647, %v1127
  %v1160 = vand.u32 2147483647, %v1128
  %v1161 = vand.u32 2147483647, %v1129
  %v1162 = vand.u32 2147483647, %v1130
  %v1163 = vand.u32 2147483647, %v1131
  %v1164 = vand.u32 2147483647, %v1132
  %v1165 = vand.u32 2147483647, %v1133
  %v1166 = vand.u32 2147483647, %v1134
  %v1167 = vand.u32 2147483647, %v1135
  %v1168 = vand.u32 2147483647, %v1136
  %v1169 = vsub.f32 0.0, %v1153
  %v1170 = vsub.f32 0.0, %v1154
  %v1171 = vsub.f32 0.0, %v1155
  %v1172 = vsub.f32 0.0, %v1156
  %v1173 = vsub.f32 0.0, %v1157
  %v1174 = vsub.f32 0.0, %v1158
  %v1175 = vsub.f32 0.0, %v1159
  %v1176 = vsub.f32 0.0, %v1160
  %v1177 = vsub.f32 0.0, %v1161
  %v1178 = vsub.f32 0.0, %v1162
  %v1179 = vsub.f32 0.0, %v1163
  %v1180 = vsub.f32 0.0, %v1164
  %v1181 = vsub.f32 0.0, %v1165
  %v1182 = vsub.f32 0.0, %v1166
  %v1183 = vsub.f32 0.0, %v1167
  %v1184 = vsub.f32 0.0, %v1168
  %v1185 = vmul.f32 %v1169, 1.442695
  %v1186 = vpow.pop %v1185
  %v1187 = vmul.f32 %v1170, 1.442695
  %v1188 = vpow.pop %v1187
  %v1189 = vmul.f32 %v1171, 1.442695
  %v1190 = vpow.pop %v1189
  %v1191 = vmul.f32 %v1172, 1.442695
  %v1192 = vpow.pop %v1191
  %v1193 = vmul.f32 %v1173, 1.442695
  %v1194 = vpow.pop %v1193
  %v1195 = vmul.f32 %v1174, 1.442695
  %v1196 = vpow.pop %v1195
  %v1197 = vmul.f32 %v1175, 1.442695
  %v1198 = vpow.pop %v1197
  %v1199 = vmul.f32 %v1176, 1.442695
  %v1200 = vpow.pop %v1199
  %v1201 = vmul.f32 %v1177, 1.442695
  %v1202 = vpow.pop %v1201
  %v1203 = vmul.f32 %v1178, 1.442695
  %v1204 = vpow.pop %v1203
  %v1205 = vmul.f32 %v1179, 1.442695
  %v1206 = vpow.pop %v1205
  %v1207 = vmul.f32 %v1180, 1.442695
  %v1208 = vpow.pop %v1207
  %v1209 = vmul.f32 %v1181, 1.442695
  %v1210 = vpow.pop %v1209
  %v1211 = vmul.f32 %v1182, 1.442695
  %v1212 = vpow.pop %v1211
  %v1213 = vmul.f32 %v1183, 1.442695
  %v1214 = vpow.pop %v1213
  %v1215 = vmul.f32 %v1184, 1.442695
  %v1216 = vpow.pop %v1215
  %v1217 = vadd.f32 %v1186, 1.0
  %v1218 = vlog2.pop %v1217
  %v1219 = vmul.f32 %v1218, 0.6931472
  %v1220 = vmul.f32 -0.5, %v1186
  %v1221 = vadd.f32 %v1220, 1.0
  %v1222 = vmul.f32 %v1221, %v1186
  %v1223 = vand.u32 2147483647, %v1186
  %vm1224 = vcmp.lt.f32.partialorder %v1223, 0.0004427343
  %v1225 = vsel %vm1224, %v1222, %v1219
  %v1226 = vadd.f32 %v1188, 1.0
  %v1227 = vlog2.pop %v1226
  %v1228 = vmul.f32 %v1227, 0.6931472
  %v1229 = vmul.f32 -0.5, %v1188
  %v1230 = vadd.f32 %v1229, 1.0
  %v1231 = vmul.f32 %v1230, %v1188
  %v1232 = vand.u32 2147483647, %v1188
  %vm1233 = vcmp.lt.f32.partialorder %v1232, 0.0004427343
  %v1234 = vsel %vm1233, %v1231, %v1228
  %v1235 = vadd.f32 %v1190, 1.0
  %v1236 = vlog2.pop %v1235
  %v1237 = vmul.f32 %v1236, 0.6931472
  %v1238 = vmul.f32 -0.5, %v1190
  %v1239 = vadd.f32 %v1238, 1.0
  %v1240 = vmul.f32 %v1239, %v1190
  %v1241 = vand.u32 2147483647, %v1190
  %vm1242 = vcmp.lt.f32.partialorder %v1241, 0.0004427343
  %v1243 = vsel %vm1242, %v1240, %v1237
  %v1244 = vadd.f32 %v1192, 1.0
  %v1245 = vlog2.pop %v1244
  %v1246 = vmul.f32 %v1245, 0.6931472
  %v1247 = vmul.f32 -0.5, %v1192
  %v1248 = vadd.f32 %v1247, 1.0
  %v1249 = vmul.f32 %v1248, %v1192
  %v1250 = vand.u32 2147483647, %v1192
  %vm1251 = vcmp.lt.f32.partialorder %v1250, 0.0004427343
  %v1252 = vsel %vm1251, %v1249, %v1246
  %v1253 = vadd.f32 %v1194, 1.0
  %v1254 = vlog2.pop %v1253
  %v1255 = vmul.f32 %v1254, 0.6931472
  %v1256 = vmul.f32 -0.5, %v1194
  %v1257 = vadd.f32 %v1256, 1.0
  %v1258 = vmul.f32 %v1257, %v1194
  %v1259 = vand.u32 2147483647, %v1194
  %vm1260 = vcmp.lt.f32.partialorder %v1259, 0.0004427343
  %v1261 = vsel %vm1260, %v1258, %v1255
  %v1262 = vadd.f32 %v1196, 1.0
  %v1263 = vlog2.pop %v1262
  %v1264 = vmul.f32 %v1263, 0.6931472
  %v1265 = vmul.f32 -0.5, %v1196
  %v1266 = vadd.f32 %v1265, 1.0
  %v1267 = vmul.f32 %v1266, %v1196
  %v1268 = vand.u32 2147483647, %v1196
  %vm1269 = vcmp.lt.f32.partialorder %v1268, 0.0004427343
  %v1270 = vsel %vm1269, %v1267, %v1264
  %v1271 = vadd.f32 %v1198, 1.0
  %v1272 = vlog2.pop %v1271
  %v1273 = vmul.f32 %v1272, 0.6931472
  %v1274 = vmul.f32 -0.5, %v1198
  %v1275 = vadd.f32 %v1274, 1.0
  %v1276 = vmul.f32 %v1275, %v1198
  %v1277 = vand.u32 2147483647, %v1198
  %vm1278 = vcmp.lt.f32.partialorder %v1277, 0.0004427343
  %v1279 = vsel %vm1278, %v1276, %v1273
  %v1280 = vadd.f32 %v1200, 1.0
  %v1281 = vlog2.pop %v1280
  %v1282 = vmul.f32 %v1281, 0.6931472
  %v1283 = vmul.f32 -0.5, %v1200
  %v1284 = vadd.f32 %v1283, 1.0
  %v1285 = vmul.f32 %v1284, %v1200
  %v1286 = vand.u32 2147483647, %v1200
  %vm1287 = vcmp.lt.f32.partialorder %v1286, 0.0004427343
  %v1288 = vsel %vm1287, %v1285, %v1282
  %v1289 = vadd.f32 %v1202, 1.0
  %v1290 = vlog2.pop %v1289
  %v1291 = vmul.f32 %v1290, 0.6931472
  %v1292 = vmul.f32 -0.5, %v1202
  %v1293 = vadd.f32 %v1292, 1.0
  %v1294 = vmul.f32 %v1293, %v1202
  %v1295 = vand.u32 2147483647, %v1202
  %vm1296 = vcmp.lt.f32.partialorder %v1295, 0.0004427343
  %v1297 = vsel %vm1296, %v1294, %v1291
  %v1298 = vadd.f32 %v1204, 1.0
  %v1299 = vlog2.pop %v1298
  %v1300 = vmul.f32 %v1299, 0.6931472
  %v1301 = vmul.f32 -0.5, %v1204
  %v1302 = vadd.f32 %v1301, 1.0
  %v1303 = vmul.f32 %v1302, %v1204
  %v1304 = vand.u32 2147483647, %v1204
  %vm1305 = vcmp.lt.f32.partialorder %v1304, 0.0004427343
  %v1306 = vsel %vm1305, %v1303, %v1300
  %v1307 = vadd.f32 %v1206, 1.0
  %v1308 = vlog2.pop %v1307
  %v1309 = vmul.f32 %v1308, 0.6931472
  %v1310 = vmul.f32 -0.5, %v1206
  %v1311 = vadd.f32 %v1310, 1.0
  %v1312 = vmul.f32 %v1311, %v1206
  %v1313 = vand.u32 2147483647, %v1206
  %vm1314 = vcmp.lt.f32.partialorder %v1313, 0.0004427343
  %v1315 = vsel %vm1314, %v1312, %v1309
  %v1316 = vadd.f32 %v1208, 1.0
  %v1317 = vlog2.pop %v1316
  %v1318 = vmul.f32 %v1317, 0.6931472
  %v1319 = vmul.f32 -0.5, %v1208
  %v1320 = vadd.f32 %v1319, 1.0
  %v1321 = vmul.f32 %v1320, %v1208
  %v1322 = vand.u32 2147483647, %v1208
  %vm1323 = vcmp.lt.f32.partialorder %v1322, 0.0004427343
  %v1324 = vsel %vm1323, %v1321, %v1318
  %v1325 = vadd.f32 %v1210, 1.0
  %v1326 = vlog2.pop %v1325
  %v1327 = vmul.f32 %v1326, 0.6931472
  %v1328 = vmul.f32 -0.5, %v1210
  %v1329 = vadd.f32 %v1328, 1.0
  %v1330 = vmul.f32 %v1329, %v1210
  %v1331 = vand.u32 2147483647, %v1210
  %vm1332 = vcmp.lt.f32.partialorder %v1331, 0.0004427343
  %v1333 = vsel %vm1332, %v1330, %v1327
  %v1334 = vadd.f32 %v1212, 1.0
  %v1335 = vlog2.pop %v1334
  %v1336 = vmul.f32 %v1335, 0.6931472
  %v1337 = vmul.f32 -0.5, %v1212
  %v1338 = vadd.f32 %v1337, 1.0
  %v1339 = vmul.f32 %v1338, %v1212
  %v1340 = vand.u32 2147483647, %v1212
  %vm1341 = vcmp.lt.f32.partialorder %v1340, 0.0004427343
  %v1342 = vsel %vm1341, %v1339, %v1336
  %v1343 = vadd.f32 %v1214, 1.0
  %v1344 = vlog2.pop %v1343
  %v1345 = vmul.f32 %v1344, 0.6931472
  %v1346 = vmul.f32 -0.5, %v1214
  %v1347 = vadd.f32 %v1346, 1.0
  %v1348 = vmul.f32 %v1347, %v1214
  %v1349 = vand.u32 2147483647, %v1214
  %vm1350 = vcmp.lt.f32.partialorder %v1349, 0.0004427343
  %v1351 = vsel %vm1350, %v1348, %v1345
  %v1352 = vadd.f32 %v1216, 1.0
  %v1353 = vlog2.pop %v1352
  %v1354 = vmul.f32 %v1353, 0.6931472
  %v1355 = vmul.f32 -0.5, %v1216
  %v1356 = vadd.f32 %v1355, 1.0
  %v1357 = vmul.f32 %v1356, %v1216
  %v1358 = vand.u32 2147483647, %v1216
  %vm1359 = vcmp.lt.f32.partialorder %v1358, 0.0004427343
  %v1360 = vsel %vm1359, %v1357, %v1354
  %v1361 = vadd.f32 %v1137, %v1225
  %v1362 = vadd.f32 %v1138, %v1234
  %v1363 = vadd.f32 %v1139, %v1243
  %v1364 = vadd.f32 %v1140, %v1252
  %v1365 = vadd.f32 %v1141, %v1261
  %v1366 = vadd.f32 %v1142, %v1270
  %v1367 = vadd.f32 %v1143, %v1279
  %v1368 = vadd.f32 %v1144, %v1288
  %v1369 = vadd.f32 %v1145, %v1297
  %v1370 = vadd.f32 %v1146, %v1306
  %v1371 = vadd.f32 %v1147, %v1315
  %v1372 = vadd.f32 %v1148, %v1324
  %v1373 = vadd.f32 %v1149, %v1333
  %v1374 = vadd.f32 %v1150, %v1342
  %v1375 = vadd.f32 %v1151, %v1351
  %v1376 = vadd.f32 %v1152, %v1360
  %s1377 = scalar_lea.vmem %s1, 64
  %v1378 = vld [vmem:[%s1377] sm:$0xff]
  %v1379 = vld [vmem:[%s1377 + $0x8] sm:$0xff]
  %v1380 = vld [vmem:[%s1377 + $0x10] sm:$0xff]
  %v1381 = vld [vmem:[%s1377 + $0x18] sm:$0xff]
  %1382 = vset.pattern.permute.xlu0 2
  %1383 = vperm.xlu0 %1382, %v19
  %v1384 = vpop.permute.xlu0 %1383
  %1386 = vset.pattern.permute.xlu0 2
  %1387 = vperm.xlu0 %1386, %v20
  %v1388 = vpop.permute.xlu0 %1387
  %1390 = vset.pattern.permute.xlu0 2
  %1391 = vperm.xlu0 %1390, %v21
  %v1392 = vpop.permute.xlu0 %1391
  %1394 = vset.pattern.permute.xlu0 2
  %1395 = vperm.xlu0 %1394, %v22
  %v1396 = vpop.permute.xlu0 %1395
  %v1399 = vsel %vm479, %v1378, 0
  %v1402 = vsel %vm479, %v1379, 0
  %v1405 = vsel %vm479, %v1380, 0
  %v1408 = vsel %vm479, %v1381, 0
  %1410 = vmatprep.subr.mxu0 0.0
  %1411 = vmatpush1.msra.mxu0 0.0
  %1412 = vmatprep.subr.mxu0 0.0
  %1413 = vmatpush1.msra.mxu0 0.0
  %1414 = vmatprep.subr.mxu0 0.0
  %1415 = vmatpush1.msra.mxu0 0.0
  %1416 = vmatprep.subr.mxu0 0.0
  %1417 = vmatpush1.msra.mxu0 0.0
  %1418 = vmatprep.subr.mxu0 0.0
  %1419 = vmatpush1.msra.mxu0 0.0
  %1420 = vmatprep.subr.mxu0 0.0
  %1421 = vmatpush1.msra.mxu0 0.0
  %1422 = vmatprep.subr.mxu0 0.0
  %1423 = vmatpush1.msra.mxu0 0.0
  %1424 = vmatprep.subr.mxu0 0.0
  %1425 = vmatpush1.msra.mxu0 0.0
  %1426 = vmatprep.subr.mxu0 0.0
  %1427 = vmatpush1.msra.mxu0 0.0
  %1428 = vmatprep.subr.mxu0 0.0
  %1429 = vmatpush1.msra.mxu0 0.0
  %1430 = vmatprep.subr.mxu0 0.0
  %1431 = vmatpush1.msra.mxu0 0.0
  %1432 = vmatprep.subr.mxu0 0.0
  %1433 = vmatpush1.msra.mxu0 0.0
  %1434 = vmatprep.subr.mxu0 %v1374
  %1435 = vmatpush1.msra.mxu0 %v1373
  %1436 = vmatprep.subr.mxu0 %v1370
  %1437 = vmatpush1.msra.mxu0 %v1369
  %1438 = vmatprep.subr.mxu0 %v1366
  %1439 = vmatpush1.msra.mxu0 %v1365
  %1440 = vmatprep.subr.mxu0 %v1362
  %1441 = vmatpush1.msra.mxu0 %v1361
  %1442 = vmatprep.subr.mxu0 0.0
  %1443 = vmatpush2.msra.mxu0 0.0
  %1444 = vmatprep.subr.mxu0 0.0
  %1445 = vmatpush2.msra.mxu0 0.0
  %1446 = vmatprep.subr.mxu0 0.0
  %1447 = vmatpush2.msra.mxu0 0.0
  %1448 = vmatprep.subr.mxu0 0.0
  %1449 = vmatpush2.msra.mxu0 0.0
  %1450 = vmatprep.subr.mxu0 0.0
  %1451 = vmatpush2.msra.mxu0 0.0
  %1452 = vmatprep.subr.mxu0 0.0
  %1453 = vmatpush2.msra.mxu0 0.0
  %1454 = vmatprep.subr.mxu0 0.0
  %1455 = vmatpush2.msra.mxu0 0.0
  %1456 = vmatprep.subr.mxu0 0.0
  %1457 = vmatpush2.msra.mxu0 0.0
  %1458 = vmatprep.subr.mxu0 0.0
  %1459 = vmatpush2.msra.mxu0 0.0
  %1460 = vmatprep.subr.mxu0 0.0
  %1461 = vmatpush2.msra.mxu0 0.0
  %1462 = vmatprep.subr.mxu0 0.0
  %1463 = vmatpush2.msra.mxu0 0.0
  %1464 = vmatprep.subr.mxu0 0.0
  %1465 = vmatpush2.msra.mxu0 0.0
  %1466 = vmatprep.subr.mxu0 0.0
  %1467 = vmatpush2.msra.mxu0 0.0
  %1468 = vmatprep.subr.mxu0 0.0
  %1469 = vmatpush2.msra.mxu0 0.0
  %1470 = vmatprep.subr.mxu0 0.0
  %1471 = vmatpush2.msra.mxu0 0.0
  %1472 = vmatprep.subr.mxu0 0.0
  %1473 = vmatpush2.msra.mxu0 0.0
  %1474 = vmatprep.mubr.f32.mxu0 0.0
  %1475 = vmatmul.mubr.f32.gmra.mxu0 %v1399
  %v1476 = vpop.f32.mrf.mxu0
  %v1477 = vadd.f32 %v1384, %v1476
  %v1478 = vpop.f32.mrf.mxu0
  %v1479 = vadd.f32 %v1384, %v1478
  %1480 = vmatprep.mubr.f32.mxu0 0.0
  %1481 = vmatmul.mubr.f32.gmra.mxu0 %v1402
  %v1482 = vpop.f32.mrf.mxu0
  %v1483 = vadd.f32 %v1388, %v1482
  %v1484 = vpop.f32.mrf.mxu0
  %v1485 = vadd.f32 %v1388, %v1484
  %1486 = vmatprep.mubr.f32.mxu0 0.0
  %1487 = vmatmul.mubr.f32.gmra.mxu0 %v1405
  %v1488 = vpop.f32.mrf.mxu0
  %v1489 = vadd.f32 %v1392, %v1488
  %v1490 = vpop.f32.mrf.mxu0
  %v1491 = vadd.f32 %v1392, %v1490
  %1492 = vmatprep.mubr.f32.mxu0 0.0
  %1493 = vmatmul.mubr.f32.gmra.mxu0 %v1408
  %v1494 = vpop.f32.mrf.mxu0
  %v1495 = vadd.f32 %v1396, %v1494
  %v1496 = vpop.f32.mrf.mxu0
  %v1497 = vadd.f32 %v1396, %v1496
  %1498 = vdwg.mxu0
  %1499 = vmatprep.subr.mxu0 0.0
  %1500 = vmatpush1.msra.mxu0 0.0
  %1501 = vmatprep.subr.mxu0 0.0
  %1502 = vmatpush1.msra.mxu0 0.0
  %1503 = vmatprep.subr.mxu0 0.0
  %1504 = vmatpush1.msra.mxu0 0.0
  %1505 = vmatprep.subr.mxu0 0.0
  %1506 = vmatpush1.msra.mxu0 0.0
  %1507 = vmatprep.subr.mxu0 0.0
  %1508 = vmatpush1.msra.mxu0 0.0
  %1509 = vmatprep.subr.mxu0 0.0
  %1510 = vmatpush1.msra.mxu0 0.0
  %1511 = vmatprep.subr.mxu0 0.0
  %1512 = vmatpush1.msra.mxu0 0.0
  %1513 = vmatprep.subr.mxu0 0.0
  %1514 = vmatpush1.msra.mxu0 0.0
  %1515 = vmatprep.subr.mxu0 0.0
  %1516 = vmatpush1.msra.mxu0 0.0
  %1517 = vmatprep.subr.mxu0 0.0
  %1518 = vmatpush1.msra.mxu0 0.0
  %1519 = vmatprep.subr.mxu0 0.0
  %1520 = vmatpush1.msra.mxu0 0.0
  %1521 = vmatprep.subr.mxu0 0.0
  %1522 = vmatpush1.msra.mxu0 0.0
  %1523 = vmatprep.subr.mxu0 %v1376
  %1524 = vmatpush1.msra.mxu0 %v1375
  %1525 = vmatprep.subr.mxu0 %v1372
  %1526 = vmatpush1.msra.mxu0 %v1371
  %1527 = vmatprep.subr.mxu0 %v1368
  %1528 = vmatpush1.msra.mxu0 %v1367
  %1529 = vmatprep.subr.mxu0 %v1364
  %1530 = vmatpush1.msra.mxu0 %v1363
  %1531 = vmatprep.subr.mxu0 0.0
  %1532 = vmatpush2.msra.mxu0 0.0
  %1533 = vmatprep.subr.mxu0 0.0
  %1534 = vmatpush2.msra.mxu0 0.0
  %1535 = vmatprep.subr.mxu0 0.0
  %1536 = vmatpush2.msra.mxu0 0.0
  %1537 = vmatprep.subr.mxu0 0.0
  %1538 = vmatpush2.msra.mxu0 0.0
  %1539 = vmatprep.subr.mxu0 0.0
  %1540 = vmatpush2.msra.mxu0 0.0
  %1541 = vmatprep.subr.mxu0 0.0
  %1542 = vmatpush2.msra.mxu0 0.0
  %1543 = vmatprep.subr.mxu0 0.0
  %1544 = vmatpush2.msra.mxu0 0.0
  %1545 = vmatprep.subr.mxu0 0.0
  %1546 = vmatpush2.msra.mxu0 0.0
  %1547 = vmatprep.subr.mxu0 0.0
  %1548 = vmatpush2.msra.mxu0 0.0
  %1549 = vmatprep.subr.mxu0 0.0
  %1550 = vmatpush2.msra.mxu0 0.0
  %1551 = vmatprep.subr.mxu0 0.0
  %1552 = vmatpush2.msra.mxu0 0.0
  %1553 = vmatprep.subr.mxu0 0.0
  %1554 = vmatpush2.msra.mxu0 0.0
  %1555 = vmatprep.subr.mxu0 0.0
  %1556 = vmatpush2.msra.mxu0 0.0
  %1557 = vmatprep.subr.mxu0 0.0
  %1558 = vmatpush2.msra.mxu0 0.0
  %1559 = vmatprep.subr.mxu0 0.0
  %1560 = vmatpush2.msra.mxu0 0.0
  %1561 = vmatprep.subr.mxu0 0.0
  %1562 = vmatpush2.msra.mxu0 0.0
  %1563 = vmatprep.mubr.f32.mxu0 0.0
  %1564 = vmatmul.mubr.f32.gmra.mxu0 %v1399
  %v1565 = vpop.f32.mrf.mxu0
  %v1566 = vadd.f32 %v1384, %v1565
  %v1567 = vpop.f32.mrf.mxu0
  %v1568 = vadd.f32 %v1384, %v1567
  %1569 = vmatprep.mubr.f32.mxu0 0.0
  %1570 = vmatmul.mubr.f32.gmra.mxu0 %v1402
  %v1571 = vpop.f32.mrf.mxu0
  %v1572 = vadd.f32 %v1388, %v1571
  %v1573 = vpop.f32.mrf.mxu0
  %v1574 = vadd.f32 %v1388, %v1573
  %1575 = vmatprep.mubr.f32.mxu0 0.0
  %1576 = vmatmul.mubr.f32.gmra.mxu0 %v1405
  %v1577 = vpop.f32.mrf.mxu0
  %v1578 = vadd.f32 %v1392, %v1577
  %v1579 = vpop.f32.mrf.mxu0
  %v1580 = vadd.f32 %v1392, %v1579
  %1581 = vmatprep.mubr.f32.mxu0 0.0
  %1582 = vmatmul.mubr.f32.gmra.mxu0 %v1408
  %v1583 = vpop.f32.mrf.mxu0
  %v1584 = vadd.f32 %v1396, %v1583
  %v1585 = vpop.f32.mrf.mxu0
  %v1586 = vadd.f32 %v1396, %v1585
  %1587 = vdwg.mxu0
  %v1588 = vmax.f32 %v1477, 0.0
  %v1589 = vmax.f32 %v1479, 0.0
  %v1590 = vmax.f32 %v1566, 0.0
  %v1591 = vmax.f32 %v1568, 0.0
  %v1592 = vmax.f32 %v1483, 0.0
  %v1593 = vmax.f32 %v1485, 0.0
  %v1594 = vmax.f32 %v1572, 0.0
  %v1595 = vmax.f32 %v1574, 0.0
  %v1596 = vmax.f32 %v1489, 0.0
  %v1597 = vmax.f32 %v1491, 0.0
  %v1598 = vmax.f32 %v1578, 0.0
  %v1599 = vmax.f32 %v1580, 0.0
  %v1600 = vmax.f32 %v1495, 0.0
  %v1601 = vmax.f32 %v1497, 0.0
  %v1602 = vmax.f32 %v1584, 0.0
  %v1603 = vmax.f32 %v1586, 0.0
  %v1604 = vand.u32 2147483647, %v1477
  %v1605 = vand.u32 2147483647, %v1479
  %v1606 = vand.u32 2147483647, %v1566
  %v1607 = vand.u32 2147483647, %v1568
  %v1608 = vand.u32 2147483647, %v1483
  %v1609 = vand.u32 2147483647, %v1485
  %v1610 = vand.u32 2147483647, %v1572
  %v1611 = vand.u32 2147483647, %v1574
  %v1612 = vand.u32 2147483647, %v1489
  %v1613 = vand.u32 2147483647, %v1491
  %v1614 = vand.u32 2147483647, %v1578
  %v1615 = vand.u32 2147483647, %v1580
  %v1616 = vand.u32 2147483647, %v1495
  %v1617 = vand.u32 2147483647, %v1497
  %v1618 = vand.u32 2147483647, %v1584
  %v1619 = vand.u32 2147483647, %v1586
  %v1620 = vsub.f32 0.0, %v1604
  %v1621 = vsub.f32 0.0, %v1605
  %v1622 = vsub.f32 0.0, %v1606
  %v1623 = vsub.f32 0.0, %v1607
  %v1624 = vsub.f32 0.0, %v1608
  %v1625 = vsub.f32 0.0, %v1609
  %v1626 = vsub.f32 0.0, %v1610
  %v1627 = vsub.f32 0.0, %v1611
  %v1628 = vsub.f32 0.0, %v1612
  %v1629 = vsub.f32 0.0, %v1613
  %v1630 = vsub.f32 0.0, %v1614
  %v1631 = vsub.f32 0.0, %v1615
  %v1632 = vsub.f32 0.0, %v1616
  %v1633 = vsub.f32 0.0, %v1617
  %v1634 = vsub.f32 0.0, %v1618
  %v1635 = vsub.f32 0.0, %v1619
  %v1636 = vmul.f32 %v1620, 1.442695
  %v1637 = vpow.pop %v1636
  %v1638 = vmul.f32 %v1621, 1.442695
  %v1639 = vpow.pop %v1638
  %v1640 = vmul.f32 %v1622, 1.442695
  %v1641 = vpow.pop %v1640
  %v1642 = vmul.f32 %v1623, 1.442695
  %v1643 = vpow.pop %v1642
  %v1644 = vmul.f32 %v1624, 1.442695
  %v1645 = vpow.pop %v1644
  %v1646 = vmul.f32 %v1625, 1.442695
  %v1647 = vpow.pop %v1646
  %v1648 = vmul.f32 %v1626, 1.442695
  %v1649 = vpow.pop %v1648
  %v1650 = vmul.f32 %v1627, 1.442695
  %v1651 = vpow.pop %v1650
  %v1652 = vmul.f32 %v1628, 1.442695
  %v1653 = vpow.pop %v1652
  %v1654 = vmul.f32 %v1629, 1.442695
  %v1655 = vpow.pop %v1654
  %v1656 = vmul.f32 %v1630, 1.442695
  %v1657 = vpow.pop %v1656
  %v1658 = vmul.f32 %v1631, 1.442695
  %v1659 = vpow.pop %v1658
  %v1660 = vmul.f32 %v1632, 1.442695
  %v1661 = vpow.pop %v1660
  %v1662 = vmul.f32 %v1633, 1.442695
  %v1663 = vpow.pop %v1662
  %v1664 = vmul.f32 %v1634, 1.442695
  %v1665 = vpow.pop %v1664
  %v1666 = vmul.f32 %v1635, 1.442695
  %v1667 = vpow.pop %v1666
  %v1668 = vadd.f32 %v1637, 1.0
  %v1669 = vlog2.pop %v1668
  %v1670 = vmul.f32 %v1669, 0.6931472
  %v1671 = vmul.f32 -0.5, %v1637
  %v1672 = vadd.f32 %v1671, 1.0
  %v1673 = vmul.f32 %v1672, %v1637
  %v1674 = vand.u32 2147483647, %v1637
  %vm1675 = vcmp.lt.f32.partialorder %v1674, 0.0004427343
  %v1676 = vsel %vm1675, %v1673, %v1670
  %v1677 = vadd.f32 %v1639, 1.0
  %v1678 = vlog2.pop %v1677
  %v1679 = vmul.f32 %v1678, 0.6931472
  %v1680 = vmul.f32 -0.5, %v1639
  %v1681 = vadd.f32 %v1680, 1.0
  %v1682 = vmul.f32 %v1681, %v1639
  %v1683 = vand.u32 2147483647, %v1639
  %vm1684 = vcmp.lt.f32.partialorder %v1683, 0.0004427343
  %v1685 = vsel %vm1684, %v1682, %v1679
  %v1686 = vadd.f32 %v1641, 1.0
  %v1687 = vlog2.pop %v1686
  %v1688 = vmul.f32 %v1687, 0.6931472
  %v1689 = vmul.f32 -0.5, %v1641
  %v1690 = vadd.f32 %v1689, 1.0
  %v1691 = vmul.f32 %v1690, %v1641
  %v1692 = vand.u32 2147483647, %v1641
  %vm1693 = vcmp.lt.f32.partialorder %v1692, 0.0004427343
  %v1694 = vsel %vm1693, %v1691, %v1688
  %v1695 = vadd.f32 %v1643, 1.0
  %v1696 = vlog2.pop %v1695
  %v1697 = vmul.f32 %v1696, 0.6931472
  %v1698 = vmul.f32 -0.5, %v1643
  %v1699 = vadd.f32 %v1698, 1.0
  %v1700 = vmul.f32 %v1699, %v1643
  %v1701 = vand.u32 2147483647, %v1643
  %vm1702 = vcmp.lt.f32.partialorder %v1701, 0.0004427343
  %v1703 = vsel %vm1702, %v1700, %v1697
  %v1704 = vadd.f32 %v1645, 1.0
  %v1705 = vlog2.pop %v1704
  %v1706 = vmul.f32 %v1705, 0.6931472
  %v1707 = vmul.f32 -0.5, %v1645
  %v1708 = vadd.f32 %v1707, 1.0
  %v1709 = vmul.f32 %v1708, %v1645
  %v1710 = vand.u32 2147483647, %v1645
  %vm1711 = vcmp.lt.f32.partialorder %v1710, 0.0004427343
  %v1712 = vsel %vm1711, %v1709, %v1706
  %v1713 = vadd.f32 %v1647, 1.0
  %v1714 = vlog2.pop %v1713
  %v1715 = vmul.f32 %v1714, 0.6931472
  %v1716 = vmul.f32 -0.5, %v1647
  %v1717 = vadd.f32 %v1716, 1.0
  %v1718 = vmul.f32 %v1717, %v1647
  %v1719 = vand.u32 2147483647, %v1647
  %vm1720 = vcmp.lt.f32.partialorder %v1719, 0.0004427343
  %v1721 = vsel %vm1720, %v1718, %v1715
  %v1722 = vadd.f32 %v1649, 1.0
  %v1723 = vlog2.pop %v1722
  %v1724 = vmul.f32 %v1723, 0.6931472
  %v1725 = vmul.f32 -0.5, %v1649
  %v1726 = vadd.f32 %v1725, 1.0
  %v1727 = vmul.f32 %v1726, %v1649
  %v1728 = vand.u32 2147483647, %v1649
  %vm1729 = vcmp.lt.f32.partialorder %v1728, 0.0004427343
  %v1730 = vsel %vm1729, %v1727, %v1724
  %v1731 = vadd.f32 %v1651, 1.0
  %v1732 = vlog2.pop %v1731
  %v1733 = vmul.f32 %v1732, 0.6931472
  %v1734 = vmul.f32 -0.5, %v1651
  %v1735 = vadd.f32 %v1734, 1.0
  %v1736 = vmul.f32 %v1735, %v1651
  %v1737 = vand.u32 2147483647, %v1651
  %vm1738 = vcmp.lt.f32.partialorder %v1737, 0.0004427343
  %v1739 = vsel %vm1738, %v1736, %v1733
  %v1740 = vadd.f32 %v1653, 1.0
  %v1741 = vlog2.pop %v1740
  %v1742 = vmul.f32 %v1741, 0.6931472
  %v1743 = vmul.f32 -0.5, %v1653
  %v1744 = vadd.f32 %v1743, 1.0
  %v1745 = vmul.f32 %v1744, %v1653
  %v1746 = vand.u32 2147483647, %v1653
  %vm1747 = vcmp.lt.f32.partialorder %v1746, 0.0004427343
  %v1748 = vsel %vm1747, %v1745, %v1742
  %v1749 = vadd.f32 %v1655, 1.0
  %v1750 = vlog2.pop %v1749
  %v1751 = vmul.f32 %v1750, 0.6931472
  %v1752 = vmul.f32 -0.5, %v1655
  %v1753 = vadd.f32 %v1752, 1.0
  %v1754 = vmul.f32 %v1753, %v1655
  %v1755 = vand.u32 2147483647, %v1655
  %vm1756 = vcmp.lt.f32.partialorder %v1755, 0.0004427343
  %v1757 = vsel %vm1756, %v1754, %v1751
  %v1758 = vadd.f32 %v1657, 1.0
  %v1759 = vlog2.pop %v1758
  %v1760 = vmul.f32 %v1759, 0.6931472
  %v1761 = vmul.f32 -0.5, %v1657
  %v1762 = vadd.f32 %v1761, 1.0
  %v1763 = vmul.f32 %v1762, %v1657
  %v1764 = vand.u32 2147483647, %v1657
  %vm1765 = vcmp.lt.f32.partialorder %v1764, 0.0004427343
  %v1766 = vsel %vm1765, %v1763, %v1760
  %v1767 = vadd.f32 %v1659, 1.0
  %v1768 = vlog2.pop %v1767
  %v1769 = vmul.f32 %v1768, 0.6931472
  %v1770 = vmul.f32 -0.5, %v1659
  %v1771 = vadd.f32 %v1770, 1.0
  %v1772 = vmul.f32 %v1771, %v1659
  %v1773 = vand.u32 2147483647, %v1659
  %vm1774 = vcmp.lt.f32.partialorder %v1773, 0.0004427343
  %v1775 = vsel %vm1774, %v1772, %v1769
  %v1776 = vadd.f32 %v1661, 1.0
  %v1777 = vlog2.pop %v1776
  %v1778 = vmul.f32 %v1777, 0.6931472
  %v1779 = vmul.f32 -0.5, %v1661
  %v1780 = vadd.f32 %v1779, 1.0
  %v1781 = vmul.f32 %v1780, %v1661
  %v1782 = vand.u32 2147483647, %v1661
  %vm1783 = vcmp.lt.f32.partialorder %v1782, 0.0004427343
  %v1784 = vsel %vm1783, %v1781, %v1778
  %v1785 = vadd.f32 %v1663, 1.0
  %v1786 = vlog2.pop %v1785
  %v1787 = vmul.f32 %v1786, 0.6931472
  %v1788 = vmul.f32 -0.5, %v1663
  %v1789 = vadd.f32 %v1788, 1.0
  %v1790 = vmul.f32 %v1789, %v1663
  %v1791 = vand.u32 2147483647, %v1663
  %vm1792 = vcmp.lt.f32.partialorder %v1791, 0.0004427343
  %v1793 = vsel %vm1792, %v1790, %v1787
  %v1794 = vadd.f32 %v1665, 1.0
  %v1795 = vlog2.pop %v1794
  %v1796 = vmul.f32 %v1795, 0.6931472
  %v1797 = vmul.f32 -0.5, %v1665
  %v1798 = vadd.f32 %v1797, 1.0
  %v1799 = vmul.f32 %v1798, %v1665
  %v1800 = vand.u32 2147483647, %v1665
  %vm1801 = vcmp.lt.f32.partialorder %v1800, 0.0004427343
  %v1802 = vsel %vm1801, %v1799, %v1796
  %v1803 = vadd.f32 %v1667, 1.0
  %v1804 = vlog2.pop %v1803
  %v1805 = vmul.f32 %v1804, 0.6931472
  %v1806 = vmul.f32 -0.5, %v1667
  %v1807 = vadd.f32 %v1806, 1.0
  %v1808 = vmul.f32 %v1807, %v1667
  %v1809 = vand.u32 2147483647, %v1667
  %vm1810 = vcmp.lt.f32.partialorder %v1809, 0.0004427343
  %v1811 = vsel %vm1810, %v1808, %v1805
  %v1812 = vadd.f32 %v1588, %v1676
  %v1813 = vadd.f32 %v1589, %v1685
  %v1814 = vadd.f32 %v1590, %v1694
  %v1815 = vadd.f32 %v1591, %v1703
  %v1816 = vadd.f32 %v1592, %v1712
  %v1817 = vadd.f32 %v1593, %v1721
  %v1818 = vadd.f32 %v1594, %v1730
  %v1819 = vadd.f32 %v1595, %v1739
  %v1820 = vadd.f32 %v1596, %v1748
  %v1821 = vadd.f32 %v1597, %v1757
  %v1822 = vadd.f32 %v1598, %v1766
  %v1823 = vadd.f32 %v1599, %v1775
  %v1824 = vadd.f32 %v1600, %v1784
  %v1825 = vadd.f32 %v1601, %v1793
  %v1826 = vadd.f32 %v1602, %v1802
  %v1827 = vadd.f32 %v1603, %v1811
  %s1828 = scalar_lea.vmem %s1, 96
  %v1829 = vld [vmem:[%s1828] sm:$0xff]
  %v1830 = vld [vmem:[%s1828 + $0x8] sm:$0xff]
  %v1831 = vld [vmem:[%s1828 + $0x10] sm:$0xff]
  %v1832 = vld [vmem:[%s1828 + $0x18] sm:$0xff]
  %1833 = vset.pattern.permute.xlu0 3
  %1834 = vperm.xlu0 %1833, %v19
  %v1835 = vpop.permute.xlu0 %1834
  %1837 = vset.pattern.permute.xlu0 3
  %1838 = vperm.xlu0 %1837, %v20
  %v1839 = vpop.permute.xlu0 %1838
  %1841 = vset.pattern.permute.xlu0 3
  %1842 = vperm.xlu0 %1841, %v21
  %v1843 = vpop.permute.xlu0 %1842
  %1845 = vset.pattern.permute.xlu0 3
  %1846 = vperm.xlu0 %1845, %v22
  %v1847 = vpop.permute.xlu0 %1846
  %v1850 = vsel %vm479, %v1829, 0
  %v1853 = vsel %vm479, %v1830, 0
  %v1856 = vsel %vm479, %v1831, 0
  %v1859 = vsel %vm479, %v1832, 0
  %1861 = vmatprep.subr.mxu0 0.0
  %1862 = vmatpush1.msra.mxu0 0.0
  %1863 = vmatprep.subr.mxu0 0.0
  %1864 = vmatpush1.msra.mxu0 0.0
  %1865 = vmatprep.subr.mxu0 0.0
  %1866 = vmatpush1.msra.mxu0 0.0
  %1867 = vmatprep.subr.mxu0 0.0
  %1868 = vmatpush1.msra.mxu0 0.0
  %1869 = vmatprep.subr.mxu0 0.0
  %1870 = vmatpush1.msra.mxu0 0.0
  %1871 = vmatprep.subr.mxu0 0.0
  %1872 = vmatpush1.msra.mxu0 0.0
  %1873 = vmatprep.subr.mxu0 0.0
  %1874 = vmatpush1.msra.mxu0 0.0
  %1875 = vmatprep.subr.mxu0 0.0
  %1876 = vmatpush1.msra.mxu0 0.0
  %1877 = vmatprep.subr.mxu0 0.0
  %1878 = vmatpush1.msra.mxu0 0.0
  %1879 = vmatprep.subr.mxu0 0.0
  %1880 = vmatpush1.msra.mxu0 0.0
  %1881 = vmatprep.subr.mxu0 0.0
  %1882 = vmatpush1.msra.mxu0 0.0
  %1883 = vmatprep.subr.mxu0 0.0
  %1884 = vmatpush1.msra.mxu0 0.0
  %1885 = vmatprep.subr.mxu0 %v1825
  %1886 = vmatpush1.msra.mxu0 %v1824
  %1887 = vmatprep.subr.mxu0 %v1821
  %1888 = vmatpush1.msra.mxu0 %v1820
  %1889 = vmatprep.subr.mxu0 %v1817
  %1890 = vmatpush1.msra.mxu0 %v1816
  %1891 = vmatprep.subr.mxu0 %v1813
  %1892 = vmatpush1.msra.mxu0 %v1812
  %1893 = vmatprep.subr.mxu0 0.0
  %1894 = vmatpush2.msra.mxu0 0.0
  %1895 = vmatprep.subr.mxu0 0.0
  %1896 = vmatpush2.msra.mxu0 0.0
  %1897 = vmatprep.subr.mxu0 0.0
  %1898 = vmatpush2.msra.mxu0 0.0
  %1899 = vmatprep.subr.mxu0 0.0
  %1900 = vmatpush2.msra.mxu0 0.0
  %1901 = vmatprep.subr.mxu0 0.0
  %1902 = vmatpush2.msra.mxu0 0.0
  %1903 = vmatprep.subr.mxu0 0.0
  %1904 = vmatpush2.msra.mxu0 0.0
  %1905 = vmatprep.subr.mxu0 0.0
  %1906 = vmatpush2.msra.mxu0 0.0
  %1907 = vmatprep.subr.mxu0 0.0
  %1908 = vmatpush2.msra.mxu0 0.0
  %1909 = vmatprep.subr.mxu0 0.0
  %1910 = vmatpush2.msra.mxu0 0.0
  %1911 = vmatprep.subr.mxu0 0.0
  %1912 = vmatpush2.msra.mxu0 0.0
  %1913 = vmatprep.subr.mxu0 0.0
  %1914 = vmatpush2.msra.mxu0 0.0
  %1915 = vmatprep.subr.mxu0 0.0
  %1916 = vmatpush2.msra.mxu0 0.0
  %1917 = vmatprep.subr.mxu0 0.0
  %1918 = vmatpush2.msra.mxu0 0.0
  %1919 = vmatprep.subr.mxu0 0.0
  %1920 = vmatpush2.msra.mxu0 0.0
  %1921 = vmatprep.subr.mxu0 0.0
  %1922 = vmatpush2.msra.mxu0 0.0
  %1923 = vmatprep.subr.mxu0 0.0
  %1924 = vmatpush2.msra.mxu0 0.0
  %1925 = vmatprep.mubr.f32.mxu0 0.0
  %1926 = vmatmul.mubr.f32.gmra.mxu0 %v1850
  %v1927 = vpop.f32.mrf.mxu0
  %v1928 = vadd.f32 %v1835, %v1927
  %v1929 = vpop.f32.mrf.mxu0
  %v1930 = vadd.f32 %v1835, %v1929
  %1931 = vmatprep.mubr.f32.mxu0 0.0
  %1932 = vmatmul.mubr.f32.gmra.mxu0 %v1853
  %v1933 = vpop.f32.mrf.mxu0
  %v1934 = vadd.f32 %v1839, %v1933
  %v1935 = vpop.f32.mrf.mxu0
  %v1936 = vadd.f32 %v1839, %v1935
  %1937 = vmatprep.mubr.f32.mxu0 0.0
  %1938 = vmatmul.mubr.f32.gmra.mxu0 %v1856
  %v1939 = vpop.f32.mrf.mxu0
  %v1940 = vadd.f32 %v1843, %v1939
  %v1941 = vpop.f32.mrf.mxu0
  %v1942 = vadd.f32 %v1843, %v1941
  %1943 = vmatprep.mubr.f32.mxu0 0.0
  %1944 = vmatmul.mubr.f32.gmra.mxu0 %v1859
  %v1945 = vpop.f32.mrf.mxu0
  %v1946 = vadd.f32 %v1847, %v1945
  %v1947 = vpop.f32.mrf.mxu0
  %v1948 = vadd.f32 %v1847, %v1947
  %1949 = vdwg.mxu0
  %1950 = vmatprep.subr.mxu0 0.0
  %1951 = vmatpush1.msra.mxu0 0.0
  %1952 = vmatprep.subr.mxu0 0.0
  %1953 = vmatpush1.msra.mxu0 0.0
  %1954 = vmatprep.subr.mxu0 0.0
  %1955 = vmatpush1.msra.mxu0 0.0
  %1956 = vmatprep.subr.mxu0 0.0
  %1957 = vmatpush1.msra.mxu0 0.0
  %1958 = vmatprep.subr.mxu0 0.0
  %1959 = vmatpush1.msra.mxu0 0.0
  %1960 = vmatprep.subr.mxu0 0.0
  %1961 = vmatpush1.msra.mxu0 0.0
  %1962 = vmatprep.subr.mxu0 0.0
  %1963 = vmatpush1.msra.mxu0 0.0
  %1964 = vmatprep.subr.mxu0 0.0
  %1965 = vmatpush1.msra.mxu0 0.0
  %1966 = vmatprep.subr.mxu0 0.0
  %1967 = vmatpush1.msra.mxu0 0.0
  %1968 = vmatprep.subr.mxu0 0.0
  %1969 = vmatpush1.msra.mxu0 0.0
  %1970 = vmatprep.subr.mxu0 0.0
  %1971 = vmatpush1.msra.mxu0 0.0
  %1972 = vmatprep.subr.mxu0 0.0
  %1973 = vmatpush1.msra.mxu0 0.0
  %1974 = vmatprep.subr.mxu0 %v1827
  %1975 = vmatpush1.msra.mxu0 %v1826
  %1976 = vmatprep.subr.mxu0 %v1823
  %1977 = vmatpush1.msra.mxu0 %v1822
  %1978 = vmatprep.subr.mxu0 %v1819
  %1979 = vmatpush1.msra.mxu0 %v1818
  %1980 = vmatprep.subr.mxu0 %v1815
  %1981 = vmatpush1.msra.mxu0 %v1814
  %1982 = vmatprep.subr.mxu0 0.0
  %1983 = vmatpush2.msra.mxu0 0.0
  %1984 = vmatprep.subr.mxu0 0.0
  %1985 = vmatpush2.msra.mxu0 0.0
  %1986 = vmatprep.subr.mxu0 0.0
  %1987 = vmatpush2.msra.mxu0 0.0
  %1988 = vmatprep.subr.mxu0 0.0
  %1989 = vmatpush2.msra.mxu0 0.0
  %1990 = vmatprep.subr.mxu0 0.0
  %1991 = vmatpush2.msra.mxu0 0.0
  %1992 = vmatprep.subr.mxu0 0.0
  %1993 = vmatpush2.msra.mxu0 0.0
  %1994 = vmatprep.subr.mxu0 0.0
  %1995 = vmatpush2.msra.mxu0 0.0
  %1996 = vmatprep.subr.mxu0 0.0
  %1997 = vmatpush2.msra.mxu0 0.0
  %1998 = vmatprep.subr.mxu0 0.0
  %1999 = vmatpush2.msra.mxu0 0.0
  %2000 = vmatprep.subr.mxu0 0.0
  %2001 = vmatpush2.msra.mxu0 0.0
  %2002 = vmatprep.subr.mxu0 0.0
  %2003 = vmatpush2.msra.mxu0 0.0
  %2004 = vmatprep.subr.mxu0 0.0
  %2005 = vmatpush2.msra.mxu0 0.0
  %2006 = vmatprep.subr.mxu0 0.0
  %2007 = vmatpush2.msra.mxu0 0.0
  %2008 = vmatprep.subr.mxu0 0.0
  %2009 = vmatpush2.msra.mxu0 0.0
  %2010 = vmatprep.subr.mxu0 0.0
  %2011 = vmatpush2.msra.mxu0 0.0
  %2012 = vmatprep.subr.mxu0 0.0
  %2013 = vmatpush2.msra.mxu0 0.0
  %2014 = vmatprep.mubr.f32.mxu0 0.0
  %2015 = vmatmul.mubr.f32.gmra.mxu0 %v1850
  %v2016 = vpop.f32.mrf.mxu0
  %v2017 = vadd.f32 %v1835, %v2016
  %v2018 = vpop.f32.mrf.mxu0
  %v2019 = vadd.f32 %v1835, %v2018
  %2020 = vmatprep.mubr.f32.mxu0 0.0
  %2021 = vmatmul.mubr.f32.gmra.mxu0 %v1853
  %v2022 = vpop.f32.mrf.mxu0
  %v2023 = vadd.f32 %v1839, %v2022
  %v2024 = vpop.f32.mrf.mxu0
  %v2025 = vadd.f32 %v1839, %v2024
  %2026 = vmatprep.mubr.f32.mxu0 0.0
  %2027 = vmatmul.mubr.f32.gmra.mxu0 %v1856
  %v2028 = vpop.f32.mrf.mxu0
  %v2029 = vadd.f32 %v1843, %v2028
  %v2030 = vpop.f32.mrf.mxu0
  %v2031 = vadd.f32 %v1843, %v2030
  %2032 = vmatprep.mubr.f32.mxu0 0.0
  %2033 = vmatmul.mubr.f32.gmra.mxu0 %v1859
  %v2034 = vpop.f32.mrf.mxu0
  %v2035 = vadd.f32 %v1847, %v2034
  %v2036 = vpop.f32.mrf.mxu0
  %v2037 = vadd.f32 %v1847, %v2036
  %2038 = vdwg.mxu0
  %v2039 = vadd.f32 %v1121, %v1928
  %v2040 = vadd.f32 %v1122, %v1930
  %v2041 = vadd.f32 %v1123, %v2017
  %v2042 = vadd.f32 %v1124, %v2019
  %v2043 = vadd.f32 %v1125, %v1934
  %v2044 = vadd.f32 %v1126, %v1936
  %v2045 = vadd.f32 %v1127, %v2023
  %v2046 = vadd.f32 %v1128, %v2025
  %v2047 = vadd.f32 %v1129, %v1940
  %v2048 = vadd.f32 %v1130, %v1942
  %v2049 = vadd.f32 %v1131, %v2029
  %v2050 = vadd.f32 %v1132, %v2031
  %v2051 = vadd.f32 %v1133, %v1946
  %v2052 = vadd.f32 %v1134, %v1948
  %v2053 = vadd.f32 %v1135, %v2035
  %v2054 = vadd.f32 %v1136, %v2037
  %v2055 = vmax.f32 %v2039, 0.0
  %v2056 = vmax.f32 %v2040, 0.0
  %v2057 = vmax.f32 %v2041, 0.0
  %v2058 = vmax.f32 %v2042, 0.0
  %v2059 = vmax.f32 %v2043, 0.0
  %v2060 = vmax.f32 %v2044, 0.0
  %v2061 = vmax.f32 %v2045, 0.0
  %v2062 = vmax.f32 %v2046, 0.0
  %v2063 = vmax.f32 %v2047, 0.0
  %v2064 = vmax.f32 %v2048, 0.0
  %v2065 = vmax.f32 %v2049, 0.0
  %v2066 = vmax.f32 %v2050, 0.0
  %v2067 = vmax.f32 %v2051, 0.0
  %v2068 = vmax.f32 %v2052, 0.0
  %v2069 = vmax.f32 %v2053, 0.0
  %v2070 = vmax.f32 %v2054, 0.0
  %v2071 = vand.u32 2147483647, %v2039
  %v2072 = vand.u32 2147483647, %v2040
  %v2073 = vand.u32 2147483647, %v2041
  %v2074 = vand.u32 2147483647, %v2042
  %v2075 = vand.u32 2147483647, %v2043
  %v2076 = vand.u32 2147483647, %v2044
  %v2077 = vand.u32 2147483647, %v2045
  %v2078 = vand.u32 2147483647, %v2046
  %v2079 = vand.u32 2147483647, %v2047
  %v2080 = vand.u32 2147483647, %v2048
  %v2081 = vand.u32 2147483647, %v2049
  %v2082 = vand.u32 2147483647, %v2050
  %v2083 = vand.u32 2147483647, %v2051
  %v2084 = vand.u32 2147483647, %v2052
  %v2085 = vand.u32 2147483647, %v2053
  %v2086 = vand.u32 2147483647, %v2054
  %v2087 = vsub.f32 0.0, %v2071
  %v2088 = vsub.f32 0.0, %v2072
  %v2089 = vsub.f32 0.0, %v2073
  %v2090 = vsub.f32 0.0, %v2074
  %v2091 = vsub.f32 0.0, %v2075
  %v2092 = vsub.f32 0.0, %v2076
  %v2093 = vsub.f32 0.0, %v2077
  %v2094 = vsub.f32 0.0, %v2078
  %v2095 = vsub.f32 0.0, %v2079
  %v2096 = vsub.f32 0.0, %v2080
  %v2097 = vsub.f32 0.0, %v2081
  %v2098 = vsub.f32 0.0, %v2082
  %v2099 = vsub.f32 0.0, %v2083
  %v2100 = vsub.f32 0.0, %v2084
  %v2101 = vsub.f32 0.0, %v2085
  %v2102 = vsub.f32 0.0, %v2086
  %v2103 = vmul.f32 %v2087, 1.442695
  %v2104 = vpow.pop %v2103
  %v2105 = vmul.f32 %v2088, 1.442695
  %v2106 = vpow.pop %v2105
  %v2107 = vmul.f32 %v2089, 1.442695
  %v2108 = vpow.pop %v2107
  %v2109 = vmul.f32 %v2090, 1.442695
  %v2110 = vpow.pop %v2109
  %v2111 = vmul.f32 %v2091, 1.442695
  %v2112 = vpow.pop %v2111
  %v2113 = vmul.f32 %v2092, 1.442695
  %v2114 = vpow.pop %v2113
  %v2115 = vmul.f32 %v2093, 1.442695
  %v2116 = vpow.pop %v2115
  %v2117 = vmul.f32 %v2094, 1.442695
  %v2118 = vpow.pop %v2117
  %v2119 = vmul.f32 %v2095, 1.442695
  %v2120 = vpow.pop %v2119
  %v2121 = vmul.f32 %v2096, 1.442695
  %v2122 = vpow.pop %v2121
  %v2123 = vmul.f32 %v2097, 1.442695
  %v2124 = vpow.pop %v2123
  %v2125 = vmul.f32 %v2098, 1.442695
  %v2126 = vpow.pop %v2125
  %v2127 = vmul.f32 %v2099, 1.442695
  %v2128 = vpow.pop %v2127
  %v2129 = vmul.f32 %v2100, 1.442695
  %v2130 = vpow.pop %v2129
  %v2131 = vmul.f32 %v2101, 1.442695
  %v2132 = vpow.pop %v2131
  %v2133 = vmul.f32 %v2102, 1.442695
  %v2134 = vpow.pop %v2133
  %v2135 = vadd.f32 %v2104, 1.0
  %v2136 = vlog2.pop %v2135
  %v2137 = vmul.f32 %v2136, 0.6931472
  %v2138 = vmul.f32 -0.5, %v2104
  %v2139 = vadd.f32 %v2138, 1.0
  %v2140 = vmul.f32 %v2139, %v2104
  %v2141 = vand.u32 2147483647, %v2104
  %vm2142 = vcmp.lt.f32.partialorder %v2141, 0.0004427343
  %v2143 = vsel %vm2142, %v2140, %v2137
  %v2144 = vadd.f32 %v2106, 1.0
  %v2145 = vlog2.pop %v2144
  %v2146 = vmul.f32 %v2145, 0.6931472
  %v2147 = vmul.f32 -0.5, %v2106
  %v2148 = vadd.f32 %v2147, 1.0
  %v2149 = vmul.f32 %v2148, %v2106
  %v2150 = vand.u32 2147483647, %v2106
  %vm2151 = vcmp.lt.f32.partialorder %v2150, 0.0004427343
  %v2152 = vsel %vm2151, %v2149, %v2146
  %v2153 = vadd.f32 %v2108, 1.0
  %v2154 = vlog2.pop %v2153
  %v2155 = vmul.f32 %v2154, 0.6931472
  %v2156 = vmul.f32 -0.5, %v2108
  %v2157 = vadd.f32 %v2156, 1.0
  %v2158 = vmul.f32 %v2157, %v2108
  %v2159 = vand.u32 2147483647, %v2108
  %vm2160 = vcmp.lt.f32.partialorder %v2159, 0.0004427343
  %v2161 = vsel %vm2160, %v2158, %v2155
  %v2162 = vadd.f32 %v2110, 1.0
  %v2163 = vlog2.pop %v2162
  %v2164 = vmul.f32 %v2163, 0.6931472
  %v2165 = vmul.f32 -0.5, %v2110
  %v2166 = vadd.f32 %v2165, 1.0
  %v2167 = vmul.f32 %v2166, %v2110
  %v2168 = vand.u32 2147483647, %v2110
  %vm2169 = vcmp.lt.f32.partialorder %v2168, 0.0004427343
  %v2170 = vsel %vm2169, %v2167, %v2164
  %v2171 = vadd.f32 %v2112, 1.0
  %v2172 = vlog2.pop %v2171
  %v2173 = vmul.f32 %v2172, 0.6931472
  %v2174 = vmul.f32 -0.5, %v2112
  %v2175 = vadd.f32 %v2174, 1.0
  %v2176 = vmul.f32 %v2175, %v2112
  %v2177 = vand.u32 2147483647, %v2112
  %vm2178 = vcmp.lt.f32.partialorder %v2177, 0.0004427343
  %v2179 = vsel %vm2178, %v2176, %v2173
  %v2180 = vadd.f32 %v2114, 1.0
  %v2181 = vlog2.pop %v2180
  %v2182 = vmul.f32 %v2181, 0.6931472
  %v2183 = vmul.f32 -0.5, %v2114
  %v2184 = vadd.f32 %v2183, 1.0
  %v2185 = vmul.f32 %v2184, %v2114
  %v2186 = vand.u32 2147483647, %v2114
  %vm2187 = vcmp.lt.f32.partialorder %v2186, 0.0004427343
  %v2188 = vsel %vm2187, %v2185, %v2182
  %v2189 = vadd.f32 %v2116, 1.0
  %v2190 = vlog2.pop %v2189
  %v2191 = vmul.f32 %v2190, 0.6931472
  %v2192 = vmul.f32 -0.5, %v2116
  %v2193 = vadd.f32 %v2192, 1.0
  %v2194 = vmul.f32 %v2193, %v2116
  %v2195 = vand.u32 2147483647, %v2116
  %vm2196 = vcmp.lt.f32.partialorder %v2195, 0.0004427343
  %v2197 = vsel %vm2196, %v2194, %v2191
  %v2198 = vadd.f32 %v2118, 1.0
  %v2199 = vlog2.pop %v2198
  %v2200 = vmul.f32 %v2199, 0.6931472
  %v2201 = vmul.f32 -0.5, %v2118
  %v2202 = vadd.f32 %v2201, 1.0
  %v2203 = vmul.f32 %v2202, %v2118
  %v2204 = vand.u32 2147483647, %v2118
  %vm2205 = vcmp.lt.f32.partialorder %v2204, 0.0004427343
  %v2206 = vsel %vm2205, %v2203, %v2200
  %v2207 = vadd.f32 %v2120, 1.0
  %v2208 = vlog2.pop %v2207
  %v2209 = vmul.f32 %v2208, 0.6931472
  %v2210 = vmul.f32 -0.5, %v2120
  %v2211 = vadd.f32 %v2210, 1.0
  %v2212 = vmul.f32 %v2211, %v2120
  %v2213 = vand.u32 2147483647, %v2120
  %vm2214 = vcmp.lt.f32.partialorder %v2213, 0.0004427343
  %v2215 = vsel %vm2214, %v2212, %v2209
  %v2216 = vadd.f32 %v2122, 1.0
  %v2217 = vlog2.pop %v2216
  %v2218 = vmul.f32 %v2217, 0.6931472
  %v2219 = vmul.f32 -0.5, %v2122
  %v2220 = vadd.f32 %v2219, 1.0
  %v2221 = vmul.f32 %v2220, %v2122
  %v2222 = vand.u32 2147483647, %v2122
  %vm2223 = vcmp.lt.f32.partialorder %v2222, 0.0004427343
  %v2224 = vsel %vm2223, %v2221, %v2218
  %v2225 = vadd.f32 %v2124, 1.0
  %v2226 = vlog2.pop %v2225
  %v2227 = vmul.f32 %v2226, 0.6931472
  %v2228 = vmul.f32 -0.5, %v2124
  %v2229 = vadd.f32 %v2228, 1.0
  %v2230 = vmul.f32 %v2229, %v2124
  %v2231 = vand.u32 2147483647, %v2124
  %vm2232 = vcmp.lt.f32.partialorder %v2231, 0.0004427343
  %v2233 = vsel %vm2232, %v2230, %v2227
  %v2234 = vadd.f32 %v2126, 1.0
  %v2235 = vlog2.pop %v2234
  %v2236 = vmul.f32 %v2235, 0.6931472
  %v2237 = vmul.f32 -0.5, %v2126
  %v2238 = vadd.f32 %v2237, 1.0
  %v2239 = vmul.f32 %v2238, %v2126
  %v2240 = vand.u32 2147483647, %v2126
  %vm2241 = vcmp.lt.f32.partialorder %v2240, 0.0004427343
  %v2242 = vsel %vm2241, %v2239, %v2236
  %v2243 = vadd.f32 %v2128, 1.0
  %v2244 = vlog2.pop %v2243
  %v2245 = vmul.f32 %v2244, 0.6931472
  %v2246 = vmul.f32 -0.5, %v2128
  %v2247 = vadd.f32 %v2246, 1.0
  %v2248 = vmul.f32 %v2247, %v2128
  %v2249 = vand.u32 2147483647, %v2128
  %vm2250 = vcmp.lt.f32.partialorder %v2249, 0.0004427343
  %v2251 = vsel %vm2250, %v2248, %v2245
  %v2252 = vadd.f32 %v2130, 1.0
  %v2253 = vlog2.pop %v2252
  %v2254 = vmul.f32 %v2253, 0.6931472
  %v2255 = vmul.f32 -0.5, %v2130
  %v2256 = vadd.f32 %v2255, 1.0
  %v2257 = vmul.f32 %v2256, %v2130
  %v2258 = vand.u32 2147483647, %v2130
  %vm2259 = vcmp.lt.f32.partialorder %v2258, 0.0004427343
  %v2260 = vsel %vm2259, %v2257, %v2254
  %v2261 = vadd.f32 %v2132, 1.0
  %v2262 = vlog2.pop %v2261
  %v2263 = vmul.f32 %v2262, 0.6931472
  %v2264 = vmul.f32 -0.5, %v2132
  %v2265 = vadd.f32 %v2264, 1.0
  %v2266 = vmul.f32 %v2265, %v2132
  %v2267 = vand.u32 2147483647, %v2132
  %vm2268 = vcmp.lt.f32.partialorder %v2267, 0.0004427343
  %v2269 = vsel %vm2268, %v2266, %v2263
  %v2270 = vadd.f32 %v2134, 1.0
  %v2271 = vlog2.pop %v2270
  %v2272 = vmul.f32 %v2271, 0.6931472
  %v2273 = vmul.f32 -0.5, %v2134
  %v2274 = vadd.f32 %v2273, 1.0
  %v2275 = vmul.f32 %v2274, %v2134
  %v2276 = vand.u32 2147483647, %v2134
  %vm2277 = vcmp.lt.f32.partialorder %v2276, 0.0004427343
  %v2278 = vsel %vm2277, %v2275, %v2272
  %v2279 = vadd.f32 %v2055, %v2143
  %v2280 = vadd.f32 %v2056, %v2152
  %v2281 = vadd.f32 %v2057, %v2161
  %v2282 = vadd.f32 %v2058, %v2170
  %v2283 = vadd.f32 %v2059, %v2179
  %v2284 = vadd.f32 %v2060, %v2188
  %v2285 = vadd.f32 %v2061, %v2197
  %v2286 = vadd.f32 %v2062, %v2206
  %v2287 = vadd.f32 %v2063, %v2215
  %v2288 = vadd.f32 %v2064, %v2224
  %v2289 = vadd.f32 %v2065, %v2233
  %v2290 = vadd.f32 %v2066, %v2242
  %v2291 = vadd.f32 %v2067, %v2251
  %v2292 = vadd.f32 %v2068, %v2260
  %v2293 = vadd.f32 %v2069, %v2269
  %v2294 = vadd.f32 %v2070, %v2278
  %s2295 = scalar_lea.vmem %s1, 128
  %v2296 = vld [vmem:[%s2295] sm:$0xff]
  %v2297 = vld [vmem:[%s2295 + $0x8] sm:$0xff]
  %2298 = vset.pattern.permute.xlu0 4
  %2299 = vperm.xlu0 %2298, %v19
  %v2300 = vpop.permute.xlu0 %2299
  %2302 = vset.pattern.permute.xlu0 4
  %2303 = vperm.xlu0 %2302, %v20
  %v2304 = vpop.permute.xlu0 %2303
  %v2307 = vsel %vm479, %v2296, 0
  %v2310 = vsel %vm479, %v2297, 0
  %2312 = vmatprep.subr.mxu0 0.0
  %2313 = vmatpush1.msra.mxu0 0.0
  %2314 = vmatprep.subr.mxu0 0.0
  %2315 = vmatpush1.msra.mxu0 0.0
  %2316 = vmatprep.subr.mxu0 0.0
  %2317 = vmatpush1.msra.mxu0 0.0
  %2318 = vmatprep.subr.mxu0 0.0
  %2319 = vmatpush1.msra.mxu0 0.0
  %2320 = vmatprep.subr.mxu0 0.0
  %2321 = vmatpush1.msra.mxu0 0.0
  %2322 = vmatprep.subr.mxu0 0.0
  %2323 = vmatpush1.msra.mxu0 0.0
  %2324 = vmatprep.subr.mxu0 0.0
  %2325 = vmatpush1.msra.mxu0 0.0
  %2326 = vmatprep.subr.mxu0 0.0
  %2327 = vmatpush1.msra.mxu0 0.0
  %2328 = vmatprep.subr.mxu0 0.0
  %2329 = vmatpush1.msra.mxu0 0.0
  %2330 = vmatprep.subr.mxu0 0.0
  %2331 = vmatpush1.msra.mxu0 0.0
  %2332 = vmatprep.subr.mxu0 0.0
  %2333 = vmatpush1.msra.mxu0 0.0
  %2334 = vmatprep.subr.mxu0 0.0
  %2335 = vmatpush1.msra.mxu0 0.0
  %2336 = vmatprep.subr.mxu0 %v2292
  %2337 = vmatpush1.msra.mxu0 %v2291
  %2338 = vmatprep.subr.mxu0 %v2288
  %2339 = vmatpush1.msra.mxu0 %v2287
  %2340 = vmatprep.subr.mxu0 %v2284
  %2341 = vmatpush1.msra.mxu0 %v2283
  %2342 = vmatprep.subr.mxu0 %v2280
  %2343 = vmatpush1.msra.mxu0 %v2279
  %2344 = vmatprep.subr.mxu0 0.0
  %2345 = vmatpush2.msra.mxu0 0.0
  %2346 = vmatprep.subr.mxu0 0.0
  %2347 = vmatpush2.msra.mxu0 0.0
  %2348 = vmatprep.subr.mxu0 0.0
  %2349 = vmatpush2.msra.mxu0 0.0
  %2350 = vmatprep.subr.mxu0 0.0
  %2351 = vmatpush2.msra.mxu0 0.0
  %2352 = vmatprep.subr.mxu0 0.0
  %2353 = vmatpush2.msra.mxu0 0.0
  %2354 = vmatprep.subr.mxu0 0.0
  %2355 = vmatpush2.msra.mxu0 0.0
  %2356 = vmatprep.subr.mxu0 0.0
  %2357 = vmatpush2.msra.mxu0 0.0
  %2358 = vmatprep.subr.mxu0 0.0
  %2359 = vmatpush2.msra.mxu0 0.0
  %2360 = vmatprep.subr.mxu0 0.0
  %2361 = vmatpush2.msra.mxu0 0.0
  %2362 = vmatprep.subr.mxu0 0.0
  %2363 = vmatpush2.msra.mxu0 0.0
  %2364 = vmatprep.subr.mxu0 0.0
  %2365 = vmatpush2.msra.mxu0 0.0
  %2366 = vmatprep.subr.mxu0 0.0
  %2367 = vmatpush2.msra.mxu0 0.0
  %2368 = vmatprep.subr.mxu0 0.0
  %2369 = vmatpush2.msra.mxu0 0.0
  %2370 = vmatprep.subr.mxu0 0.0
  %2371 = vmatpush2.msra.mxu0 0.0
  %2372 = vmatprep.subr.mxu0 0.0
  %2373 = vmatpush2.msra.mxu0 0.0
  %2374 = vmatprep.subr.mxu0 0.0
  %2375 = vmatpush2.msra.mxu0 0.0
  %2376 = vmatprep.mubr.f32.mxu0 0.0
  %2377 = vmatmul.mubr.f32.gmra.mxu0 %v2307
  %v2378 = vpop.f32.mrf.mxu0
  %v2379 = vadd.f32 %v2300, %v2378
  %v2380 = vpop.f32.mrf.mxu0
  %v2381 = vadd.f32 %v2300, %v2380
  %2382 = vmatprep.mubr.f32.mxu0 0.0
  %2383 = vmatmul.mubr.f32.gmra.mxu0 %v2310
  %v2384 = vpop.f32.mrf.mxu0
  %v2385 = vadd.f32 %v2304, %v2384
  %v2386 = vpop.f32.mrf.mxu0
  %v2387 = vadd.f32 %v2304, %v2386
  %2388 = vdwg.mxu0
  %2389 = vmatprep.subr.mxu0 0.0
  %2390 = vmatpush1.msra.mxu0 0.0
  %2391 = vmatprep.subr.mxu0 0.0
  %2392 = vmatpush1.msra.mxu0 0.0
  %2393 = vmatprep.subr.mxu0 0.0
  %2394 = vmatpush1.msra.mxu0 0.0
  %2395 = vmatprep.subr.mxu0 0.0
  %2396 = vmatpush1.msra.mxu0 0.0
  %2397 = vmatprep.subr.mxu0 0.0
  %2398 = vmatpush1.msra.mxu0 0.0
  %2399 = vmatprep.subr.mxu0 0.0
  %2400 = vmatpush1.msra.mxu0 0.0
  %2401 = vmatprep.subr.mxu0 0.0
  %2402 = vmatpush1.msra.mxu0 0.0
  %2403 = vmatprep.subr.mxu0 0.0
  %2404 = vmatpush1.msra.mxu0 0.0
  %2405 = vmatprep.subr.mxu0 0.0
  %2406 = vmatpush1.msra.mxu0 0.0
  %2407 = vmatprep.subr.mxu0 0.0
  %2408 = vmatpush1.msra.mxu0 0.0
  %2409 = vmatprep.subr.mxu0 0.0
  %2410 = vmatpush1.msra.mxu0 0.0
  %2411 = vmatprep.subr.mxu0 0.0
  %2412 = vmatpush1.msra.mxu0 0.0
  %2413 = vmatprep.subr.mxu0 %v2294
  %2414 = vmatpush1.msra.mxu0 %v2293
  %2415 = vmatprep.subr.mxu0 %v2290
  %2416 = vmatpush1.msra.mxu0 %v2289
  %2417 = vmatprep.subr.mxu0 %v2286
  %2418 = vmatpush1.msra.mxu0 %v2285
  %2419 = vmatprep.subr.mxu0 %v2282
  %2420 = vmatpush1.msra.mxu0 %v2281
  %2421 = vmatprep.subr.mxu0 0.0
  %2422 = vmatpush2.msra.mxu0 0.0
  %2423 = vmatprep.subr.mxu0 0.0
  %2424 = vmatpush2.msra.mxu0 0.0
  %2425 = vmatprep.subr.mxu0 0.0
  %2426 = vmatpush2.msra.mxu0 0.0
  %2427 = vmatprep.subr.mxu0 0.0
  %2428 = vmatpush2.msra.mxu0 0.0
  %2429 = vmatprep.subr.mxu0 0.0
  %2430 = vmatpush2.msra.mxu0 0.0
  %2431 = vmatprep.subr.mxu0 0.0
  %2432 = vmatpush2.msra.mxu0 0.0
  %2433 = vmatprep.subr.mxu0 0.0
  %2434 = vmatpush2.msra.mxu0 0.0
  %2435 = vmatprep.subr.mxu0 0.0
  %2436 = vmatpush2.msra.mxu0 0.0
  %2437 = vmatprep.subr.mxu0 0.0
  %2438 = vmatpush2.msra.mxu0 0.0
  %2439 = vmatprep.subr.mxu0 0.0
  %2440 = vmatpush2.msra.mxu0 0.0
  %2441 = vmatprep.subr.mxu0 0.0
  %2442 = vmatpush2.msra.mxu0 0.0
  %2443 = vmatprep.subr.mxu0 0.0
  %2444 = vmatpush2.msra.mxu0 0.0
  %2445 = vmatprep.subr.mxu0 0.0
  %2446 = vmatpush2.msra.mxu0 0.0
  %2447 = vmatprep.subr.mxu0 0.0
  %2448 = vmatpush2.msra.mxu0 0.0
  %2449 = vmatprep.subr.mxu0 0.0
  %2450 = vmatpush2.msra.mxu0 0.0
  %2451 = vmatprep.subr.mxu0 0.0
  %2452 = vmatpush2.msra.mxu0 0.0
  %2453 = vmatprep.mubr.f32.mxu0 0.0
  %2454 = vmatmul.mubr.f32.gmra.mxu0 %v2307
  %v2455 = vpop.f32.mrf.mxu0
  %v2456 = vadd.f32 %v2300, %v2455
  %v2457 = vpop.f32.mrf.mxu0
  %v2458 = vadd.f32 %v2300, %v2457
  %2459 = vmatprep.mubr.f32.mxu0 0.0
  %2460 = vmatmul.mubr.f32.gmra.mxu0 %v2310
  %v2461 = vpop.f32.mrf.mxu0
  %v2462 = vadd.f32 %v2304, %v2461
  %v2463 = vpop.f32.mrf.mxu0
  %v2464 = vadd.f32 %v2304, %v2463
  %2465 = vdwg.mxu0
  %v2466 = vmax.f32 %v2379, 0.0
  %v2467 = vmax.f32 %v2381, 0.0
  %v2468 = vmax.f32 %v2456, 0.0
  %v2469 = vmax.f32 %v2458, 0.0
  %v2470 = vmax.f32 %v2385, 0.0
  %v2471 = vmax.f32 %v2387, 0.0
  %v2472 = vmax.f32 %v2462, 0.0
  %v2473 = vmax.f32 %v2464, 0.0
  %v2474 = vand.u32 2147483647, %v2379
  %v2475 = vand.u32 2147483647, %v2381
  %v2476 = vand.u32 2147483647, %v2456
  %v2477 = vand.u32 2147483647, %v2458
  %v2478 = vand.u32 2147483647, %v2385
  %v2479 = vand.u32 2147483647, %v2387
  %v2480 = vand.u32 2147483647, %v2462
  %v2481 = vand.u32 2147483647, %v2464
  %v2482 = vsub.f32 0.0, %v2474
  %v2483 = vsub.f32 0.0, %v2475
  %v2484 = vsub.f32 0.0, %v2476
  %v2485 = vsub.f32 0.0, %v2477
  %v2486 = vsub.f32 0.0, %v2478
  %v2487 = vsub.f32 0.0, %v2479
  %v2488 = vsub.f32 0.0, %v2480
  %v2489 = vsub.f32 0.0, %v2481
  %v2490 = vmul.f32 %v2482, 1.442695
  %v2491 = vpow.pop %v2490
  %v2492 = vmul.f32 %v2483, 1.442695
  %v2493 = vpow.pop %v2492
  %v2494 = vmul.f32 %v2484, 1.442695
  %v2495 = vpow.pop %v2494
  %v2496 = vmul.f32 %v2485, 1.442695
  %v2497 = vpow.pop %v2496
  %v2498 = vmul.f32 %v2486, 1.442695
  %v2499 = vpow.pop %v2498
  %v2500 = vmul.f32 %v2487, 1.442695
  %v2501 = vpow.pop %v2500
  %v2502 = vmul.f32 %v2488, 1.442695
  %v2503 = vpow.pop %v2502
  %v2504 = vmul.f32 %v2489, 1.442695
  %v2505 = vpow.pop %v2504
  %v2506 = vadd.f32 %v2491, 1.0
  %v2507 = vlog2.pop %v2506
  %v2508 = vmul.f32 %v2507, 0.6931472
  %v2509 = vmul.f32 -0.5, %v2491
  %v2510 = vadd.f32 %v2509, 1.0
  %v2511 = vmul.f32 %v2510, %v2491
  %v2512 = vand.u32 2147483647, %v2491
  %vm2513 = vcmp.lt.f32.partialorder %v2512, 0.0004427343
  %v2514 = vsel %vm2513, %v2511, %v2508
  %v2515 = vadd.f32 %v2493, 1.0
  %v2516 = vlog2.pop %v2515
  %v2517 = vmul.f32 %v2516, 0.6931472
  %v2518 = vmul.f32 -0.5, %v2493
  %v2519 = vadd.f32 %v2518, 1.0
  %v2520 = vmul.f32 %v2519, %v2493
  %v2521 = vand.u32 2147483647, %v2493
  %vm2522 = vcmp.lt.f32.partialorder %v2521, 0.0004427343
  %v2523 = vsel %vm2522, %v2520, %v2517
  %v2524 = vadd.f32 %v2495, 1.0
  %v2525 = vlog2.pop %v2524
  %v2526 = vmul.f32 %v2525, 0.6931472
  %v2527 = vmul.f32 -0.5, %v2495
  %v2528 = vadd.f32 %v2527, 1.0
  %v2529 = vmul.f32 %v2528, %v2495
  %v2530 = vand.u32 2147483647, %v2495
  %vm2531 = vcmp.lt.f32.partialorder %v2530, 0.0004427343
  %v2532 = vsel %vm2531, %v2529, %v2526
  %v2533 = vadd.f32 %v2497, 1.0
  %v2534 = vlog2.pop %v2533
  %v2535 = vmul.f32 %v2534, 0.6931472
  %v2536 = vmul.f32 -0.5, %v2497
  %v2537 = vadd.f32 %v2536, 1.0
  %v2538 = vmul.f32 %v2537, %v2497
  %v2539 = vand.u32 2147483647, %v2497
  %vm2540 = vcmp.lt.f32.partialorder %v2539, 0.0004427343
  %v2541 = vsel %vm2540, %v2538, %v2535
  %v2542 = vadd.f32 %v2499, 1.0
  %v2543 = vlog2.pop %v2542
  %v2544 = vmul.f32 %v2543, 0.6931472
  %v2545 = vmul.f32 -0.5, %v2499
  %v2546 = vadd.f32 %v2545, 1.0
  %v2547 = vmul.f32 %v2546, %v2499
  %v2548 = vand.u32 2147483647, %v2499
  %vm2549 = vcmp.lt.f32.partialorder %v2548, 0.0004427343
  %v2550 = vsel %vm2549, %v2547, %v2544
  %v2551 = vadd.f32 %v2501, 1.0
  %v2552 = vlog2.pop %v2551
  %v2553 = vmul.f32 %v2552, 0.6931472
  %v2554 = vmul.f32 -0.5, %v2501
  %v2555 = vadd.f32 %v2554, 1.0
  %v2556 = vmul.f32 %v2555, %v2501
  %v2557 = vand.u32 2147483647, %v2501
  %vm2558 = vcmp.lt.f32.partialorder %v2557, 0.0004427343
  %v2559 = vsel %vm2558, %v2556, %v2553
  %v2560 = vadd.f32 %v2503, 1.0
  %v2561 = vlog2.pop %v2560
  %v2562 = vmul.f32 %v2561, 0.6931472
  %v2563 = vmul.f32 -0.5, %v2503
  %v2564 = vadd.f32 %v2563, 1.0
  %v2565 = vmul.f32 %v2564, %v2503
  %v2566 = vand.u32 2147483647, %v2503
  %vm2567 = vcmp.lt.f32.partialorder %v2566, 0.0004427343
  %v2568 = vsel %vm2567, %v2565, %v2562
  %v2569 = vadd.f32 %v2505, 1.0
  %v2570 = vlog2.pop %v2569
  %v2571 = vmul.f32 %v2570, 0.6931472
  %v2572 = vmul.f32 -0.5, %v2505
  %v2573 = vadd.f32 %v2572, 1.0
  %v2574 = vmul.f32 %v2573, %v2505
  %v2575 = vand.u32 2147483647, %v2505
  %vm2576 = vcmp.lt.f32.partialorder %v2575, 0.0004427343
  %v2577 = vsel %vm2576, %v2574, %v2571
  %v2578 = vadd.f32 %v2466, %v2514
  %v2579 = vadd.f32 %v2467, %v2523
  %v2580 = vadd.f32 %v2468, %v2532
  %v2581 = vadd.f32 %v2469, %v2541
  %v2582 = vadd.f32 %v2470, %v2550
  %v2583 = vadd.f32 %v2471, %v2559
  %v2584 = vadd.f32 %v2472, %v2568
  %v2585 = vadd.f32 %v2473, %v2577
  %v2586 = vsub.f32 %v2578, 0.6931472
  %v2587 = vsub.f32 %v2579, 0.6931472
  %v2588 = vsub.f32 %v2580, 0.6931472
  %v2589 = vsub.f32 %v2581, 0.6931472
  %v2590 = vsub.f32 %v2582, 0.6931472
  %v2591 = vsub.f32 %v2583, 0.6931472
  %v2592 = vsub.f32 %v2584, 0.6931472
  %v2593 = vsub.f32 %v2585, 0.6931472
  %2594 = vxpose.xlu0.b32.start [1/16] %v2586, 128
  %2595 = vxpose.xlu0.b32.cont [2/16] %v2590, 128
  %2596 = vxpose.xlu0.b32.cont [3/16] 0.0, 128
  %2597 = vxpose.xlu0.b32.cont [4/16] 0.0, 128
  %2598 = vxpose.xlu0.b32.cont [5/16] 0.0, 128
  %2599 = vxpose.xlu0.b32.cont [6/16] 0.0, 128
  %2600 = vxpose.xlu0.b32.cont [7/16] 0.0, 128
  %2601 = vxpose.xlu0.b32.cont [8/16] 0.0, 128
  %2602 = vxpose.xlu0.b32.cont [9/16] 0.0, 128
  %2603 = vxpose.xlu0.b32.cont [10/16] 0.0, 128
  %2604 = vxpose.xlu0.b32.cont [11/16] 0.0, 128
  %2605 = vxpose.xlu0.b32.cont [12/16] 0.0, 128
  %2606 = vxpose.xlu0.b32.cont [13/16] 0.0, 128
  %2607 = vxpose.xlu0.b32.cont [14/16] 0.0, 128
  %2608 = vxpose.xlu0.b32.cont [15/16] 0.0, 128
  %2609 = vxpose.xlu0.b32.end [16/16] 0.0, 128
  %v2610 = vpop.trf.xlu0
  %v2611 = vpop.trf.xlu0
  %v2612 = vpop.trf.xlu0
  %v2613 = vpop.trf.xlu0
  %v2614 = vpop.trf.xlu0
  %v2615 = vpop.trf.xlu0
  %v2616 = vpop.trf.xlu0
  %v2617 = vpop.trf.xlu0
  %v2618 = vpop.trf.xlu0
  %v2619 = vpop.trf.xlu0
  %v2620 = vpop.trf.xlu0
  %v2621 = vpop.trf.xlu0
  %v2622 = vpop.trf.xlu0
  %v2623 = vpop.trf.xlu0
  %v2624 = vpop.trf.xlu0
  %v2625 = vpop.trf.xlu0
  %2626 = vxpose.xlu0.b32.start [1/16] %v2587, 128
  %2627 = vxpose.xlu0.b32.cont [2/16] %v2591, 128
  %2628 = vxpose.xlu0.b32.cont [3/16] 0.0, 128
  %2629 = vxpose.xlu0.b32.cont [4/16] 0.0, 128
  %2630 = vxpose.xlu0.b32.cont [5/16] 0.0, 128
  %2631 = vxpose.xlu0.b32.cont [6/16] 0.0, 128
  %2632 = vxpose.xlu0.b32.cont [7/16] 0.0, 128
  %2633 = vxpose.xlu0.b32.cont [8/16] 0.0, 128
  %2634 = vxpose.xlu0.b32.cont [9/16] 0.0, 128
  %2635 = vxpose.xlu0.b32.cont [10/16] 0.0, 128
  %2636 = vxpose.xlu0.b32.cont [11/16] 0.0, 128
  %2637 = vxpose.xlu0.b32.cont [12/16] 0.0, 128
  %2638 = vxpose.xlu0.b32.cont [13/16] 0.0, 128
  %2639 = vxpose.xlu0.b32.cont [14/16] 0.0, 128
  %2640 = vxpose.xlu0.b32.cont [15/16] 0.0, 128
  %2641 = vxpose.xlu0.b32.end [16/16] 0.0, 128
  %v2642 = vpop.trf.xlu0
  %v2643 = vpop.trf.xlu0
  %v2644 = vpop.trf.xlu0
  %v2645 = vpop.trf.xlu0
  %v2646 = vpop.trf.xlu0
  %v2647 = vpop.trf.xlu0
  %v2648 = vpop.trf.xlu0
  %v2649 = vpop.trf.xlu0
  %v2650 = vpop.trf.xlu0
  %v2651 = vpop.trf.xlu0
  %v2652 = vpop.trf.xlu0
  %v2653 = vpop.trf.xlu0
  %v2654 = vpop.trf.xlu0
  %v2655 = vpop.trf.xlu0
  %v2656 = vpop.trf.xlu0
  %v2657 = vpop.trf.xlu0
  %2658 = vxpose.xlu0.b32.start [1/16] %v2588, 128
  %2659 = vxpose.xlu0.b32.cont [2/16] %v2592, 128
  %2660 = vxpose.xlu0.b32.cont [3/16] 0.0, 128
  %2661 = vxpose.xlu0.b32.cont [4/16] 0.0, 128
  %2662 = vxpose.xlu0.b32.cont [5/16] 0.0, 128
  %2663 = vxpose.xlu0.b32.cont [6/16] 0.0, 128
  %2664 = vxpose.xlu0.b32.cont [7/16] 0.0, 128
  %2665 = vxpose.xlu0.b32.cont [8/16] 0.0, 128
  %2666 = vxpose.xlu0.b32.cont [9/16] 0.0, 128
  %2667 = vxpose.xlu0.b32.cont [10/16] 0.0, 128
  %2668 = vxpose.xlu0.b32.cont [11/16] 0.0, 128
  %2669 = vxpose.xlu0.b32.cont [12/16] 0.0, 128
  %2670 = vxpose.xlu0.b32.cont [13/16] 0.0, 128
  %2671 = vxpose.xlu0.b32.cont [14/16] 0.0, 128
  %2672 = vxpose.xlu0.b32.cont [15/16] 0.0, 128
  %2673 = vxpose.xlu0.b32.end [16/16] 0.0, 128
  %v2674 = vpop.trf.xlu0
  %v2675 = vpop.trf.xlu0
  %v2676 = vpop.trf.xlu0
  %v2677 = vpop.trf.xlu0
  %v2678 = vpop.trf.xlu0
  %v2679 = vpop.trf.xlu0
  %v2680 = vpop.trf.xlu0
  %v2681 = vpop.trf.xlu0
  %v2682 = vpop.trf.xlu0
  %v2683 = vpop.trf.xlu0
  %v2684 = vpop.trf.xlu0
  %v2685 = vpop.trf.xlu0
  %v2686 = vpop.trf.xlu0
  %v2687 = vpop.trf.xlu0
  %v2688 = vpop.trf.xlu0
  %v2689 = vpop.trf.xlu0
  %2690 = vxpose.xlu0.b32.start [1/16] %v2589, 128
  %2691 = vxpose.xlu0.b32.cont [2/16] %v2593, 128
  %2692 = vxpose.xlu0.b32.cont [3/16] 0.0, 128
  %2693 = vxpose.xlu0.b32.cont [4/16] 0.0, 128
  %2694 = vxpose.xlu0.b32.cont [5/16] 0.0, 128
  %2695 = vxpose.xlu0.b32.cont [6/16] 0.0, 128
  %2696 = vxpose.xlu0.b32.cont [7/16] 0.0, 128
  %2697 = vxpose.xlu0.b32.cont [8/16] 0.0, 128
  %2698 = vxpose.xlu0.b32.cont [9/16] 0.0, 128
  %2699 = vxpose.xlu0.b32.cont [10/16] 0.0, 128
  %2700 = vxpose.xlu0.b32.cont [11/16] 0.0, 128
  %2701 = vxpose.xlu0.b32.cont [12/16] 0.0, 128
  %2702 = vxpose.xlu0.b32.cont [13/16] 0.0, 128
  %2703 = vxpose.xlu0.b32.cont [14/16] 0.0, 128
  %2704 = vxpose.xlu0.b32.cont [15/16] 0.0, 128
  %2705 = vxpose.xlu0.b32.end [16/16] 0.0, 128
  %v2706 = vpop.trf.xlu0
  %v2707 = vpop.trf.xlu0
  %v2708 = vpop.trf.xlu0
  %v2709 = vpop.trf.xlu0
  %v2710 = vpop.trf.xlu0
  %v2711 = vpop.trf.xlu0
  %v2712 = vpop.trf.xlu0
  %v2713 = vpop.trf.xlu0
  %v2714 = vpop.trf.xlu0
  %v2715 = vpop.trf.xlu0
  %v2716 = vpop.trf.xlu0
  %v2717 = vpop.trf.xlu0
  %v2718 = vpop.trf.xlu0
  %v2719 = vpop.trf.xlu0
  %v2720 = vpop.trf.xlu0
  %v2721 = vpop.trf.xlu0
  %vm2722 = vcmask 130048
  %2723 = vst.msk [vmem:[%s5] sm:$0xff] %vm2722, %v2610
  %2724 = vst.msk [vmem:[%s5 + $0x8] sm:$0xff] %vm2722, %v2611
  %2725 = vst.msk [vmem:[%s5 + $0x10] sm:$0xff] %vm2722, %v2612
  %2726 = vst.msk [vmem:[%s5 + $0x18] sm:$0xff] %vm2722, %v2613
  %2727 = vst.msk [vmem:[%s5 + $0x20] sm:$0xff] %vm2722, %v2614
  %2728 = vst.msk [vmem:[%s5 + $0x28] sm:$0xff] %vm2722, %v2615
  %2729 = vst.msk [vmem:[%s5 + $0x30] sm:$0xff] %vm2722, %v2616
  %2730 = vst.msk [vmem:[%s5 + $0x38] sm:$0xff] %vm2722, %v2617
  %2731 = vst.msk [vmem:[%s5 + $0x40] sm:$0xff] %vm2722, %v2618
  %2732 = vst.msk [vmem:[%s5 + $0x48] sm:$0xff] %vm2722, %v2619
  %2733 = vst.msk [vmem:[%s5 + $0x50] sm:$0xff] %vm2722, %v2620
  %2734 = vst.msk [vmem:[%s5 + $0x58] sm:$0xff] %vm2722, %v2621
  %2735 = vst.msk [vmem:[%s5 + $0x60] sm:$0xff] %vm2722, %v2622
  %2736 = vst.msk [vmem:[%s5 + $0x68] sm:$0xff] %vm2722, %v2623
  %2737 = vst.msk [vmem:[%s5 + $0x70] sm:$0xff] %vm2722, %v2624
  %2738 = vst.msk [vmem:[%s5 + $0x78] sm:$0xff] %vm2722, %v2625
  %2739 = vst.msk [vmem:[%s5 + $0x80] sm:$0xff] %vm2722, %v2642
  %2740 = vst.msk [vmem:[%s5 + $0x88] sm:$0xff] %vm2722, %v2643
  %2741 = vst.msk [vmem:[%s5 + $0x90] sm:$0xff] %vm2722, %v2644
  %2742 = vst.msk [vmem:[%s5 + $0x98] sm:$0xff] %vm2722, %v2645
  %2743 = vst.msk [vmem:[%s5 + $0xa0] sm:$0xff] %vm2722, %v2646
  %2744 = vst.msk [vmem:[%s5 + $0xa8] sm:$0xff] %vm2722, %v2647
  %2745 = vst.msk [vmem:[%s5 + $0xb0] sm:$0xff] %vm2722, %v2648
  %2746 = vst.msk [vmem:[%s5 + $0xb8] sm:$0xff] %vm2722, %v2649
  %2747 = vst.msk [vmem:[%s5 + $0xc0] sm:$0xff] %vm2722, %v2650
  %2748 = vst.msk [vmem:[%s5 + $0xc8] sm:$0xff] %vm2722, %v2651
  %2749 = vst.msk [vmem:[%s5 + $0xd0] sm:$0xff] %vm2722, %v2652
  %2750 = vst.msk [vmem:[%s5 + $0xd8] sm:$0xff] %vm2722, %v2653
  %2751 = vst.msk [vmem:[%s5 + $0xe0] sm:$0xff] %vm2722, %v2654
  %2752 = vst.msk [vmem:[%s5 + $0xe8] sm:$0xff] %vm2722, %v2655
  %2753 = vst.msk [vmem:[%s5 + $0xf0] sm:$0xff] %vm2722, %v2656
  %2754 = vst.msk [vmem:[%s5 + $0xf8] sm:$0xff] %vm2722, %v2657
  %2755 = vst.msk [vmem:[%s5 + $0x100] sm:$0xff] %vm2722, %v2674
  %2756 = vst.msk [vmem:[%s5 + $0x108] sm:$0xff] %vm2722, %v2675
  %2757 = vst.msk [vmem:[%s5 + $0x110] sm:$0xff] %vm2722, %v2676
  %2758 = vst.msk [vmem:[%s5 + $0x118] sm:$0xff] %vm2722, %v2677
  %2759 = vst.msk [vmem:[%s5 + $0x120] sm:$0xff] %vm2722, %v2678
  %2760 = vst.msk [vmem:[%s5 + $0x128] sm:$0xff] %vm2722, %v2679
  %2761 = vst.msk [vmem:[%s5 + $0x130] sm:$0xff] %vm2722, %v2680
  %2762 = vst.msk [vmem:[%s5 + $0x138] sm:$0xff] %vm2722, %v2681
  %2763 = vst.msk [vmem:[%s5 + $0x140] sm:$0xff] %vm2722, %v2682
  %2764 = vst.msk [vmem:[%s5 + $0x148] sm:$0xff] %vm2722, %v2683
  %2765 = vst.msk [vmem:[%s5 + $0x150] sm:$0xff] %vm2722, %v2684
  %2766 = vst.msk [vmem:[%s5 + $0x158] sm:$0xff] %vm2722, %v2685
  %2767 = vst.msk [vmem:[%s5 + $0x160] sm:$0xff] %vm2722, %v2686
  %2768 = vst.msk [vmem:[%s5 + $0x168] sm:$0xff] %vm2722, %v2687
  %2769 = vst.msk [vmem:[%s5 + $0x170] sm:$0xff] %vm2722, %v2688
  %2770 = vst.msk [vmem:[%s5 + $0x178] sm:$0xff] %vm2722, %v2689
  %2771 = vst.msk [vmem:[%s5 + $0x180] sm:$0xff] %vm2722, %v2706
  %2772 = vst.msk [vmem:[%s5 + $0x188] sm:$0xff] %vm2722, %v2707
  %2773 = vst.msk [vmem:[%s5 + $0x190] sm:$0xff] %vm2722, %v2708
  %2774 = vst.msk [vmem:[%s5 + $0x198] sm:$0xff] %vm2722, %v2709
  %2775 = vst.msk [vmem:[%s5 + $0x1a0] sm:$0xff] %vm2722, %v2710
  %2776 = vst.msk [vmem:[%s5 + $0x1a8] sm:$0xff] %vm2722, %v2711
  %2777 = vst.msk [vmem:[%s5 + $0x1b0] sm:$0xff] %vm2722, %v2712
  %2778 = vst.msk [vmem:[%s5 + $0x1b8] sm:$0xff] %vm2722, %v2713
  %2779 = vst.msk [vmem:[%s5 + $0x1c0] sm:$0xff] %vm2722, %v2714
  %2780 = vst.msk [vmem:[%s5 + $0x1c8] sm:$0xff] %vm2722, %v2715
  %2781 = vst.msk [vmem:[%s5 + $0x1d0] sm:$0xff] %vm2722, %v2716
  %2782 = vst.msk [vmem:[%s5 + $0x1d8] sm:$0xff] %vm2722, %v2717
  %2783 = vst.msk [vmem:[%s5 + $0x1e0] sm:$0xff] %vm2722, %v2718
  %2784 = vst.msk [vmem:[%s5 + $0x1e8] sm:$0xff] %vm2722, %v2719
  %2785 = vst.msk [vmem:[%s5 + $0x1f0] sm:$0xff] %vm2722, %v2720
  %2786 = vst.msk [vmem:[%s5 + $0x1f8] sm:$0xff] %vm2722, %v2721
  %v2787 = vld [vmem:[%s3] sm:$0xff]
  %v2788 = vld [vmem:[%s3 + $0x8] sm:$0xff]
  %v2790 = vsel %vm2722, %v2610, 0
  %v2793 = vsel %vm2722, %v2611, 0
  %v2796 = vsel %vm2722, %v2612, 0
  %v2799 = vsel %vm2722, %v2613, 0
  %v2802 = vsel %vm2722, %v2614, 0
  %v2805 = vsel %vm2722, %v2615, 0
  %v2808 = vsel %vm2722, %v2616, 0
  %v2811 = vsel %vm2722, %v2617, 0
  %v2814 = vsel %vm2722, %v2618, 0
  %v2817 = vsel %vm2722, %v2619, 0
  %v2820 = vsel %vm2722, %v2620, 0
  %v2823 = vsel %vm2722, %v2621, 0
  %v2826 = vsel %vm2722, %v2622, 0
  %v2829 = vsel %vm2722, %v2623, 0
  %v2832 = vsel %vm2722, %v2624, 0
  %v2835 = vsel %vm2722, %v2625, 0
  %v2838 = vsel %vm2722, %v2642, 0
  %v2841 = vsel %vm2722, %v2643, 0
  %v2844 = vsel %vm2722, %v2644, 0
  %v2847 = vsel %vm2722, %v2645, 0
  %v2850 = vsel %vm2722, %v2646, 0
  %v2853 = vsel %vm2722, %v2647, 0
  %v2856 = vsel %vm2722, %v2648, 0
  %v2859 = vsel %vm2722, %v2649, 0
  %v2862 = vsel %vm2722, %v2650, 0
  %v2865 = vsel %vm2722, %v2651, 0
  %v2868 = vsel %vm2722, %v2652, 0
  %v2871 = vsel %vm2722, %v2653, 0
  %v2874 = vsel %vm2722, %v2654, 0
  %v2877 = vsel %vm2722, %v2655, 0
  %v2880 = vsel %vm2722, %v2656, 0
  %v2883 = vsel %vm2722, %v2657, 0
  %v2886 = vsel %vm2722, %v2674, 0
  %v2889 = vsel %vm2722, %v2675, 0
  %v2892 = vsel %vm2722, %v2676, 0
  %v2895 = vsel %vm2722, %v2677, 0
  %v2898 = vsel %vm2722, %v2678, 0
  %v2901 = vsel %vm2722, %v2679, 0
  %v2904 = vsel %vm2722, %v2680, 0
  %v2907 = vsel %vm2722, %v2681, 0
  %v2910 = vsel %vm2722, %v2682, 0
  %v2913 = vsel %vm2722, %v2683, 0
  %v2916 = vsel %vm2722, %v2684, 0
  %v2919 = vsel %vm2722, %v2685, 0
  %v2922 = vsel %vm2722, %v2686, 0
  %v2925 = vsel %vm2722, %v2687, 0
  %v2928 = vsel %vm2722, %v2688, 0
  %v2931 = vsel %vm2722, %v2689, 0
  %v2934 = vsel %vm2722, %v2706, 0
  %v2937 = vsel %vm2722, %v2707, 0
  %v2940 = vsel %vm2722, %v2708, 0
  %v2943 = vsel %vm2722, %v2709, 0
  %v2946 = vsel %vm2722, %v2710, 0
  %v2949 = vsel %vm2722, %v2711, 0
  %v2952 = vsel %vm2722, %v2712, 0
  %v2955 = vsel %vm2722, %v2713, 0
  %v2958 = vsel %vm2722, %v2714, 0
  %v2961 = vsel %vm2722, %v2715, 0
  %v2964 = vsel %vm2722, %v2716, 0
  %v2967 = vsel %vm2722, %v2717, 0
  %v2970 = vsel %vm2722, %v2718, 0
  %v2973 = vsel %vm2722, %v2719, 0
  %v2976 = vsel %vm2722, %v2720, 0
  %v2979 = vsel %vm2722, %v2721, 0
  %2981 = vmatprep.subr.mxu0 0.0
  %2982 = vmatpush1.msra.mxu0 0.0
  %2983 = vmatprep.subr.mxu0 0.0
  %2984 = vmatpush1.msra.mxu0 0.0
  %2985 = vmatprep.subr.mxu0 0.0
  %2986 = vmatpush1.msra.mxu0 0.0
  %2987 = vmatprep.subr.mxu0 0.0
  %2988 = vmatpush1.msra.mxu0 0.0
  %2989 = vmatprep.subr.mxu0 0.0
  %2990 = vmatpush1.msra.mxu0 0.0
  %2991 = vmatprep.subr.mxu0 0.0
  %2992 = vmatpush1.msra.mxu0 0.0
  %2993 = vmatprep.subr.mxu0 0.0
  %2994 = vmatpush1.msra.mxu0 0.0
  %2995 = vmatprep.subr.mxu0 0.0
  %2996 = vmatpush1.msra.mxu0 0.0
  %2997 = vmatprep.subr.mxu0 0.0
  %2998 = vmatpush1.msra.mxu0 0.0
  %2999 = vmatprep.subr.mxu0 0.0
  %3000 = vmatpush1.msra.mxu0 0.0
  %3001 = vmatprep.subr.mxu0 0.0
  %3002 = vmatpush1.msra.mxu0 0.0
  %3003 = vmatprep.subr.mxu0 0.0
  %3004 = vmatpush1.msra.mxu0 0.0
  %3005 = vmatprep.subr.mxu0 0.0
  %3006 = vmatpush1.msra.mxu0 0.0
  %3007 = vmatprep.subr.mxu0 0.0
  %3008 = vmatpush1.msra.mxu0 0.0
  %3009 = vmatprep.subr.mxu0 0.0
  %3010 = vmatpush1.msra.mxu0 %v2788
  %3011 = vmatprep.subr.mxu0 0.0
  %3012 = vmatpush1.msra.mxu0 %v2787
  %3013 = vmatprep.subr.mxu0 0.0
  %3014 = vmatpush2.msra.mxu0 0.0
  %3015 = vmatprep.subr.mxu0 0.0
  %3016 = vmatpush2.msra.mxu0 0.0
  %3017 = vmatprep.subr.mxu0 0.0
  %3018 = vmatpush2.msra.mxu0 0.0
  %3019 = vmatprep.subr.mxu0 0.0
  %3020 = vmatpush2.msra.mxu0 0.0
  %3021 = vmatprep.subr.mxu0 0.0
  %3022 = vmatpush2.msra.mxu0 0.0
  %3023 = vmatprep.subr.mxu0 0.0
  %3024 = vmatpush2.msra.mxu0 0.0
  %3025 = vmatprep.subr.mxu0 0.0
  %3026 = vmatpush2.msra.mxu0 0.0
  %3027 = vmatprep.subr.mxu0 0.0
  %3028 = vmatpush2.msra.mxu0 0.0
  %3029 = vmatprep.subr.mxu0 0.0
  %3030 = vmatpush2.msra.mxu0 0.0
  %3031 = vmatprep.subr.mxu0 0.0
  %3032 = vmatpush2.msra.mxu0 0.0
  %3033 = vmatprep.subr.mxu0 0.0
  %3034 = vmatpush2.msra.mxu0 0.0
  %3035 = vmatprep.subr.mxu0 0.0
  %3036 = vmatpush2.msra.mxu0 0.0
  %3037 = vmatprep.subr.mxu0 0.0
  %3038 = vmatpush2.msra.mxu0 0.0
  %3039 = vmatprep.subr.mxu0 0.0
  %3040 = vmatpush2.msra.mxu0 0.0
  %3041 = vmatprep.subr.mxu0 0.0
  %3042 = vmatpush2.msra.mxu0 0.0
  %3043 = vmatprep.subr.mxu0 0.0
  %3044 = vmatpush2.msra.mxu0 0.0
  %3045 = vmatprep.mubr.f32.mxu0 0.0
  %3046 = vmatmul.mubr.f32.gmra.mxu0 %v2790
  %v3047 = vpop.f32.mrf.mxu0
  %v3048 = vadd.f32 0.0, %v3047
  %v3049 = vpop.f32.mrf.mxu0
  %3050 = vmatprep.mubr.f32.mxu0 0.0
  %3051 = vmatmul.mubr.f32.gmra.mxu0 %v2793
  %v3052 = vpop.f32.mrf.mxu0
  %v3053 = vadd.f32 0.0, %v3052
  %v3054 = vpop.f32.mrf.mxu0
  %3055 = vmatprep.mubr.f32.mxu0 0.0
  %3056 = vmatmul.mubr.f32.gmra.mxu0 %v2796
  %v3057 = vpop.f32.mrf.mxu0
  %v3058 = vadd.f32 0.0, %v3057
  %v3059 = vpop.f32.mrf.mxu0
  %3060 = vmatprep.mubr.f32.mxu0 0.0
  %3061 = vmatmul.mubr.f32.gmra.mxu0 %v2799
  %v3062 = vpop.f32.mrf.mxu0
  %v3063 = vadd.f32 0.0, %v3062
  %v3064 = vpop.f32.mrf.mxu0
  %3065 = vmatprep.mubr.f32.mxu0 0.0
  %3066 = vmatmul.mubr.f32.gmra.mxu0 %v2802
  %v3067 = vpop.f32.mrf.mxu0
  %v3068 = vadd.f32 0.0, %v3067
  %v3069 = vpop.f32.mrf.mxu0
  %3070 = vmatprep.mubr.f32.mxu0 0.0
  %3071 = vmatmul.mubr.f32.gmra.mxu0 %v2805
  %v3072 = vpop.f32.mrf.mxu0
  %v3073 = vadd.f32 0.0, %v3072
  %v3074 = vpop.f32.mrf.mxu0
  %3075 = vmatprep.mubr.f32.mxu0 0.0
  %3076 = vmatmul.mubr.f32.gmra.mxu0 %v2808
  %v3077 = vpop.f32.mrf.mxu0
  %v3078 = vadd.f32 0.0, %v3077
  %v3079 = vpop.f32.mrf.mxu0
  %3080 = vmatprep.mubr.f32.mxu0 0.0
  %3081 = vmatmul.mubr.f32.gmra.mxu0 %v2811
  %v3082 = vpop.f32.mrf.mxu0
  %v3083 = vadd.f32 0.0, %v3082
  %v3084 = vpop.f32.mrf.mxu0
  %3085 = vmatprep.mubr.f32.mxu0 0.0
  %3086 = vmatmul.mubr.f32.gmra.mxu0 %v2814
  %v3087 = vpop.f32.mrf.mxu0
  %v3088 = vadd.f32 0.0, %v3087
  %v3089 = vpop.f32.mrf.mxu0
  %3090 = vmatprep.mubr.f32.mxu0 0.0
  %3091 = vmatmul.mubr.f32.gmra.mxu0 %v2817
  %v3092 = vpop.f32.mrf.mxu0
  %v3093 = vadd.f32 0.0, %v3092
  %v3094 = vpop.f32.mrf.mxu0
  %3095 = vmatprep.mubr.f32.mxu0 0.0
  %3096 = vmatmul.mubr.f32.gmra.mxu0 %v2820
  %v3097 = vpop.f32.mrf.mxu0
  %v3098 = vadd.f32 0.0, %v3097
  %v3099 = vpop.f32.mrf.mxu0
  %3100 = vmatprep.mubr.f32.mxu0 0.0
  %3101 = vmatmul.mubr.f32.gmra.mxu0 %v2823
  %v3102 = vpop.f32.mrf.mxu0
  %v3103 = vadd.f32 0.0, %v3102
  %v3104 = vpop.f32.mrf.mxu0
  %3105 = vmatprep.mubr.f32.mxu0 0.0
  %3106 = vmatmul.mubr.f32.gmra.mxu0 %v2826
  %v3107 = vpop.f32.mrf.mxu0
  %v3108 = vadd.f32 0.0, %v3107
  %v3109 = vpop.f32.mrf.mxu0
  %3110 = vmatprep.mubr.f32.mxu0 0.0
  %3111 = vmatmul.mubr.f32.gmra.mxu0 %v2829
  %v3112 = vpop.f32.mrf.mxu0
  %v3113 = vadd.f32 0.0, %v3112
  %v3114 = vpop.f32.mrf.mxu0
  %3115 = vmatprep.mubr.f32.mxu0 0.0
  %3116 = vmatmul.mubr.f32.gmra.mxu0 %v2832
  %v3117 = vpop.f32.mrf.mxu0
  %v3118 = vadd.f32 0.0, %v3117
  %v3119 = vpop.f32.mrf.mxu0
  %3120 = vmatprep.mubr.f32.mxu0 0.0
  %3121 = vmatmul.mubr.f32.gmra.mxu0 %v2835
  %v3122 = vpop.f32.mrf.mxu0
  %v3123 = vadd.f32 0.0, %v3122
  %v3124 = vpop.f32.mrf.mxu0
  %3125 = vmatprep.mubr.f32.mxu0 0.0
  %3126 = vmatmul.mubr.f32.gmra.mxu0 %v2838
  %v3127 = vpop.f32.mrf.mxu0
  %v3128 = vadd.f32 0.0, %v3127
  %v3129 = vpop.f32.mrf.mxu0
  %3130 = vmatprep.mubr.f32.mxu0 0.0
  %3131 = vmatmul.mubr.f32.gmra.mxu0 %v2841
  %v3132 = vpop.f32.mrf.mxu0
  %v3133 = vadd.f32 0.0, %v3132
  %v3134 = vpop.f32.mrf.mxu0
  %3135 = vmatprep.mubr.f32.mxu0 0.0
  %3136 = vmatmul.mubr.f32.gmra.mxu0 %v2844
  %v3137 = vpop.f32.mrf.mxu0
  %v3138 = vadd.f32 0.0, %v3137
  %v3139 = vpop.f32.mrf.mxu0
  %3140 = vmatprep.mubr.f32.mxu0 0.0
  %3141 = vmatmul.mubr.f32.gmra.mxu0 %v2847
  %v3142 = vpop.f32.mrf.mxu0
  %v3143 = vadd.f32 0.0, %v3142
  %v3144 = vpop.f32.mrf.mxu0
  %3145 = vmatprep.mubr.f32.mxu0 0.0
  %3146 = vmatmul.mubr.f32.gmra.mxu0 %v2850
  %v3147 = vpop.f32.mrf.mxu0
  %v3148 = vadd.f32 0.0, %v3147
  %v3149 = vpop.f32.mrf.mxu0
  %3150 = vmatprep.mubr.f32.mxu0 0.0
  %3151 = vmatmul.mubr.f32.gmra.mxu0 %v2853
  %v3152 = vpop.f32.mrf.mxu0
  %v3153 = vadd.f32 0.0, %v3152
  %v3154 = vpop.f32.mrf.mxu0
  %3155 = vmatprep.mubr.f32.mxu0 0.0
  %3156 = vmatmul.mubr.f32.gmra.mxu0 %v2856
  %v3157 = vpop.f32.mrf.mxu0
  %v3158 = vadd.f32 0.0, %v3157
  %v3159 = vpop.f32.mrf.mxu0
  %3160 = vmatprep.mubr.f32.mxu0 0.0
  %3161 = vmatmul.mubr.f32.gmra.mxu0 %v2859
  %v3162 = vpop.f32.mrf.mxu0
  %v3163 = vadd.f32 0.0, %v3162
  %v3164 = vpop.f32.mrf.mxu0
  %3165 = vmatprep.mubr.f32.mxu0 0.0
  %3166 = vmatmul.mubr.f32.gmra.mxu0 %v2862
  %v3167 = vpop.f32.mrf.mxu0
  %v3168 = vadd.f32 0.0, %v3167
  %v3169 = vpop.f32.mrf.mxu0
  %3170 = vmatprep.mubr.f32.mxu0 0.0
  %3171 = vmatmul.mubr.f32.gmra.mxu0 %v2865
  %v3172 = vpop.f32.mrf.mxu0
  %v3173 = vadd.f32 0.0, %v3172
  %v3174 = vpop.f32.mrf.mxu0
  %3175 = vmatprep.mubr.f32.mxu0 0.0
  %3176 = vmatmul.mubr.f32.gmra.mxu0 %v2868
  %v3177 = vpop.f32.mrf.mxu0
  %v3178 = vadd.f32 0.0, %v3177
  %v3179 = vpop.f32.mrf.mxu0
  %3180 = vmatprep.mubr.f32.mxu0 0.0
  %3181 = vmatmul.mubr.f32.gmra.mxu0 %v2871
  %v3182 = vpop.f32.mrf.mxu0
  %v3183 = vadd.f32 0.0, %v3182
  %v3184 = vpop.f32.mrf.mxu0
  %3185 = vmatprep.mubr.f32.mxu0 0.0
  %3186 = vmatmul.mubr.f32.gmra.mxu0 %v2874
  %v3187 = vpop.f32.mrf.mxu0
  %v3188 = vadd.f32 0.0, %v3187
  %v3189 = vpop.f32.mrf.mxu0
  %3190 = vmatprep.mubr.f32.mxu0 0.0
  %3191 = vmatmul.mubr.f32.gmra.mxu0 %v2877
  %v3192 = vpop.f32.mrf.mxu0
  %v3193 = vadd.f32 0.0, %v3192
  %v3194 = vpop.f32.mrf.mxu0
  %3195 = vmatprep.mubr.f32.mxu0 0.0
  %3196 = vmatmul.mubr.f32.gmra.mxu0 %v2880
  %v3197 = vpop.f32.mrf.mxu0
  %v3198 = vadd.f32 0.0, %v3197
  %v3199 = vpop.f32.mrf.mxu0
  %3200 = vmatprep.mubr.f32.mxu0 0.0
  %3201 = vmatmul.mubr.f32.gmra.mxu0 %v2883
  %v3202 = vpop.f32.mrf.mxu0
  %v3203 = vadd.f32 0.0, %v3202
  %v3204 = vpop.f32.mrf.mxu0
  %3205 = vmatprep.mubr.f32.mxu0 0.0
  %3206 = vmatmul.mubr.f32.gmra.mxu0 %v2886
  %v3207 = vpop.f32.mrf.mxu0
  %v3208 = vadd.f32 0.0, %v3207
  %v3209 = vpop.f32.mrf.mxu0
  %3210 = vmatprep.mubr.f32.mxu0 0.0
  %3211 = vmatmul.mubr.f32.gmra.mxu0 %v2889
  %v3212 = vpop.f32.mrf.mxu0
  %v3213 = vadd.f32 0.0, %v3212
  %v3214 = vpop.f32.mrf.mxu0
  %3215 = vmatprep.mubr.f32.mxu0 0.0
  %3216 = vmatmul.mubr.f32.gmra.mxu0 %v2892
  %v3217 = vpop.f32.mrf.mxu0
  %v3218 = vadd.f32 0.0, %v3217
  %v3219 = vpop.f32.mrf.mxu0
  %3220 = vmatprep.mubr.f32.mxu0 0.0
  %3221 = vmatmul.mubr.f32.gmra.mxu0 %v2895
  %v3222 = vpop.f32.mrf.mxu0
  %v3223 = vadd.f32 0.0, %v3222
  %v3224 = vpop.f32.mrf.mxu0
  %3225 = vmatprep.mubr.f32.mxu0 0.0
  %3226 = vmatmul.mubr.f32.gmra.mxu0 %v2898
  %v3227 = vpop.f32.mrf.mxu0
  %v3228 = vadd.f32 0.0, %v3227
  %v3229 = vpop.f32.mrf.mxu0
  %3230 = vmatprep.mubr.f32.mxu0 0.0
  %3231 = vmatmul.mubr.f32.gmra.mxu0 %v2901
  %v3232 = vpop.f32.mrf.mxu0
  %v3233 = vadd.f32 0.0, %v3232
  %v3234 = vpop.f32.mrf.mxu0
  %3235 = vmatprep.mubr.f32.mxu0 0.0
  %3236 = vmatmul.mubr.f32.gmra.mxu0 %v2904
  %v3237 = vpop.f32.mrf.mxu0
  %v3238 = vadd.f32 0.0, %v3237
  %v3239 = vpop.f32.mrf.mxu0
  %3240 = vmatprep.mubr.f32.mxu0 0.0
  %3241 = vmatmul.mubr.f32.gmra.mxu0 %v2907
  %v3242 = vpop.f32.mrf.mxu0
  %v3243 = vadd.f32 0.0, %v3242
  %v3244 = vpop.f32.mrf.mxu0
  %3245 = vmatprep.mubr.f32.mxu0 0.0
  %3246 = vmatmul.mubr.f32.gmra.mxu0 %v2910
  %v3247 = vpop.f32.mrf.mxu0
  %v3248 = vadd.f32 0.0, %v3247
  %v3249 = vpop.f32.mrf.mxu0
  %3250 = vmatprep.mubr.f32.mxu0 0.0
  %3251 = vmatmul.mubr.f32.gmra.mxu0 %v2913
  %v3252 = vpop.f32.mrf.mxu0
  %v3253 = vadd.f32 0.0, %v3252
  %v3254 = vpop.f32.mrf.mxu0
  %3255 = vmatprep.mubr.f32.mxu0 0.0
  %3256 = vmatmul.mubr.f32.gmra.mxu0 %v2916
  %v3257 = vpop.f32.mrf.mxu0
  %v3258 = vadd.f32 0.0, %v3257
  %v3259 = vpop.f32.mrf.mxu0
  %3260 = vmatprep.mubr.f32.mxu0 0.0
  %3261 = vmatmul.mubr.f32.gmra.mxu0 %v2919
  %v3262 = vpop.f32.mrf.mxu0
  %v3263 = vadd.f32 0.0, %v3262
  %v3264 = vpop.f32.mrf.mxu0
  %3265 = vmatprep.mubr.f32.mxu0 0.0
  %3266 = vmatmul.mubr.f32.gmra.mxu0 %v2922
  %v3267 = vpop.f32.mrf.mxu0
  %v3268 = vadd.f32 0.0, %v3267
  %v3269 = vpop.f32.mrf.mxu0
  %3270 = vmatprep.mubr.f32.mxu0 0.0
  %3271 = vmatmul.mubr.f32.gmra.mxu0 %v2925
  %v3272 = vpop.f32.mrf.mxu0
  %v3273 = vadd.f32 0.0, %v3272
  %v3274 = vpop.f32.mrf.mxu0
  %3275 = vmatprep.mubr.f32.mxu0 0.0
  %3276 = vmatmul.mubr.f32.gmra.mxu0 %v2928
  %v3277 = vpop.f32.mrf.mxu0
  %v3278 = vadd.f32 0.0, %v3277
  %v3279 = vpop.f32.mrf.mxu0
  %3280 = vmatprep.mubr.f32.mxu0 0.0
  %3281 = vmatmul.mubr.f32.gmra.mxu0 %v2931
  %v3282 = vpop.f32.mrf.mxu0
  %v3283 = vadd.f32 0.0, %v3282
  %v3284 = vpop.f32.mrf.mxu0
  %3285 = vmatprep.mubr.f32.mxu0 0.0
  %3286 = vmatmul.mubr.f32.gmra.mxu0 %v2934
  %v3287 = vpop.f32.mrf.mxu0
  %v3288 = vadd.f32 0.0, %v3287
  %v3289 = vpop.f32.mrf.mxu0
  %3290 = vmatprep.mubr.f32.mxu0 0.0
  %3291 = vmatmul.mubr.f32.gmra.mxu0 %v2937
  %v3292 = vpop.f32.mrf.mxu0
  %v3293 = vadd.f32 0.0, %v3292
  %v3294 = vpop.f32.mrf.mxu0
  %3295 = vmatprep.mubr.f32.mxu0 0.0
  %3296 = vmatmul.mubr.f32.gmra.mxu0 %v2940
  %v3297 = vpop.f32.mrf.mxu0
  %v3298 = vadd.f32 0.0, %v3297
  %v3299 = vpop.f32.mrf.mxu0
  %3300 = vmatprep.mubr.f32.mxu0 0.0
  %3301 = vmatmul.mubr.f32.gmra.mxu0 %v2943
  %v3302 = vpop.f32.mrf.mxu0
  %v3303 = vadd.f32 0.0, %v3302
  %v3304 = vpop.f32.mrf.mxu0
  %3305 = vmatprep.mubr.f32.mxu0 0.0
  %3306 = vmatmul.mubr.f32.gmra.mxu0 %v2946
  %v3307 = vpop.f32.mrf.mxu0
  %v3308 = vadd.f32 0.0, %v3307
  %v3309 = vpop.f32.mrf.mxu0
  %3310 = vmatprep.mubr.f32.mxu0 0.0
  %3311 = vmatmul.mubr.f32.gmra.mxu0 %v2949
  %v3312 = vpop.f32.mrf.mxu0
  %v3313 = vadd.f32 0.0, %v3312
  %v3314 = vpop.f32.mrf.mxu0
  %3315 = vmatprep.mubr.f32.mxu0 0.0
  %3316 = vmatmul.mubr.f32.gmra.mxu0 %v2952
  %v3317 = vpop.f32.mrf.mxu0
  %v3318 = vadd.f32 0.0, %v3317
  %v3319 = vpop.f32.mrf.mxu0
  %3320 = vmatprep.mubr.f32.mxu0 0.0
  %3321 = vmatmul.mubr.f32.gmra.mxu0 %v2955
  %v3322 = vpop.f32.mrf.mxu0
  %v3323 = vadd.f32 0.0, %v3322
  %v3324 = vpop.f32.mrf.mxu0
  %3325 = vmatprep.mubr.f32.mxu0 0.0
  %3326 = vmatmul.mubr.f32.gmra.mxu0 %v2958
  %v3327 = vpop.f32.mrf.mxu0
  %v3328 = vadd.f32 0.0, %v3327
  %v3329 = vpop.f32.mrf.mxu0
  %3330 = vmatprep.mubr.f32.mxu0 0.0
  %3331 = vmatmul.mubr.f32.gmra.mxu0 %v2961
  %v3332 = vpop.f32.mrf.mxu0
  %v3333 = vadd.f32 0.0, %v3332
  %v3334 = vpop.f32.mrf.mxu0
  %3335 = vmatprep.mubr.f32.mxu0 0.0
  %3336 = vmatmul.mubr.f32.gmra.mxu0 %v2964
  %v3337 = vpop.f32.mrf.mxu0
  %v3338 = vadd.f32 0.0, %v3337
  %v3339 = vpop.f32.mrf.mxu0
  %3340 = vmatprep.mubr.f32.mxu0 0.0
  %3341 = vmatmul.mubr.f32.gmra.mxu0 %v2967
  %v3342 = vpop.f32.mrf.mxu0
  %v3343 = vadd.f32 0.0, %v3342
  %v3344 = vpop.f32.mrf.mxu0
  %3345 = vmatprep.mubr.f32.mxu0 0.0
  %3346 = vmatmul.mubr.f32.gmra.mxu0 %v2970
  %v3347 = vpop.f32.mrf.mxu0
  %v3348 = vadd.f32 0.0, %v3347
  %v3349 = vpop.f32.mrf.mxu0
  %3350 = vmatprep.mubr.f32.mxu0 0.0
  %3351 = vmatmul.mubr.f32.gmra.mxu0 %v2973
  %v3352 = vpop.f32.mrf.mxu0
  %v3353 = vadd.f32 0.0, %v3352
  %v3354 = vpop.f32.mrf.mxu0
  %3355 = vmatprep.mubr.f32.mxu0 0.0
  %3356 = vmatmul.mubr.f32.gmra.mxu0 %v2976
  %v3357 = vpop.f32.mrf.mxu0
  %v3358 = vadd.f32 0.0, %v3357
  %v3359 = vpop.f32.mrf.mxu0
  %3360 = vmatprep.mubr.f32.mxu0 0.0
  %3361 = vmatmul.mubr.f32.gmra.mxu0 %v2979
  %v3362 = vpop.f32.mrf.mxu0
  %v3363 = vadd.f32 0.0, %v3362
  %v3364 = vpop.f32.mrf.mxu0
  %3365 = vdwg.mxu0
  %vm3366 = vcmask 15360
  %3367 = vst.msk [vmem:[%s4] sm:$0xff] %vm3366, %v3048
  %3368 = vst.msk [vmem:[%s4 + $0x8] sm:$0xff] %vm3366, %v3053
  %3369 = vst.msk [vmem:[%s4 + $0x10] sm:$0xff] %vm3366, %v3058
  %3370 = vst.msk [vmem:[%s4 + $0x18] sm:$0xff] %vm3366, %v3063
  %3371 = vst.msk [vmem:[%s4 + $0x20] sm:$0xff] %vm3366, %v3068
  %3372 = vst.msk [vmem:[%s4 + $0x28] sm:$0xff] %vm3366, %v3073
  %3373 = vst.msk [vmem:[%s4 + $0x30] sm:$0xff] %vm3366, %v3078
  %3374 = vst.msk [vmem:[%s4 + $0x38] sm:$0xff] %vm3366, %v3083
  %3375 = vst.msk [vmem:[%s4 + $0x40] sm:$0xff] %vm3366, %v3088
  %3376 = vst.msk [vmem:[%s4 + $0x48] sm:$0xff] %vm3366, %v3093
  %3377 = vst.msk [vmem:[%s4 + $0x50] sm:$0xff] %vm3366, %v3098
  %3378 = vst.msk [vmem:[%s4 + $0x58] sm:$0xff] %vm3366, %v3103
  %3379 = vst.msk [vmem:[%s4 + $0x60] sm:$0xff] %vm3366, %v3108
  %3380 = vst.msk [vmem:[%s4 + $0x68] sm:$0xff] %vm3366, %v3113
  %3381 = vst.msk [vmem:[%s4 + $0x70] sm:$0xff] %vm3366, %v3118
  %3382 = vst.msk [vmem:[%s4 + $0x78] sm:$0xff] %vm3366, %v3123
  %3383 = vst.msk [vmem:[%s4 + $0x80] sm:$0xff] %vm3366, %v3128
  %3384 = vst.msk [vmem:[%s4 + $0x88] sm:$0xff] %vm3366, %v3133
  %3385 = vst.msk [vmem:[%s4 + $0x90] sm:$0xff] %vm3366, %v3138
  %3386 = vst.msk [vmem:[%s4 + $0x98] sm:$0xff] %vm3366, %v3143
  %3387 = vst.msk [vmem:[%s4 + $0xa0] sm:$0xff] %vm3366, %v3148
  %3388 = vst.msk [vmem:[%s4 + $0xa8] sm:$0xff] %vm3366, %v3153
  %3389 = vst.msk [vmem:[%s4 + $0xb0] sm:$0xff] %vm3366, %v3158
  %3390 = vst.msk [vmem:[%s4 + $0xb8] sm:$0xff] %vm3366, %v3163
  %3391 = vst.msk [vmem:[%s4 + $0xc0] sm:$0xff] %vm3366, %v3168
  %3392 = vst.msk [vmem:[%s4 + $0xc8] sm:$0xff] %vm3366, %v3173
  %3393 = vst.msk [vmem:[%s4 + $0xd0] sm:$0xff] %vm3366, %v3178
  %3394 = vst.msk [vmem:[%s4 + $0xd8] sm:$0xff] %vm3366, %v3183
  %3395 = vst.msk [vmem:[%s4 + $0xe0] sm:$0xff] %vm3366, %v3188
  %3396 = vst.msk [vmem:[%s4 + $0xe8] sm:$0xff] %vm3366, %v3193
  %3397 = vst.msk [vmem:[%s4 + $0xf0] sm:$0xff] %vm3366, %v3198
  %3398 = vst.msk [vmem:[%s4 + $0xf8] sm:$0xff] %vm3366, %v3203
  %3399 = vst.msk [vmem:[%s4 + $0x100] sm:$0xff] %vm3366, %v3208
  %3400 = vst.msk [vmem:[%s4 + $0x108] sm:$0xff] %vm3366, %v3213
  %3401 = vst.msk [vmem:[%s4 + $0x110] sm:$0xff] %vm3366, %v3218
  %3402 = vst.msk [vmem:[%s4 + $0x118] sm:$0xff] %vm3366, %v3223
  %3403 = vst.msk [vmem:[%s4 + $0x120] sm:$0xff] %vm3366, %v3228
  %3404 = vst.msk [vmem:[%s4 + $0x128] sm:$0xff] %vm3366, %v3233
  %3405 = vst.msk [vmem:[%s4 + $0x130] sm:$0xff] %vm3366, %v3238
  %3406 = vst.msk [vmem:[%s4 + $0x138] sm:$0xff] %vm3366, %v3243
  %3407 = vst.msk [vmem:[%s4 + $0x140] sm:$0xff] %vm3366, %v3248
  %3408 = vst.msk [vmem:[%s4 + $0x148] sm:$0xff] %vm3366, %v3253
  %3409 = vst.msk [vmem:[%s4 + $0x150] sm:$0xff] %vm3366, %v3258
  %3410 = vst.msk [vmem:[%s4 + $0x158] sm:$0xff] %vm3366, %v3263
  %3411 = vst.msk [vmem:[%s4 + $0x160] sm:$0xff] %vm3366, %v3268
  %3412 = vst.msk [vmem:[%s4 + $0x168] sm:$0xff] %vm3366, %v3273
  %3413 = vst.msk [vmem:[%s4 + $0x170] sm:$0xff] %vm3366, %v3278
  %3414 = vst.msk [vmem:[%s4 + $0x178] sm:$0xff] %vm3366, %v3283
  %3415 = vst.msk [vmem:[%s4 + $0x180] sm:$0xff] %vm3366, %v3288
  %3416 = vst.msk [vmem:[%s4 + $0x188] sm:$0xff] %vm3366, %v3293
  %3417 = vst.msk [vmem:[%s4 + $0x190] sm:$0xff] %vm3366, %v3298
  %3418 = vst.msk [vmem:[%s4 + $0x198] sm:$0xff] %vm3366, %v3303
  %3419 = vst.msk [vmem:[%s4 + $0x1a0] sm:$0xff] %vm3366, %v3308
  %3420 = vst.msk [vmem:[%s4 + $0x1a8] sm:$0xff] %vm3366, %v3313
  %3421 = vst.msk [vmem:[%s4 + $0x1b0] sm:$0xff] %vm3366, %v3318
  %3422 = vst.msk [vmem:[%s4 + $0x1b8] sm:$0xff] %vm3366, %v3323
  %3423 = vst.msk [vmem:[%s4 + $0x1c0] sm:$0xff] %vm3366, %v3328
  %3424 = vst.msk [vmem:[%s4 + $0x1c8] sm:$0xff] %vm3366, %v3333
  %3425 = vst.msk [vmem:[%s4 + $0x1d0] sm:$0xff] %vm3366, %v3338
  %3426 = vst.msk [vmem:[%s4 + $0x1d8] sm:$0xff] %vm3366, %v3343
  %3427 = vst.msk [vmem:[%s4 + $0x1e0] sm:$0xff] %vm3366, %v3348
  %3428 = vst.msk [vmem:[%s4 + $0x1e8] sm:$0xff] %vm3366, %v3353
  %3429 = vst.msk [vmem:[%s4 + $0x1f0] sm:$0xff] %vm3366, %v3358
  %3430 = vst.msk [vmem:[%s4 + $0x1f8] sm:$0xff] %vm3366, %v3363
  // Predicated region
  $region18: #{output_layer_forward.1} parent=0 // pred_check
    _
  $region19: #{output_layer_forward.1} parent=0 // pred_check_branch
    %3432 = sbr.rel (0) target = $region21
  $region20: #{output_layer_forward.1} parent=0 // pred_region
    _
  $region21: #{output_layer_forward.1} parent=0 // pred_fallthru
    _
  // Predicated region
  $region22: #{output_layer_forward.1} parent=0 // pred_check
    _
  $region23: #{output_layer_forward.1} parent=0 // pred_check_branch
    %3434 = sbr.rel (0) target = $region25
  $region24: #{output_layer_forward.1} parent=0 // pred_region
    _
  $region25: #{output_layer_forward.1} parent=0 // pred_fallthru
    _
  // Predicated region
  $region26: #{output_layer_forward.1} parent=0 // pred_check
    _
  $region27: #{output_layer_forward.1} parent=0 // pred_check_branch
    %3436 = sbr.rel (0) target = $region29
  $region28: #{output_layer_forward.1} parent=0 // pred_region
    _
  $region29: #{output_layer_forward.1} parent=0 // pred_fallthru
    _
  // Predicated region
  $region30: #{output_layer_forward.1} parent=0 // pred_check
    _
  $region31: #{output_layer_forward.1} parent=0 // pred_check_branch
    %3438 = sbr.rel (0) target = $region33
  $region32: #{output_layer_forward.1} parent=0 // pred_region
    _
  $region33: #{output_layer_forward.1} parent=0 // pred_fallthru
    _

</llo_original>
